<compile_context>
chip_gen: v7x
topology: tpu7x:2x2x1
jax: 0.10.0
libtpu: 0.0.40
codegen_flags: <defaults>
</compile_context>

<pallas_src>
import jax
import jax.numpy as jnp
from jax.experimental import pallas as pl
from jax.experimental.pallas import tpu as pltpu


def adversarial_kernel(x_ref, w1t_ref, b1_ref, w2_ref, b2_ref, y_ref):
    # x_ref  : (TB, F) f32  -- streamed tile; trailing rows of the final tile
    #                          may be undefined (their outputs are masked).
    # w1t_ref: (F, H) bf16/f32 (resident in VMEM)
    # b1_ref : (1, H) f32,  w2_ref: (1, H) f32,  b2_ref: (1, 1) f32 in SMEM
    # y_ref  : (TB, 1) f32

    # Layer 1: in-kernel cast of the streamed f32 tile to the MXU dtype (free
    # on the VPU; avoids a separate HBM convert pass), MXU-native orientation
    # (TB,F) @ (F,H) -> no on-chip transpose of the big x tile.
    x = x_ref[...].astype(w1t_ref.dtype)
    h = jnp.dot(x, w1t_ref[...], preferred_element_type=jnp.float32)   # (TB, H)
    h = jnp.maximum(h + b1_ref[...], 0.0)                              # bias + ReLU

    # dropout1 / dropout2: identity in eval mode.

    # Layer 3 (H -> 1): VPU multiply + lane reduce over the tiny H axis
    # (cheaper than an N=1 MXU matmul).
    logit = jnp.sum(h * w2_ref[...], axis=-1, keepdims=True) + b2_ref[0, 0]  # (TB, 1)

    # Exact sigmoid: exp on the EUP; f32 division saturates cleanly (no NaN).
    y_ref[...] = 1.0 / (1.0 + jnp.exp(-logit))


def _choose_tile_b(B, F, *, x_itemsize=4, max_tile=8192,
                   vmem_budget_bytes=16 * 1024 * 1024):
    """Batch tile: multiple of 128, as few grid steps as possible (per-step
    overhead ~0.35 us), a 2-step grid for small/medium batches (balances the
    two v7x TensorCores), and a double-buffered f32 x tile that stays inside
    every generation's scoped-VMEM budget (v5e default is only 16 MiB)."""
    round_up = lambda v, m: -(-v // m) * m
    cap = (vmem_budget_bytes // (2 * F * x_itemsize)) // 128 * 128
    cap = max(128, min(cap, max_tile))
    tile = round_up(max(B // 2, 1), 128)     # target a 2-step grid
    return max(128, min(tile, cap))


def adversarial_network(x, w1, b1, w2, b2, *, tile_b=None, use_bf16=True):
    """Eval-mode forward of AdversarialNetwork.

    x : [B, F] f32
    w1: [H, F] (torch Linear [out, in] layout),  b1: [H]
    w2: [1, H] (torch layout),                   b2: [1]
    Returns y: [B, 1] f32.

    use_bf16=True rounds x / W1 to bf16 for the MXU (f32 accumulation); set
    False for a bit-closer match to the f32 PyTorch forward.
    """
    B, F = x.shape
    H = w1.shape[0]

    if tile_b is None:
        tile_b = _choose_tile_b(B, F)
    assert tile_b % 128 == 0, "tile_b must be a multiple of 128"
    num_tiles = pl.cdiv(B, tile_b)

    # One-time tiny (F*H) weight prep: MXU-native (F, H) layout.
    w1t = w1.T
    if use_bf16:
        w1t = w1t.astype(jnp.bfloat16)
    b1r = b1.reshape(1, H).astype(jnp.float32)
    w2r = w2.reshape(1, H).astype(jnp.float32)
    b2r = b2.reshape(1, 1).astype(jnp.float32)
    x = x.astype(jnp.float32)

    cost = pl.CostEstimate(
        flops=2 * B * F * H + 4 * B * H,
        transcendentals=B,
        bytes_accessed=(x.size * 4                       # x stream (f32, one pass)
                        + B * 4                          # y
                        + F * H * w1t.dtype.itemsize     # resident W1^T
                        + (2 * H + 1) * 4),              # b1, w2, b2
    )

    return pl.pallas_call(
        adversarial_kernel,
        out_shape=jax.ShapeDtypeStruct((B, 1), jnp.float32),
        grid=(num_tiles,),
        in_specs=[
            pl.BlockSpec((tile_b, F), lambda i: (i, 0)),        # x tile (pipelined stream)
            pl.BlockSpec((F, H), lambda i: (0, 0)),             # W1^T, resident
            pl.BlockSpec((1, H), lambda i: (0, 0)),             # b1, resident
            pl.BlockSpec((1, H), lambda i: (0, 0)),             # W2 row, resident
            pl.BlockSpec(memory_space=pltpu.MemorySpace.SMEM),  # b2 scalar
        ],
        out_specs=pl.BlockSpec((tile_b, 1), lambda i: (i, 0)),
        compiler_params=pltpu.CompilerParams(
            dimension_semantics=("parallel",),   # v7x: shard grid steps over 2 TCs
            vmem_limit_bytes=32 * 1024 * 1024,   # safe on v5e/v6e/v7x; >> working set
        ),
        cost_estimate=cost,
    )(x, w1t, b1r, w2r, b2r)


def init_params(key, in_feature, hidden_size):
    """Mimics init_weights: xavier_normal Linear weights, zero biases.
    Weights kept in PyTorch [out, in] layout."""
    k1, k2 = jax.random.split(key)
    std1 = (2.0 / (in_feature + hidden_size)) ** 0.5
    std2 = (2.0 / (hidden_size + 1)) ** 0.5
    w1 = std1 * jax.random.normal(k1, (hidden_size, in_feature), dtype=jnp.float32)
    b1 = jnp.zeros((hidden_size,), dtype=jnp.float32)
    w2 = std2 * jax.random.normal(k2, (1, hidden_size), dtype=jnp.float32)
    b2 = jnp.zeros((1,), dtype=jnp.float32)
    return w1, b1, w2, b2


# TODO(synk): grl_hook / calc_coeff gradient-reversal is backward-only and has
# no effect on the forward pass; not representable in a forward Pallas kernel.

if __name__ == "__main__":
    # B deliberately NOT a multiple of the tile: the adaptive tile gives a
    # 2-step grid of 1280-row tiles with a ragged (masked) last tile.
    B, IN_FEATURE, HIDDEN = 2500, 64, 32

    key = jax.random.PRNGKey(0)
    kx, kp = jax.random.split(key)
    x = jax.random.normal(kx, (B, IN_FEATURE), dtype=jnp.float32)
    w1, b1, w2, b2 = init_params(kp, IN_FEATURE, HIDDEN)

    y = adversarial_network(x, w1, b1, w2, b2)
    y = jax.block_until_ready(y)
    assert y.shape == (B, 1)

    # Pure-JAX references.
    #  (a) bf16-matched: the same x / W1 rounding the kernel applies in-kernel.
    hb = jnp.dot(x.astype(jnp.bfloat16), w1.T.astype(jnp.bfloat16),
                 preferred_element_type=jnp.float32) + b1[None, :]
    ref_bf16 = jax.nn.sigmoid(jnp.maximum(hb, 0.0) @ w2.T + b2[None, :])
    #  (b) full-f32 PyTorch-equivalent forward.
    hf = jnp.maximum(x @ w1.T + b1[None, :], 0.0)
    ref_f32 = jax.nn.sigmoid(hf @ w2.T + b2[None, :])

    err_bf16 = float(jnp.max(jnp.abs(y - ref_bf16)))
    err_f32 = float(jnp.max(jnp.abs(y - ref_f32)))
    assert err_bf16 < 5e-3, f"mismatch vs bf16-matched reference: {err_bf16}"
    assert err_f32 < 2e-2, f"mismatch vs f32 reference: {err_f32}"

    print("KERNEL_OK")
</pallas_src>

<mosaic_0001>
module attributes {stable_mosaic.version = 11 : i64} {
  func.func @adversarial_kernel(%arg0: i32, %arg1: memref<1280x64xf32, #tpu.memory_space<vmem>>, %arg2: memref<64x32xbf16, #tpu.memory_space<vmem>>, %arg3: memref<1x32xf32, #tpu.memory_space<vmem>>, %arg4: memref<1x32xf32, #tpu.memory_space<vmem>>, %arg5: memref<1x1xf32, #tpu.memory_space<smem>>, %arg6: memref<1280x1xf32, #tpu.memory_space<vmem>>) attributes {dimension_semantics = [#tpu.dimension_semantics<parallel>], iteration_bounds = array<i64: 2>, scalar_prefetch = 0 : i64, scratch_operands = 0 : i64, tpu.core_type = #tpu.core_type<tc>, window_params = [{transform_indices = @transform_0, window_bounds = array<i64: 1280, 64>}, {pipeline_mode = #tpu.pipeline_mode<synchronous>, transform_indices = @transform_1, window_bounds = array<i64: 64, 32>}, {pipeline_mode = #tpu.pipeline_mode<synchronous>, transform_indices = @transform_2, window_bounds = array<i64: 1, 32>}, {pipeline_mode = #tpu.pipeline_mode<synchronous>, transform_indices = @transform_3, window_bounds = array<i64: 1, 32>}, {transform_indices = @transform_4, window_bounds = array<i64: 1, 1>}, {transform_indices = @transform_5, window_bounds = array<i64: 1280, 1>}]} {
    %c0 = arith.constant 0 : index
    %c0_0 = arith.constant 0 : index
    %0 = vector.load %arg1[%c0, %c0_0] : memref<1280x64xf32, #tpu.memory_space<vmem>>, vector<1280x64xf32>
    %1 = arith.truncf %0 : vector<1280x64xf32> to vector<1280x64xbf16>
    %c0_1 = arith.constant 0 : index
    %c0_2 = arith.constant 0 : index
    %2 = vector.load %arg2[%c0_1, %c0_2] : memref<64x32xbf16, #tpu.memory_space<vmem>>, vector<64x32xbf16>
    %cst = arith.constant dense<0.000000e+00> : vector<1280x32xf32>
    %3 = tpu.matmul %1, %2, %cst {dimension_numbers = #tpu.dot_dimension_numbers<[1], [0], [0], [1], [0, 0, 1, 1], [], []>} : vector<1280x64xbf16>, vector<64x32xbf16>, vector<1280x32xf32> -> vector<1280x32xf32>
    %c0_3 = arith.constant 0 : index
    %c0_4 = arith.constant 0 : index
    %4 = vector.load %arg3[%c0_3, %c0_4] : memref<1x32xf32, #tpu.memory_space<vmem>>, vector<1x32xf32>
    %5 = vector.broadcast %4 : vector<1x32xf32> to vector<1280x32xf32>
    %6 = arith.addf %3, %5 : vector<1280x32xf32>
    %cst_5 = arith.constant 0.000000e+00 : f32
    %7 = vector.broadcast %cst_5 : f32 to vector<1280x32xf32>
    %8 = arith.maximumf %6, %7 : vector<1280x32xf32>
    %c0_6 = arith.constant 0 : index
    %c0_7 = arith.constant 0 : index
    %9 = vector.load %arg4[%c0_6, %c0_7] : memref<1x32xf32, #tpu.memory_space<vmem>>, vector<1x32xf32>
    %10 = vector.broadcast %9 : vector<1x32xf32> to vector<1280x32xf32>
    %11 = arith.mulf %8, %10 : vector<1280x32xf32>
    %cst_8 = arith.constant dense<0.000000e+00> : vector<1280xf32>
    %12 = vector.multi_reduction <add>, %11, %cst_8 [1] : vector<1280x32xf32> to vector<1280xf32>
    %13 = vector.shape_cast %12 : vector<1280xf32> to vector<1280x1xf32>
    %c0_9 = arith.constant 0 : index
    %c0_10 = arith.constant 0 : index
    %14 = memref.load %arg5[%c0_9, %c0_10] : memref<1x1xf32, #tpu.memory_space<smem>>
    %15 = vector.broadcast %14 : f32 to vector<1280x1xf32>
    %16 = arith.addf %13, %15 : vector<1280x1xf32>
    %cst_11 = arith.constant 0.000000e+00 : f32
    %17 = vector.broadcast %cst_11 : f32 to vector<1280x1xf32>
    %18 = arith.subf %17, %16 : vector<1280x1xf32>
    %19 = math.exp %18 : vector<1280x1xf32>
    %cst_12 = arith.constant 1.000000e+00 : f32
    %20 = vector.broadcast %cst_12 : f32 to vector<1280x1xf32>
    %21 = arith.addf %20, %19 : vector<1280x1xf32>
    %cst_13 = arith.constant 1.000000e+00 : f32
    %22 = vector.broadcast %cst_13 : f32 to vector<1280x1xf32>
    %23 = arith.divf %22, %21 : vector<1280x1xf32>
    %c0_14 = arith.constant 0 : index
    %c0_15 = arith.constant 0 : index
    %24 = vector.load %arg6[%c0_14, %c0_15] : memref<1280x1xf32, #tpu.memory_space<vmem>>, vector<1280x1xf32>
    tpu.vector_store %arg6[%c0_14, %c0_15], %23 {strides = array<i32>} : memref<1280x1xf32, #tpu.memory_space<vmem>>, vector<1280x1xf32>,
    return
  }
  func.func @transform_0(%arg0: i32) -> (i32, i32) {
    %c0_i32 = arith.constant 0 : i32
    %c0_i32_0 = arith.constant 0 : i32
    return %arg0, %c0_i32 : i32, i32
  }
  func.func @transform_1(%arg0: i32) -> (i32, i32) {
    %c0_i32 = arith.constant 0 : i32
    %c0_i32_0 = arith.constant 0 : i32
    %c0_i32_1 = arith.constant 0 : i32
    return %c0_i32, %c0_i32_0 : i32, i32
  }
  func.func @transform_2(%arg0: i32) -> (i32, i32) {
    %c0_i32 = arith.constant 0 : i32
    %c0_i32_0 = arith.constant 0 : i32
    %c0_i32_1 = arith.constant 0 : i32
    return %c0_i32, %c0_i32_0 : i32, i32
  }
  func.func @transform_3(%arg0: i32) -> (i32, i32) {
    %c0_i32 = arith.constant 0 : i32
    %c0_i32_0 = arith.constant 0 : i32
    %c0_i32_1 = arith.constant 0 : i32
    return %c0_i32, %c0_i32_0 : i32, i32
  }
  func.func @transform_4(%arg0: i32) -> (i32, i32) {
    %c0_i32 = arith.constant 0 : i32
    %c0_i32_0 = arith.constant 0 : i32
    %c0_i32_1 = arith.constant 0 : i32
    return %c0_i32, %c0_i32_0 : i32, i32
  }
  func.func @transform_5(%arg0: i32) -> (i32, i32) {
    %c0_i32 = arith.constant 0 : i32
    %c0_i32_0 = arith.constant 0 : i32
    return %arg0, %c0_i32 : i32, i32
  }
}

</mosaic_0001>

<llo_original>
// kernel: tpu_custom_call.1
$region0: #{tpu_custom_call.1}
  #allocation0 [shape = 'u32[]', space=smem, size = 0x4, offset = 0x4, fixed_abs, tag = 'smem constant byte address 0x4 - core index']
  #allocation1 [shape = 'u32[144,128]{1,0:T(1,128)}', space=vmem, size = 0x12000, scoped, tag = 'internal scratch']
  #allocation2 [shape = 'f32[1,1]{1,0:T(1,128)S(6)}', space=smem, size = 0x200, scoped, tag = 'scoped memory for tpu_custom_call.1']
  %s0 = inlined_call_operand.vmem [shape: f32[2500,64], index: 0, kind: input, shape index: {}]
  %s1 = inlined_call_operand.vmem [shape: bf16[64,32], index: 1, kind: input, shape index: {}]
  %s2 = inlined_call_operand.vmem [shape: f32[1,32], index: 2, kind: input, shape index: {}]
  %s3 = inlined_call_operand.vmem [shape: f32[1,32], index: 3, kind: input, shape index: {}]
  %s4 = inlined_call_operand.<no memory space> [shape: f32[1,1], index: 4, kind: input, shape index: {}]
  %s5 = inlined_call_operand.vmem [shape: f32[2500,1], index: 5, kind: output, shape index: {}]
  %s6 = sld [smem:[#allocation0]]
  $region101: #{tpu_custom_call.1} parent=0
    _
  %s8 = ssub.s32 1, %s6
  %s9 = scalar_select 0, %s8, %s6
  %10 = sst [smem:[#allocation2]] %s4
  $region1: #{tpu_custom_call.1} parent=0
    #allocation3 [shape = 'u8[1310720]{0}', space=vmem, size = 0x140000, scoped, tag = 'output window, operand 0']
    loop: start=0, step=1, limit=4
    $region2: #{tpu_custom_call.1} parent=1 // loop_pre_header
      _
    $region3: #{tpu_custom_call.1} parent=1 // loop_header
      %s12 = sphi 0, %s16
      %p13 = scmp.ge.s32.totalorder %s12, 4
      %s22 = sphi 0, %s24
      %s25 = sphi 0, %s22
      %s26 = sphi 0, %s25
      %s42 = sphi 0, %s26
      %s46 = sphi 0, %s46
      %s48 = sphi 0, %s46
      %s49 = sphi 0, %s48
      %s63 = sphi 0, %s49
      %s67 = sphi 0, %s67
      %s69 = sphi 0, %s67
      %s70 = sphi 0, %s69
      %s84 = sphi 0, %s70
      %s88 = sphi 0, %s88
      %s90 = sphi 0, %s88
      %s91 = sphi 0, %s90
      %s105 = sphi 0, %s91
      %s109 = sphi 0, %s109
      %s111 = sphi 0, %s109
      %s112 = sphi 0, %s111
      %s126 = sphi 0, %s112
      %s132 = sphi 0, %s134
      %s135 = sphi 0, %s132
      %s136 = sphi 0, %s135
      %s152 = sphi 0, %s136
    $region4: #{tpu_custom_call.1} parent=1 // loop_header_branch
      %15 = sbr.rel (%p13) target = $region8
    $region5: #{tpu_custom_call.1} parent=1 // loop_body
      %s17 = ssub.s32 %s12, 1
      %s18 = ssub.s32 %s12, 2
      %s19 = sadd.s32 %s12, 1
      %s20 = ssub.s32 %s12, %s19
      %p21 = scmp.eq.s32.totalorder %s20, 0
      %s23 = sadd.s32 %s22, 1
      %s24 = scalar_select %p21, %s22, %s23
      %p27 = pneg %p21
      %p28 = scmp.eq.s32.totalorder %s12, 1
      %p29 = por %p27, %p28
      %p30 = scmp.ne.s32.totalorder %s22, %s25
      %p31 = scmp.eq.s32.totalorder %s12, 0
      %p32 = por %p30, %p31
      %p33 = scmp.ne.s32.totalorder %s22, %s25
      %p34 = scmp.eq.s32.totalorder %s17, 1
      %p35 = por %p33, %p34
      %p36 = scmp.ne.s32.totalorder %s25, %s26
      %p37 = scmp.eq.s32.totalorder %s17, 0
      %p38 = por %p36, %p37
      %p39 = scmp.ne.s32.totalorder %s25, %s26
      %p40 = scmp.eq.s32.totalorder %s18, 1
      %p41 = por %p39, %p40
      %p43 = scmp.ne.s32.totalorder %s26, %s42
      %p44 = scmp.eq.s32.totalorder %s18, 0
      %p45 = por %p43, %p44
      %s47 = sadd.s32 %s46, 1
      %p50 = scmp.eq.s32.totalorder %s12, 1
      %p51 = scmp.ne.s32.totalorder %s46, %s48
      %p52 = scmp.eq.s32.totalorder %s12, 0
      %p53 = por %p51, %p52
      %p54 = scmp.ne.s32.totalorder %s46, %s48
      %p55 = scmp.eq.s32.totalorder %s17, 1
      %p56 = por %p54, %p55
      %p57 = scmp.ne.s32.totalorder %s48, %s49
      %p58 = scmp.eq.s32.totalorder %s17, 0
      %p59 = por %p57, %p58
      %p60 = scmp.ne.s32.totalorder %s48, %s49
      %p61 = scmp.eq.s32.totalorder %s18, 1
      %p62 = por %p60, %p61
      %p64 = scmp.ne.s32.totalorder %s49, %s63
      %p65 = scmp.eq.s32.totalorder %s18, 0
      %p66 = por %p64, %p65
      %s68 = sadd.s32 %s67, 1
      %p71 = scmp.eq.s32.totalorder %s12, 1
      %p72 = scmp.ne.s32.totalorder %s67, %s69
      %p73 = scmp.eq.s32.totalorder %s12, 0
      %p74 = por %p72, %p73
      %p75 = scmp.ne.s32.totalorder %s67, %s69
      %p76 = scmp.eq.s32.totalorder %s17, 1
      %p77 = por %p75, %p76
      %p78 = scmp.ne.s32.totalorder %s69, %s70
      %p79 = scmp.eq.s32.totalorder %s17, 0
      %p80 = por %p78, %p79
      %p81 = scmp.ne.s32.totalorder %s69, %s70
      %p82 = scmp.eq.s32.totalorder %s18, 1
      %p83 = por %p81, %p82
      %p85 = scmp.ne.s32.totalorder %s70, %s84
      %p86 = scmp.eq.s32.totalorder %s18, 0
      %p87 = por %p85, %p86
      %s89 = sadd.s32 %s88, 1
      %p92 = scmp.eq.s32.totalorder %s12, 1
      %p93 = scmp.ne.s32.totalorder %s88, %s90
      %p94 = scmp.eq.s32.totalorder %s12, 0
      %p95 = por %p93, %p94
      %p96 = scmp.ne.s32.totalorder %s88, %s90
      %p97 = scmp.eq.s32.totalorder %s17, 1
      %p98 = por %p96, %p97
      %p99 = scmp.ne.s32.totalorder %s90, %s91
      %p100 = scmp.eq.s32.totalorder %s17, 0
      %p101 = por %p99, %p100
      %p102 = scmp.ne.s32.totalorder %s90, %s91
      %p103 = scmp.eq.s32.totalorder %s18, 1
      %p104 = por %p102, %p103
      %p106 = scmp.ne.s32.totalorder %s91, %s105
      %p107 = scmp.eq.s32.totalorder %s18, 0
      %p108 = por %p106, %p107
      %s110 = sadd.s32 %s109, 1
      %p113 = scmp.eq.s32.totalorder %s12, 1
      %p114 = scmp.ne.s32.totalorder %s109, %s111
      %p115 = scmp.eq.s32.totalorder %s12, 0
      %p116 = por %p114, %p115
      %p117 = scmp.ne.s32.totalorder %s109, %s111
      %p118 = scmp.eq.s32.totalorder %s17, 1
      %p119 = por %p117, %p118
      %p120 = scmp.ne.s32.totalorder %s111, %s112
      %p121 = scmp.eq.s32.totalorder %s17, 0
      %p122 = por %p120, %p121
      %p123 = scmp.ne.s32.totalorder %s111, %s112
      %p124 = scmp.eq.s32.totalorder %s18, 1
      %p125 = por %p123, %p124
      %p127 = scmp.ne.s32.totalorder %s112, %s126
      %p128 = scmp.eq.s32.totalorder %s18, 0
      %p129 = por %p127, %p128
      %s130 = ssub.s32 %s12, %s19
      %p131 = scmp.eq.s32.totalorder %s130, 0
      %s133 = sadd.s32 %s132, 1
      %s134 = scalar_select %p131, %s132, %s133
      %p137 = pneg %p131
      %p138 = scmp.eq.s32.totalorder %s12, 1
      %p139 = por %p137, %p138
      %p140 = scmp.ne.s32.totalorder %s132, %s135
      %p141 = scmp.eq.s32.totalorder %s12, 0
      %p142 = por %p140, %p141
      %p143 = scmp.ne.s32.totalorder %s132, %s135
      %p144 = scmp.eq.s32.totalorder %s17, 1
      %p145 = por %p143, %p144
      %p146 = scmp.ne.s32.totalorder %s135, %s136
      %p147 = scmp.eq.s32.totalorder %s17, 0
      %p148 = por %p146, %p147
      %p149 = scmp.ne.s32.totalorder %s135, %s136
      %p150 = scmp.eq.s32.totalorder %s18, 1
      %p151 = por %p149, %p150
      %p153 = scmp.ne.s32.totalorder %s136, %s152
      %p154 = scmp.eq.s32.totalorder %s18, 0
      %p155 = por %p153, %p154
      %p156 = scmp.le.s32.totalorder 1, %s12
      %p157 = scmp.lt.s32.totalorder %s12, 3
      %p158 = pnand %p156, %p157
      %p159 = pneg %p158
      // Predicated region
      $region9: #{tpu_custom_call.1} parent=5 // pred_check
        _
      $region10: #{tpu_custom_call.1} parent=5 // pred_check_branch
        %161 = sbr.rel (%p158) target = $region12
      $region11: #{tpu_custom_call.1} parent=5 // pred_region
        %s162 = ssub.s32 %s12, 1
        // Predicated region
        $region13: #{tpu_custom_call.1} parent=11 // pred_check
          %p163 = pneg %p59
        $region14: #{tpu_custom_call.1} parent=11 // pred_check_branch
          %165 = sbr.rel (%p163) target = $region16
        $region15: #{tpu_custom_call.1} parent=11 // pred_region
          _
        $region16: #{tpu_custom_call.1} parent=11 // pred_fallthru
          _
        // Predicated region
        $region17: #{tpu_custom_call.1} parent=11 // pred_check
          %p166 = pneg %p80
        $region18: #{tpu_custom_call.1} parent=11 // pred_check_branch
          %168 = sbr.rel (%p166) target = $region20
        $region19: #{tpu_custom_call.1} parent=11 // pred_region
          _
        $region20: #{tpu_custom_call.1} parent=11 // pred_fallthru
          _
        // Predicated region
        $region21: #{tpu_custom_call.1} parent=11 // pred_check
          %p169 = pneg %p101
        $region22: #{tpu_custom_call.1} parent=11 // pred_check_branch
          %171 = sbr.rel (%p169) target = $region24
        $region23: #{tpu_custom_call.1} parent=11 // pred_region
          _
        $region24: #{tpu_custom_call.1} parent=11 // pred_fallthru
          _
        // Predicated region
        $region25: #{tpu_custom_call.1} parent=11 // pred_check
          %p172 = pneg %p122
        $region26: #{tpu_custom_call.1} parent=11 // pred_check_branch
          %174 = sbr.rel (%p172) target = $region28
        $region27: #{tpu_custom_call.1} parent=11 // pred_region
          _
        $region28: #{tpu_custom_call.1} parent=11 // pred_fallthru
          _
      $region12: #{tpu_custom_call.1} parent=5 // pred_fallthru
        _
      %p175 = scmp.lt.s32.totalorder %s12, 2
      // Predicated region
      $region29: #{tpu_custom_call.1} parent=5 // pred_check
        %p176 = pneg %p175
      $region30: #{tpu_custom_call.1} parent=5 // pred_check_branch
        %178 = sbr.rel (%p176) target = $region32
      $region31: #{tpu_custom_call.1} parent=5 // pred_region
        // Predicated region
        $region33: #{tpu_custom_call.1} parent=31 // pred_check
          %p179 = pneg %p32
        $region34: #{tpu_custom_call.1} parent=31 // pred_check_branch
          %181 = sbr.rel (%p179) target = $region36
        $region35: #{tpu_custom_call.1} parent=31 // pred_region
          %s182 = smul.u32 160, %s12
          %s183 = ssub.s32 313, %s182
          %p184 = scmp.lt.s32.totalorder %s183, 160
          %s185 = scalar_select %p184, %s183, 160
          %s186 = smul.u32 128, %s185
          %p187 = scmp.lt.s32.totalorder %s182, 312
          %s188 = scalar_select %p187, %s182, 312
          %s189 = smul.addr %s188, 8
          %s190 = scalar_lea.vmem %s0, %s189
          %s191 = smul.u32 160, %s12
          %s192 = ssub.s32 313, %s191
          %p193 = scmp.lt.s32.totalorder %s192, 160
          %s194 = scalar_select %p193, %s192, 160
          %s195 = smul.u32 128, %s194
        $region36: #{tpu_custom_call.1} parent=31 // pred_fallthru
          _
      $region32: #{tpu_custom_call.1} parent=5 // pred_fallthru
        _
      %p196 = scmp.le.s32.totalorder 1, %s12
      %p197 = scmp.lt.s32.totalorder %s12, 3
      %p198 = pnand %p196, %p197
      %p199 = pneg %p198
      // Predicated region
      $region37: #{tpu_custom_call.1} parent=5 // pred_check
        _
      $region38: #{tpu_custom_call.1} parent=5 // pred_check_branch
        %201 = sbr.rel (%p198) target = $region40
      $region39: #{tpu_custom_call.1} parent=5 // pred_region
        %s202 = ssub.s32 %s12, 1
        %s203 = smul.u32 160, %s17
        %s204 = ssub.s32 313, %s203
        %p205 = scmp.lt.s32.totalorder %s204, 160
        %s206 = scalar_select %p205, %s204, 160
        %s207 = smul.u32 128, %s206
        %p208 = scmp.lt.s32.totalorder %s203, 312
        %s209 = scalar_select %p208, %s203, 312
        %s210 = smul.addr %s209, 8
        %s211 = scalar_lea.vmem %s0, %s210
        %p212 = pneg %p38
        %p213 = pneg %p35
        %p214 = pneg %p59
        %p215 = pneg %p56
        %p216 = pneg %p80
        %p217 = pneg %p77
        %p218 = pneg %p101
        %p219 = pneg %p98
        %p220 = pneg %p122
        %p221 = pneg %p119
        %p222 = pneg %p148
        %p223 = pneg %p145
        %s224 = sand.u32 %s135, 1
        %s225 = sand.u32 %s135, 1
        %s226 = smul.addr %s225, 1280
        %s227 = scalar_lea.vmem [#allocation3], %s226
        %s228 = smul.u32 160, %s17
        %s229 = ssub.s32 313, %s228
        %p230 = scmp.lt.s32.totalorder %s229, 160
        %s231 = scalar_select %p230, %s229, 160
        %s232 = smul.u32 128, %s231
        %p233 = scmp.lt.s32.totalorder %s228, 312
        %s234 = scalar_select %p233, %s228, 312
        %s235 = smul.addr %s234, 8
        %s236 = scalar_lea.vmem %s0, %s235
        %s237 = smul.u32 160, %s17
        %s238 = ssub.s32 313, %s237
        %p239 = scmp.lt.s32.totalorder %s238, 160
        %s240 = scalar_select %p239, %s238, 160
        %s241 = smul.u32 128, %s240
        %s242 = smul.u32 160, %s17
        %s243 = ssub.s32 313, %s242
        %p244 = scmp.lt.s32.totalorder %s243, 160
        %s245 = scalar_select %p244, %s243, 160
        %s246 = smul.u32 128, %s245
        %v248 = vld [vmem:[%s236] sm:$0xff]
        %v249 = vld [vmem:[%s236 + $0x8] sm:$0xff]
        %v250 = vld [vmem:[%s236 + $0x10] sm:$0xff]
        %v251 = vld [vmem:[%s236 + $0x18] sm:$0xff]
        %v252 = vld [vmem:[%s236 + $0x20] sm:$0xff]
        %v253 = vld [vmem:[%s236 + $0x28] sm:$0xff]
        %v254 = vld [vmem:[%s236 + $0x30] sm:$0xff]
        %v255 = vld [vmem:[%s236 + $0x38] sm:$0xff]
        %v256 = vld [vmem:[%s236 + $0x40] sm:$0xff]
        %v257 = vld [vmem:[%s236 + $0x48] sm:$0xff]
        %v258 = vld [vmem:[%s236 + $0x50] sm:$0xff]
        %v259 = vld [vmem:[%s236 + $0x58] sm:$0xff]
        %v260 = vld [vmem:[%s236 + $0x60] sm:$0xff]
        %v261 = vld [vmem:[%s236 + $0x68] sm:$0xff]
        %v262 = vld [vmem:[%s236 + $0x70] sm:$0xff]
        %v263 = vld [vmem:[%s236 + $0x78] sm:$0xff]
        %v264 = vld [vmem:[%s236 + $0x80] sm:$0xff]
        %v265 = vld [vmem:[%s236 + $0x88] sm:$0xff]
        %v266 = vld [vmem:[%s236 + $0x90] sm:$0xff]
        %v267 = vld [vmem:[%s236 + $0x98] sm:$0xff]
        %v268 = vld [vmem:[%s236 + $0xa0] sm:$0xff]
        %v269 = vld [vmem:[%s236 + $0xa8] sm:$0xff]
        %v270 = vld [vmem:[%s236 + $0xb0] sm:$0xff]
        %v271 = vld [vmem:[%s236 + $0xb8] sm:$0xff]
        %v272 = vld [vmem:[%s236 + $0xc0] sm:$0xff]
        %v273 = vld [vmem:[%s236 + $0xc8] sm:$0xff]
        %v274 = vld [vmem:[%s236 + $0xd0] sm:$0xff]
        %v275 = vld [vmem:[%s236 + $0xd8] sm:$0xff]
        %v276 = vld [vmem:[%s236 + $0xe0] sm:$0xff]
        %v277 = vld [vmem:[%s236 + $0xe8] sm:$0xff]
        %v278 = vld [vmem:[%s236 + $0xf0] sm:$0xff]
        %v279 = vld [vmem:[%s236 + $0xf8] sm:$0xff]
        %v280 = vld [vmem:[%s236 + $0x100] sm:$0xff]
        %v281 = vld [vmem:[%s236 + $0x108] sm:$0xff]
        %v282 = vld [vmem:[%s236 + $0x110] sm:$0xff]
        %v283 = vld [vmem:[%s236 + $0x118] sm:$0xff]
        %v284 = vld [vmem:[%s236 + $0x120] sm:$0xff]
        %v285 = vld [vmem:[%s236 + $0x128] sm:$0xff]
        %v286 = vld [vmem:[%s236 + $0x130] sm:$0xff]
        %v287 = vld [vmem:[%s236 + $0x138] sm:$0xff]
        %v288 = vld [vmem:[%s236 + $0x140] sm:$0xff]
        %v289 = vld [vmem:[%s236 + $0x148] sm:$0xff]
        %v290 = vld [vmem:[%s236 + $0x150] sm:$0xff]
        %v291 = vld [vmem:[%s236 + $0x158] sm:$0xff]
        %v292 = vld [vmem:[%s236 + $0x160] sm:$0xff]
        %v293 = vld [vmem:[%s236 + $0x168] sm:$0xff]
        %v294 = vld [vmem:[%s236 + $0x170] sm:$0xff]
        %v295 = vld [vmem:[%s236 + $0x178] sm:$0xff]
        %v296 = vld [vmem:[%s236 + $0x180] sm:$0xff]
        %v297 = vld [vmem:[%s236 + $0x188] sm:$0xff]
        %v298 = vld [vmem:[%s236 + $0x190] sm:$0xff]
        %v299 = vld [vmem:[%s236 + $0x198] sm:$0xff]
        %v300 = vld [vmem:[%s236 + $0x1a0] sm:$0xff]
        %v301 = vld [vmem:[%s236 + $0x1a8] sm:$0xff]
        %v302 = vld [vmem:[%s236 + $0x1b0] sm:$0xff]
        %v303 = vld [vmem:[%s236 + $0x1b8] sm:$0xff]
        %v304 = vld [vmem:[%s236 + $0x1c0] sm:$0xff]
        %v305 = vld [vmem:[%s236 + $0x1c8] sm:$0xff]
        %v306 = vld [vmem:[%s236 + $0x1d0] sm:$0xff]
        %v307 = vld [vmem:[%s236 + $0x1d8] sm:$0xff]
        %v308 = vld [vmem:[%s236 + $0x1e0] sm:$0xff]
        %v309 = vld [vmem:[%s236 + $0x1e8] sm:$0xff]
        %v310 = vld [vmem:[%s236 + $0x1f0] sm:$0xff]
        %v311 = vld [vmem:[%s236 + $0x1f8] sm:$0xff]
        %v312 = vld [vmem:[%s236 + $0x200] sm:$0xff]
        %v313 = vld [vmem:[%s236 + $0x208] sm:$0xff]
        %v314 = vld [vmem:[%s236 + $0x210] sm:$0xff]
        %v315 = vld [vmem:[%s236 + $0x218] sm:$0xff]
        %v316 = vld [vmem:[%s236 + $0x220] sm:$0xff]
        %v317 = vld [vmem:[%s236 + $0x228] sm:$0xff]
        %v318 = vld [vmem:[%s236 + $0x230] sm:$0xff]
        %v319 = vld [vmem:[%s236 + $0x238] sm:$0xff]
        %v320 = vld [vmem:[%s236 + $0x240] sm:$0xff]
        %v321 = vld [vmem:[%s236 + $0x248] sm:$0xff]
        %v322 = vld [vmem:[%s236 + $0x250] sm:$0xff]
        %v323 = vld [vmem:[%s236 + $0x258] sm:$0xff]
        %v324 = vld [vmem:[%s236 + $0x260] sm:$0xff]
        %v325 = vld [vmem:[%s236 + $0x268] sm:$0xff]
        %v326 = vld [vmem:[%s236 + $0x270] sm:$0xff]
        %v327 = vld [vmem:[%s236 + $0x278] sm:$0xff]
        %v328 = vld [vmem:[%s236 + $0x280] sm:$0xff]
        %v329 = vld [vmem:[%s236 + $0x288] sm:$0xff]
        %v330 = vld [vmem:[%s236 + $0x290] sm:$0xff]
        %v331 = vld [vmem:[%s236 + $0x298] sm:$0xff]
        %v332 = vld [vmem:[%s236 + $0x2a0] sm:$0xff]
        %v333 = vld [vmem:[%s236 + $0x2a8] sm:$0xff]
        %v334 = vld [vmem:[%s236 + $0x2b0] sm:$0xff]
        %v335 = vld [vmem:[%s236 + $0x2b8] sm:$0xff]
        %v336 = vld [vmem:[%s236 + $0x2c0] sm:$0xff]
        %v337 = vld [vmem:[%s236 + $0x2c8] sm:$0xff]
        %v338 = vld [vmem:[%s236 + $0x2d0] sm:$0xff]
        %v339 = vld [vmem:[%s236 + $0x2d8] sm:$0xff]
        %v340 = vld [vmem:[%s236 + $0x2e0] sm:$0xff]
        %v341 = vld [vmem:[%s236 + $0x2e8] sm:$0xff]
        %v342 = vld [vmem:[%s236 + $0x2f0] sm:$0xff]
        %v343 = vld [vmem:[%s236 + $0x2f8] sm:$0xff]
        %v344 = vld [vmem:[%s236 + $0x300] sm:$0xff]
        %v345 = vld [vmem:[%s236 + $0x308] sm:$0xff]
        %v346 = vld [vmem:[%s236 + $0x310] sm:$0xff]
        %v347 = vld [vmem:[%s236 + $0x318] sm:$0xff]
        %v348 = vld [vmem:[%s236 + $0x320] sm:$0xff]
        %v349 = vld [vmem:[%s236 + $0x328] sm:$0xff]
        %v350 = vld [vmem:[%s236 + $0x330] sm:$0xff]
        %v351 = vld [vmem:[%s236 + $0x338] sm:$0xff]
        %v352 = vld [vmem:[%s236 + $0x340] sm:$0xff]
        %v353 = vld [vmem:[%s236 + $0x348] sm:$0xff]
        %v354 = vld [vmem:[%s236 + $0x350] sm:$0xff]
        %v355 = vld [vmem:[%s236 + $0x358] sm:$0xff]
        %v356 = vld [vmem:[%s236 + $0x360] sm:$0xff]
        %v357 = vld [vmem:[%s236 + $0x368] sm:$0xff]
        %v358 = vld [vmem:[%s236 + $0x370] sm:$0xff]
        %v359 = vld [vmem:[%s236 + $0x378] sm:$0xff]
        %v360 = vld [vmem:[%s236 + $0x380] sm:$0xff]
        %v361 = vld [vmem:[%s236 + $0x388] sm:$0xff]
        %v362 = vld [vmem:[%s236 + $0x390] sm:$0xff]
        %v363 = vld [vmem:[%s236 + $0x398] sm:$0xff]
        %v364 = vld [vmem:[%s236 + $0x3a0] sm:$0xff]
        %v365 = vld [vmem:[%s236 + $0x3a8] sm:$0xff]
        %v366 = vld [vmem:[%s236 + $0x3b0] sm:$0xff]
        %v367 = vld [vmem:[%s236 + $0x3b8] sm:$0xff]
        %v368 = vld [vmem:[%s236 + $0x3c0] sm:$0xff]
        %v369 = vld [vmem:[%s236 + $0x3c8] sm:$0xff]
        %v370 = vld [vmem:[%s236 + $0x3d0] sm:$0xff]
        %v371 = vld [vmem:[%s236 + $0x3d8] sm:$0xff]
        %v372 = vld [vmem:[%s236 + $0x3e0] sm:$0xff]
        %v373 = vld [vmem:[%s236 + $0x3e8] sm:$0xff]
        %v374 = vld [vmem:[%s236 + $0x3f0] sm:$0xff]
        %v375 = vld [vmem:[%s236 + $0x3f8] sm:$0xff]
        %v376 = vld [vmem:[%s236 + $0x400] sm:$0xff]
        %v377 = vld [vmem:[%s236 + $0x408] sm:$0xff]
        %v378 = vld [vmem:[%s236 + $0x410] sm:$0xff]
        %v379 = vld [vmem:[%s236 + $0x418] sm:$0xff]
        %v380 = vld [vmem:[%s236 + $0x420] sm:$0xff]
        %v381 = vld [vmem:[%s236 + $0x428] sm:$0xff]
        %v382 = vld [vmem:[%s236 + $0x430] sm:$0xff]
        %v383 = vld [vmem:[%s236 + $0x438] sm:$0xff]
        %v384 = vld [vmem:[%s236 + $0x440] sm:$0xff]
        %v385 = vld [vmem:[%s236 + $0x448] sm:$0xff]
        %v386 = vld [vmem:[%s236 + $0x450] sm:$0xff]
        %v387 = vld [vmem:[%s236 + $0x458] sm:$0xff]
        %v388 = vld [vmem:[%s236 + $0x460] sm:$0xff]
        %v389 = vld [vmem:[%s236 + $0x468] sm:$0xff]
        %v390 = vld [vmem:[%s236 + $0x470] sm:$0xff]
        %v391 = vld [vmem:[%s236 + $0x478] sm:$0xff]
        %v392 = vld [vmem:[%s236 + $0x480] sm:$0xff]
        %v393 = vld [vmem:[%s236 + $0x488] sm:$0xff]
        %v394 = vld [vmem:[%s236 + $0x490] sm:$0xff]
        %v395 = vld [vmem:[%s236 + $0x498] sm:$0xff]
        %v396 = vld [vmem:[%s236 + $0x4a0] sm:$0xff]
        %v397 = vld [vmem:[%s236 + $0x4a8] sm:$0xff]
        %v398 = vld [vmem:[%s236 + $0x4b0] sm:$0xff]
        %v399 = vld [vmem:[%s236 + $0x4b8] sm:$0xff]
        %v400 = vld [vmem:[%s236 + $0x4c0] sm:$0xff]
        %v401 = vld [vmem:[%s236 + $0x4c8] sm:$0xff]
        %v402 = vld [vmem:[%s236 + $0x4d0] sm:$0xff]
        %v403 = vld [vmem:[%s236 + $0x4d8] sm:$0xff]
        %v404 = vld [vmem:[%s236 + $0x4e0] sm:$0xff]
        %v405 = vld [vmem:[%s236 + $0x4e8] sm:$0xff]
        %v406 = vld [vmem:[%s236 + $0x4f0] sm:$0xff]
        %v407 = vld [vmem:[%s236 + $0x4f8] sm:$0xff]
        %v408 = vpack.c.bf16 %v249, %v248
        %v409 = vpack.c.bf16 %v251, %v250
        %v410 = vpack.c.bf16 %v253, %v252
        %v411 = vpack.c.bf16 %v255, %v254
        %v412 = vpack.c.bf16 %v257, %v256
        %v413 = vpack.c.bf16 %v259, %v258
        %v414 = vpack.c.bf16 %v261, %v260
        %v415 = vpack.c.bf16 %v263, %v262
        %v416 = vpack.c.bf16 %v265, %v264
        %v417 = vpack.c.bf16 %v267, %v266
        %v418 = vpack.c.bf16 %v269, %v268
        %v419 = vpack.c.bf16 %v271, %v270
        %v420 = vpack.c.bf16 %v273, %v272
        %v421 = vpack.c.bf16 %v275, %v274
        %v422 = vpack.c.bf16 %v277, %v276
        %v423 = vpack.c.bf16 %v279, %v278
        %v424 = vpack.c.bf16 %v281, %v280
        %v425 = vpack.c.bf16 %v283, %v282
        %v426 = vpack.c.bf16 %v285, %v284
        %v427 = vpack.c.bf16 %v287, %v286
        %v428 = vpack.c.bf16 %v289, %v288
        %v429 = vpack.c.bf16 %v291, %v290
        %v430 = vpack.c.bf16 %v293, %v292
        %v431 = vpack.c.bf16 %v295, %v294
        %v432 = vpack.c.bf16 %v297, %v296
        %v433 = vpack.c.bf16 %v299, %v298
        %v434 = vpack.c.bf16 %v301, %v300
        %v435 = vpack.c.bf16 %v303, %v302
        %v436 = vpack.c.bf16 %v305, %v304
        %v437 = vpack.c.bf16 %v307, %v306
        %v438 = vpack.c.bf16 %v309, %v308
        %v439 = vpack.c.bf16 %v311, %v310
        %v440 = vpack.c.bf16 %v313, %v312
        %v441 = vpack.c.bf16 %v315, %v314
        %v442 = vpack.c.bf16 %v317, %v316
        %v443 = vpack.c.bf16 %v319, %v318
        %v444 = vpack.c.bf16 %v321, %v320
        %v445 = vpack.c.bf16 %v323, %v322
        %v446 = vpack.c.bf16 %v325, %v324
        %v447 = vpack.c.bf16 %v327, %v326
        %v448 = vpack.c.bf16 %v329, %v328
        %v449 = vpack.c.bf16 %v331, %v330
        %v450 = vpack.c.bf16 %v333, %v332
        %v451 = vpack.c.bf16 %v335, %v334
        %v452 = vpack.c.bf16 %v337, %v336
        %v453 = vpack.c.bf16 %v339, %v338
        %v454 = vpack.c.bf16 %v341, %v340
        %v455 = vpack.c.bf16 %v343, %v342
        %v456 = vpack.c.bf16 %v345, %v344
        %v457 = vpack.c.bf16 %v347, %v346
        %v458 = vpack.c.bf16 %v349, %v348
        %v459 = vpack.c.bf16 %v351, %v350
        %v460 = vpack.c.bf16 %v353, %v352
        %v461 = vpack.c.bf16 %v355, %v354
        %v462 = vpack.c.bf16 %v357, %v356
        %v463 = vpack.c.bf16 %v359, %v358
        %v464 = vpack.c.bf16 %v361, %v360
        %v465 = vpack.c.bf16 %v363, %v362
        %v466 = vpack.c.bf16 %v365, %v364
        %v467 = vpack.c.bf16 %v367, %v366
        %v468 = vpack.c.bf16 %v369, %v368
        %v469 = vpack.c.bf16 %v371, %v370
        %v470 = vpack.c.bf16 %v373, %v372
        %v471 = vpack.c.bf16 %v375, %v374
        %v472 = vpack.c.bf16 %v377, %v376
        %v473 = vpack.c.bf16 %v379, %v378
        %v474 = vpack.c.bf16 %v381, %v380
        %v475 = vpack.c.bf16 %v383, %v382
        %v476 = vpack.c.bf16 %v385, %v384
        %v477 = vpack.c.bf16 %v387, %v386
        %v478 = vpack.c.bf16 %v389, %v388
        %v479 = vpack.c.bf16 %v391, %v390
        %v480 = vpack.c.bf16 %v393, %v392
        %v481 = vpack.c.bf16 %v395, %v394
        %v482 = vpack.c.bf16 %v397, %v396
        %v483 = vpack.c.bf16 %v399, %v398
        %v484 = vpack.c.bf16 %v401, %v400
        %v485 = vpack.c.bf16 %v403, %v402
        %v486 = vpack.c.bf16 %v405, %v404
        %v487 = vpack.c.bf16 %v407, %v406
        %v488 = vld [vmem:[%s1] sm:$0xf]
        %v489 = vld [vmem:[%s1 + $0x4] sm:$0xf]
        %v490 = vld [vmem:[%s1 + $0x8] sm:$0xf]
        %v491 = vld [vmem:[%s1 + $0xc] sm:$0xf]
        %v492 = vld [vmem:[%s1 + $0x10] sm:$0xf]
        %v493 = vld [vmem:[%s1 + $0x14] sm:$0xf]
        %v494 = vld [vmem:[%s1 + $0x18] sm:$0xf]
        %v495 = vld [vmem:[%s1 + $0x1c] sm:$0xf]
        %v496 = vld [vmem:[%s2] sm:$0x1]
        %v498 = vlaneseq
        %v499 = vshrl.u32 %v498, 7
        %v500 = vsub.s32 0, %v499
        %v501 = vrot.slane %v496, %v500
        %v511 = vunpack.c.l.b16 %v488
        %v512 = vunpack.c.l.b16 %v489
        %v513 = vunpack.c.l.b16 %v490
        %v514 = vunpack.c.l.b16 %v491
        %v515 = vunpack.c.l.b16 %v492
        %v516 = vunpack.c.l.b16 %v493
        %v517 = vunpack.c.l.b16 %v494
        %v518 = vunpack.c.l.b16 %v495
        %v519 = vpack.c.b16 %v512, %v511
        %v520 = vpack.c.b16 %v514, %v513
        %v521 = vpack.c.b16 %v516, %v515
        %v522 = vpack.c.b16 %v518, %v517
        %vm527 = vcmask 523264
        %v529 = vsel %vm527, %v408, 0
        %v532 = vsel %vm527, %v409, 0
        %v535 = vsel %vm527, %v410, 0
        %v538 = vsel %vm527, %v411, 0
        %v541 = vsel %vm527, %v412, 0
        %v544 = vsel %vm527, %v413, 0
        %v547 = vsel %vm527, %v414, 0
        %v550 = vsel %vm527, %v415, 0
        %v553 = vsel %vm527, %v416, 0
        %v556 = vsel %vm527, %v417, 0
        %v559 = vsel %vm527, %v418, 0
        %v562 = vsel %vm527, %v419, 0
        %v565 = vsel %vm527, %v420, 0
        %v568 = vsel %vm527, %v421, 0
        %v571 = vsel %vm527, %v422, 0
        %v574 = vsel %vm527, %v423, 0
        %v577 = vsel %vm527, %v424, 0
        %v580 = vsel %vm527, %v425, 0
        %v583 = vsel %vm527, %v426, 0
        %v586 = vsel %vm527, %v427, 0
        %v589 = vsel %vm527, %v428, 0
        %v592 = vsel %vm527, %v429, 0
        %v595 = vsel %vm527, %v430, 0
        %v598 = vsel %vm527, %v431, 0
        %v601 = vsel %vm527, %v432, 0
        %v604 = vsel %vm527, %v433, 0
        %v607 = vsel %vm527, %v434, 0
        %v610 = vsel %vm527, %v435, 0
        %v613 = vsel %vm527, %v436, 0
        %v616 = vsel %vm527, %v437, 0
        %v619 = vsel %vm527, %v438, 0
        %v622 = vsel %vm527, %v439, 0
        %v625 = vsel %vm527, %v440, 0
        %v628 = vsel %vm527, %v441, 0
        %v631 = vsel %vm527, %v442, 0
        %v634 = vsel %vm527, %v443, 0
        %v637 = vsel %vm527, %v444, 0
        %v640 = vsel %vm527, %v445, 0
        %v643 = vsel %vm527, %v446, 0
        %v646 = vsel %vm527, %v447, 0
        %v649 = vsel %vm527, %v448, 0
        %v652 = vsel %vm527, %v449, 0
        %v655 = vsel %vm527, %v450, 0
        %v658 = vsel %vm527, %v451, 0
        %v661 = vsel %vm527, %v452, 0
        %v664 = vsel %vm527, %v453, 0
        %v667 = vsel %vm527, %v454, 0
        %v670 = vsel %vm527, %v455, 0
        %v673 = vsel %vm527, %v456, 0
        %v676 = vsel %vm527, %v457, 0
        %v679 = vsel %vm527, %v458, 0
        %v682 = vsel %vm527, %v459, 0
        %v685 = vsel %vm527, %v460, 0
        %v688 = vsel %vm527, %v461, 0
        %v691 = vsel %vm527, %v462, 0
        %v694 = vsel %vm527, %v463, 0
        %v697 = vsel %vm527, %v464, 0
        %v700 = vsel %vm527, %v465, 0
        %v703 = vsel %vm527, %v466, 0
        %v706 = vsel %vm527, %v467, 0
        %v709 = vsel %vm527, %v468, 0
        %v712 = vsel %vm527, %v469, 0
        %v715 = vsel %vm527, %v470, 0
        %v718 = vsel %vm527, %v471, 0
        %v721 = vsel %vm527, %v472, 0
        %v724 = vsel %vm527, %v473, 0
        %v727 = vsel %vm527, %v474, 0
        %v730 = vsel %vm527, %v475, 0
        %v733 = vsel %vm527, %v476, 0
        %v736 = vsel %vm527, %v477, 0
        %v739 = vsel %vm527, %v478, 0
        %v742 = vsel %vm527, %v479, 0
        %v745 = vsel %vm527, %v480, 0
        %v748 = vsel %vm527, %v481, 0
        %v751 = vsel %vm527, %v482, 0
        %v754 = vsel %vm527, %v483, 0
        %v757 = vsel %vm527, %v484, 0
        %v760 = vsel %vm527, %v485, 0
        %v763 = vsel %vm527, %v486, 0
        %v766 = vsel %vm527, %v487, 0
        %768 = vmatprep.subr.bf16.mxu0 0
        %769 = vmatpush1.bf16.msra.mxu0 %v519
        %770 = vmatprep.subr.bf16.mxu0 0
        %771 = vmatpush1.bf16.msra.mxu0 %v520
        %772 = vmatprep.subr.bf16.mxu0 0
        %773 = vmatpush1.bf16.msra.mxu0 %v521
        %774 = vmatprep.subr.bf16.mxu0 0
        %775 = vmatpush1.bf16.msra.mxu0 %v522
        %776 = vmatprep.subr.bf16.mxu0 0
        %777 = vmatpush1.bf16.msra.mxu0 0
        %778 = vmatprep.subr.bf16.mxu0 0
        %779 = vmatpush1.bf16.msra.mxu0 0
        %780 = vmatprep.subr.bf16.mxu0 0
        %781 = vmatpush1.bf16.msra.mxu0 0
        %782 = vmatprep.subr.bf16.mxu0 0
        %783 = vmatpush1.bf16.msra.mxu0 0
        %784 = vmatprep.subr.bf16.mxu0 0
        %785 = vmatpush1.bf16.msra.mxu0 0
        %786 = vmatprep.subr.bf16.mxu0 0
        %787 = vmatpush1.bf16.msra.mxu0 0
        %788 = vmatprep.subr.bf16.mxu0 0
        %789 = vmatpush1.bf16.msra.mxu0 0
        %790 = vmatprep.subr.bf16.mxu0 0
        %791 = vmatpush1.bf16.msra.mxu0 0
        %792 = vmatprep.subr.bf16.mxu0 0
        %793 = vmatpush1.bf16.msra.mxu0 0
        %794 = vmatprep.subr.bf16.mxu0 0
        %795 = vmatpush1.bf16.msra.mxu0 0
        %796 = vmatprep.subr.bf16.mxu0 0
        %797 = vmatpush1.bf16.msra.mxu0 0
        %798 = vmatprep.subr.bf16.mxu0 0
        %799 = vmatpush1.bf16.msra.mxu0 0
        %800 = vmatprep.mubr.bf16.mxu0 0
        %801 = vmatmul.mubr.bf16.gmra.mrb[0].mxu0 %v529
        %v802 = vpop.f32.mrb[0].mxu0
        %v803 = vadd.f32 %v501, %v802
        %v804 = vpop.f32.mrb[0].mxu0
        %v805 = vpop.f32.mrb[0].mxu0
        %v806 = vadd.f32 %v501, %v805
        %v807 = vpop.f32.mrb[0].mxu0
        %808 = vmatprep.mubr.bf16.mxu0 0
        %809 = vmatmul.mubr.bf16.gmra.mrb[0].mxu0 %v532
        %v810 = vpop.f32.mrb[0].mxu0
        %v811 = vadd.f32 %v501, %v810
        %v812 = vpop.f32.mrb[0].mxu0
        %v813 = vpop.f32.mrb[0].mxu0
        %v814 = vadd.f32 %v501, %v813
        %v815 = vpop.f32.mrb[0].mxu0
        %816 = vmatprep.mubr.bf16.mxu0 0
        %817 = vmatmul.mubr.bf16.gmra.mrb[0].mxu0 %v535
        %v818 = vpop.f32.mrb[0].mxu0
        %v819 = vadd.f32 %v501, %v818
        %v820 = vpop.f32.mrb[0].mxu0
        %v821 = vpop.f32.mrb[0].mxu0
        %v822 = vadd.f32 %v501, %v821
        %v823 = vpop.f32.mrb[0].mxu0
        %824 = vmatprep.mubr.bf16.mxu0 0
        %825 = vmatmul.mubr.bf16.gmra.mrb[0].mxu0 %v538
        %v826 = vpop.f32.mrb[0].mxu0
        %v827 = vadd.f32 %v501, %v826
        %v828 = vpop.f32.mrb[0].mxu0
        %v829 = vpop.f32.mrb[0].mxu0
        %v830 = vadd.f32 %v501, %v829
        %v831 = vpop.f32.mrb[0].mxu0
        %832 = vmatprep.mubr.bf16.mxu0 0
        %833 = vmatmul.mubr.bf16.gmra.mrb[0].mxu0 %v541
        %v834 = vpop.f32.mrb[0].mxu0
        %v835 = vadd.f32 %v501, %v834
        %v836 = vpop.f32.mrb[0].mxu0
        %v837 = vpop.f32.mrb[0].mxu0
        %v838 = vadd.f32 %v501, %v837
        %v839 = vpop.f32.mrb[0].mxu0
        %840 = vmatprep.mubr.bf16.mxu0 0
        %841 = vmatmul.mubr.bf16.gmra.mrb[0].mxu0 %v544
        %v842 = vpop.f32.mrb[0].mxu0
        %v843 = vadd.f32 %v501, %v842
        %v844 = vpop.f32.mrb[0].mxu0
        %v845 = vpop.f32.mrb[0].mxu0
        %v846 = vadd.f32 %v501, %v845
        %v847 = vpop.f32.mrb[0].mxu0
        %848 = vmatprep.mubr.bf16.mxu0 0
        %849 = vmatmul.mubr.bf16.gmra.mrb[0].mxu0 %v547
        %v850 = vpop.f32.mrb[0].mxu0
        %v851 = vadd.f32 %v501, %v850
        %v852 = vpop.f32.mrb[0].mxu0
        %v853 = vpop.f32.mrb[0].mxu0
        %v854 = vadd.f32 %v501, %v853
        %v855 = vpop.f32.mrb[0].mxu0
        %856 = vmatprep.mubr.bf16.mxu0 0
        %857 = vmatmul.mubr.bf16.gmra.mrb[0].mxu0 %v550
        %v858 = vpop.f32.mrb[0].mxu0
        %v859 = vadd.f32 %v501, %v858
        %v860 = vpop.f32.mrb[0].mxu0
        %v861 = vpop.f32.mrb[0].mxu0
        %v862 = vadd.f32 %v501, %v861
        %v863 = vpop.f32.mrb[0].mxu0
        %864 = vmatprep.mubr.bf16.mxu0 0
        %865 = vmatmul.mubr.bf16.gmra.mrb[0].mxu0 %v553
        %v866 = vpop.f32.mrb[0].mxu0
        %v867 = vadd.f32 %v501, %v866
        %v868 = vpop.f32.mrb[0].mxu0
        %v869 = vpop.f32.mrb[0].mxu0
        %v870 = vadd.f32 %v501, %v869
        %v871 = vpop.f32.mrb[0].mxu0
        %872 = vmatprep.mubr.bf16.mxu0 0
        %873 = vmatmul.mubr.bf16.gmra.mrb[0].mxu0 %v556
        %v874 = vpop.f32.mrb[0].mxu0
        %v875 = vadd.f32 %v501, %v874
        %v876 = vpop.f32.mrb[0].mxu0
        %v877 = vpop.f32.mrb[0].mxu0
        %v878 = vadd.f32 %v501, %v877
        %v879 = vpop.f32.mrb[0].mxu0
        %880 = vmatprep.mubr.bf16.mxu0 0
        %881 = vmatmul.mubr.bf16.gmra.mrb[0].mxu0 %v559
        %v882 = vpop.f32.mrb[0].mxu0
        %v883 = vadd.f32 %v501, %v882
        %v884 = vpop.f32.mrb[0].mxu0
        %v885 = vpop.f32.mrb[0].mxu0
        %v886 = vadd.f32 %v501, %v885
        %v887 = vpop.f32.mrb[0].mxu0
        %888 = vmatprep.mubr.bf16.mxu0 0
        %889 = vmatmul.mubr.bf16.gmra.mrb[0].mxu0 %v562
        %v890 = vpop.f32.mrb[0].mxu0
        %v891 = vadd.f32 %v501, %v890
        %v892 = vpop.f32.mrb[0].mxu0
        %v893 = vpop.f32.mrb[0].mxu0
        %v894 = vadd.f32 %v501, %v893
        %v895 = vpop.f32.mrb[0].mxu0
        %896 = vmatprep.mubr.bf16.mxu0 0
        %897 = vmatmul.mubr.bf16.gmra.mrb[0].mxu0 %v565
        %v898 = vpop.f32.mrb[0].mxu0
        %v899 = vadd.f32 %v501, %v898
        %v900 = vpop.f32.mrb[0].mxu0
        %v901 = vpop.f32.mrb[0].mxu0
        %v902 = vadd.f32 %v501, %v901
        %v903 = vpop.f32.mrb[0].mxu0
        %904 = vmatprep.mubr.bf16.mxu0 0
        %905 = vmatmul.mubr.bf16.gmra.mrb[0].mxu0 %v568
        %v906 = vpop.f32.mrb[0].mxu0
        %v907 = vadd.f32 %v501, %v906
        %v908 = vpop.f32.mrb[0].mxu0
        %v909 = vpop.f32.mrb[0].mxu0
        %v910 = vadd.f32 %v501, %v909
        %v911 = vpop.f32.mrb[0].mxu0
        %912 = vmatprep.mubr.bf16.mxu0 0
        %913 = vmatmul.mubr.bf16.gmra.mrb[0].mxu0 %v571
        %v914 = vpop.f32.mrb[0].mxu0
        %v915 = vadd.f32 %v501, %v914
        %v916 = vpop.f32.mrb[0].mxu0
        %v917 = vpop.f32.mrb[0].mxu0
        %v918 = vadd.f32 %v501, %v917
        %v919 = vpop.f32.mrb[0].mxu0
        %920 = vmatprep.mubr.bf16.mxu0 0
        %921 = vmatmul.mubr.bf16.gmra.mrb[0].mxu0 %v574
        %v922 = vpop.f32.mrb[0].mxu0
        %v923 = vadd.f32 %v501, %v922
        %v924 = vpop.f32.mrb[0].mxu0
        %v925 = vpop.f32.mrb[0].mxu0
        %v926 = vadd.f32 %v501, %v925
        %v927 = vpop.f32.mrb[0].mxu0
        %928 = vmatprep.mubr.bf16.mxu0 0
        %929 = vmatmul.mubr.bf16.gmra.mrb[0].mxu0 %v577
        %v930 = vpop.f32.mrb[0].mxu0
        %v931 = vadd.f32 %v501, %v930
        %v932 = vpop.f32.mrb[0].mxu0
        %v933 = vpop.f32.mrb[0].mxu0
        %v934 = vadd.f32 %v501, %v933
        %v935 = vpop.f32.mrb[0].mxu0
        %936 = vmatprep.mubr.bf16.mxu0 0
        %937 = vmatmul.mubr.bf16.gmra.mrb[0].mxu0 %v580
        %v938 = vpop.f32.mrb[0].mxu0
        %v939 = vadd.f32 %v501, %v938
        %v940 = vpop.f32.mrb[0].mxu0
        %v941 = vpop.f32.mrb[0].mxu0
        %v942 = vadd.f32 %v501, %v941
        %v943 = vpop.f32.mrb[0].mxu0
        %944 = vmatprep.mubr.bf16.mxu0 0
        %945 = vmatmul.mubr.bf16.gmra.mrb[0].mxu0 %v583
        %v946 = vpop.f32.mrb[0].mxu0
        %v947 = vadd.f32 %v501, %v946
        %v948 = vpop.f32.mrb[0].mxu0
        %v949 = vpop.f32.mrb[0].mxu0
        %v950 = vadd.f32 %v501, %v949
        %v951 = vpop.f32.mrb[0].mxu0
        %952 = vmatprep.mubr.bf16.mxu0 0
        %953 = vmatmul.mubr.bf16.gmra.mrb[0].mxu0 %v586
        %v954 = vpop.f32.mrb[0].mxu0
        %v955 = vadd.f32 %v501, %v954
        %v956 = vpop.f32.mrb[0].mxu0
        %v957 = vpop.f32.mrb[0].mxu0
        %v958 = vadd.f32 %v501, %v957
        %v959 = vpop.f32.mrb[0].mxu0
        %960 = vmatprep.mubr.bf16.mxu0 0
        %961 = vmatmul.mubr.bf16.gmra.mrb[0].mxu0 %v589
        %v962 = vpop.f32.mrb[0].mxu0
        %v963 = vadd.f32 %v501, %v962
        %v964 = vpop.f32.mrb[0].mxu0
        %v965 = vpop.f32.mrb[0].mxu0
        %v966 = vadd.f32 %v501, %v965
        %v967 = vpop.f32.mrb[0].mxu0
        %968 = vmatprep.mubr.bf16.mxu0 0
        %969 = vmatmul.mubr.bf16.gmra.mrb[0].mxu0 %v592
        %v970 = vpop.f32.mrb[0].mxu0
        %v971 = vadd.f32 %v501, %v970
        %v972 = vpop.f32.mrb[0].mxu0
        %v973 = vpop.f32.mrb[0].mxu0
        %v974 = vadd.f32 %v501, %v973
        %v975 = vpop.f32.mrb[0].mxu0
        %976 = vmatprep.mubr.bf16.mxu0 0
        %977 = vmatmul.mubr.bf16.gmra.mrb[0].mxu0 %v595
        %v978 = vpop.f32.mrb[0].mxu0
        %v979 = vadd.f32 %v501, %v978
        %v980 = vpop.f32.mrb[0].mxu0
        %v981 = vpop.f32.mrb[0].mxu0
        %v982 = vadd.f32 %v501, %v981
        %v983 = vpop.f32.mrb[0].mxu0
        %984 = vmatprep.mubr.bf16.mxu0 0
        %985 = vmatmul.mubr.bf16.gmra.mrb[0].mxu0 %v598
        %v986 = vpop.f32.mrb[0].mxu0
        %v987 = vadd.f32 %v501, %v986
        %v988 = vpop.f32.mrb[0].mxu0
        %v989 = vpop.f32.mrb[0].mxu0
        %v990 = vadd.f32 %v501, %v989
        %v991 = vpop.f32.mrb[0].mxu0
        %992 = vmatprep.mubr.bf16.mxu0 0
        %993 = vmatmul.mubr.bf16.gmra.mrb[0].mxu0 %v601
        %v994 = vpop.f32.mrb[0].mxu0
        %v995 = vadd.f32 %v501, %v994
        %v996 = vpop.f32.mrb[0].mxu0
        %v997 = vpop.f32.mrb[0].mxu0
        %v998 = vadd.f32 %v501, %v997
        %v999 = vpop.f32.mrb[0].mxu0
        %1000 = vmatprep.mubr.bf16.mxu0 0
        %1001 = vmatmul.mubr.bf16.gmra.mrb[0].mxu0 %v604
        %v1002 = vpop.f32.mrb[0].mxu0
        %v1003 = vadd.f32 %v501, %v1002
        %v1004 = vpop.f32.mrb[0].mxu0
        %v1005 = vpop.f32.mrb[0].mxu0
        %v1006 = vadd.f32 %v501, %v1005
        %v1007 = vpop.f32.mrb[0].mxu0
        %1008 = vmatprep.mubr.bf16.mxu0 0
        %1009 = vmatmul.mubr.bf16.gmra.mrb[0].mxu0 %v607
        %v1010 = vpop.f32.mrb[0].mxu0
        %v1011 = vadd.f32 %v501, %v1010
        %v1012 = vpop.f32.mrb[0].mxu0
        %v1013 = vpop.f32.mrb[0].mxu0
        %v1014 = vadd.f32 %v501, %v1013
        %v1015 = vpop.f32.mrb[0].mxu0
        %1016 = vmatprep.mubr.bf16.mxu0 0
        %1017 = vmatmul.mubr.bf16.gmra.mrb[0].mxu0 %v610
        %v1018 = vpop.f32.mrb[0].mxu0
        %v1019 = vadd.f32 %v501, %v1018
        %v1020 = vpop.f32.mrb[0].mxu0
        %v1021 = vpop.f32.mrb[0].mxu0
        %v1022 = vadd.f32 %v501, %v1021
        %v1023 = vpop.f32.mrb[0].mxu0
        %1024 = vmatprep.mubr.bf16.mxu0 0
        %1025 = vmatmul.mubr.bf16.gmra.mrb[0].mxu0 %v613
        %v1026 = vpop.f32.mrb[0].mxu0
        %v1027 = vadd.f32 %v501, %v1026
        %v1028 = vpop.f32.mrb[0].mxu0
        %v1029 = vpop.f32.mrb[0].mxu0
        %v1030 = vadd.f32 %v501, %v1029
        %v1031 = vpop.f32.mrb[0].mxu0
        %1032 = vmatprep.mubr.bf16.mxu0 0
        %1033 = vmatmul.mubr.bf16.gmra.mrb[0].mxu0 %v616
        %v1034 = vpop.f32.mrb[0].mxu0
        %v1035 = vadd.f32 %v501, %v1034
        %v1036 = vpop.f32.mrb[0].mxu0
        %v1037 = vpop.f32.mrb[0].mxu0
        %v1038 = vadd.f32 %v501, %v1037
        %v1039 = vpop.f32.mrb[0].mxu0
        %1040 = vmatprep.mubr.bf16.mxu0 0
        %1041 = vmatmul.mubr.bf16.gmra.mrb[0].mxu0 %v619
        %v1042 = vpop.f32.mrb[0].mxu0
        %v1043 = vadd.f32 %v501, %v1042
        %v1044 = vpop.f32.mrb[0].mxu0
        %v1045 = vpop.f32.mrb[0].mxu0
        %v1046 = vadd.f32 %v501, %v1045
        %v1047 = vpop.f32.mrb[0].mxu0
        %1048 = vmatprep.mubr.bf16.mxu0 0
        %1049 = vmatmul.mubr.bf16.gmra.mrb[0].mxu0 %v622
        %v1050 = vpop.f32.mrb[0].mxu0
        %v1051 = vadd.f32 %v501, %v1050
        %v1052 = vpop.f32.mrb[0].mxu0
        %v1053 = vpop.f32.mrb[0].mxu0
        %v1054 = vadd.f32 %v501, %v1053
        %v1055 = vpop.f32.mrb[0].mxu0
        %1056 = vmatprep.mubr.bf16.mxu0 0
        %1057 = vmatmul.mubr.bf16.gmra.mrb[0].mxu0 %v625
        %v1058 = vpop.f32.mrb[0].mxu0
        %v1059 = vadd.f32 %v501, %v1058
        %v1060 = vpop.f32.mrb[0].mxu0
        %v1061 = vpop.f32.mrb[0].mxu0
        %v1062 = vadd.f32 %v501, %v1061
        %v1063 = vpop.f32.mrb[0].mxu0
        %1064 = vmatprep.mubr.bf16.mxu0 0
        %1065 = vmatmul.mubr.bf16.gmra.mrb[0].mxu0 %v628
        %v1066 = vpop.f32.mrb[0].mxu0
        %v1067 = vadd.f32 %v501, %v1066
        %v1068 = vpop.f32.mrb[0].mxu0
        %v1069 = vpop.f32.mrb[0].mxu0
        %v1070 = vadd.f32 %v501, %v1069
        %v1071 = vpop.f32.mrb[0].mxu0
        %1072 = vmatprep.mubr.bf16.mxu0 0
        %1073 = vmatmul.mubr.bf16.gmra.mrb[0].mxu0 %v631
        %v1074 = vpop.f32.mrb[0].mxu0
        %v1075 = vadd.f32 %v501, %v1074
        %v1076 = vpop.f32.mrb[0].mxu0
        %v1077 = vpop.f32.mrb[0].mxu0
        %v1078 = vadd.f32 %v501, %v1077
        %v1079 = vpop.f32.mrb[0].mxu0
        %1080 = vmatprep.mubr.bf16.mxu0 0
        %1081 = vmatmul.mubr.bf16.gmra.mrb[0].mxu0 %v634
        %v1082 = vpop.f32.mrb[0].mxu0
        %v1083 = vadd.f32 %v501, %v1082
        %v1084 = vpop.f32.mrb[0].mxu0
        %v1085 = vpop.f32.mrb[0].mxu0
        %v1086 = vadd.f32 %v501, %v1085
        %v1087 = vpop.f32.mrb[0].mxu0
        %1088 = vmatprep.mubr.bf16.mxu0 0
        %1089 = vmatmul.mubr.bf16.gmra.mrb[0].mxu0 %v637
        %v1090 = vpop.f32.mrb[0].mxu0
        %v1091 = vadd.f32 %v501, %v1090
        %v1092 = vpop.f32.mrb[0].mxu0
        %v1093 = vpop.f32.mrb[0].mxu0
        %v1094 = vadd.f32 %v501, %v1093
        %v1095 = vpop.f32.mrb[0].mxu0
        %1096 = vmatprep.mubr.bf16.mxu0 0
        %1097 = vmatmul.mubr.bf16.gmra.mrb[0].mxu0 %v640
        %v1098 = vpop.f32.mrb[0].mxu0
        %v1099 = vadd.f32 %v501, %v1098
        %v1100 = vpop.f32.mrb[0].mxu0
        %v1101 = vpop.f32.mrb[0].mxu0
        %v1102 = vadd.f32 %v501, %v1101
        %v1103 = vpop.f32.mrb[0].mxu0
        %1104 = vmatprep.mubr.bf16.mxu0 0
        %1105 = vmatmul.mubr.bf16.gmra.mrb[0].mxu0 %v643
        %v1106 = vpop.f32.mrb[0].mxu0
        %v1107 = vadd.f32 %v501, %v1106
        %v1108 = vpop.f32.mrb[0].mxu0
        %v1109 = vpop.f32.mrb[0].mxu0
        %v1110 = vadd.f32 %v501, %v1109
        %v1111 = vpop.f32.mrb[0].mxu0
        %1112 = vmatprep.mubr.bf16.mxu0 0
        %1113 = vmatmul.mubr.bf16.gmra.mrb[0].mxu0 %v646
        %v1114 = vpop.f32.mrb[0].mxu0
        %v1115 = vadd.f32 %v501, %v1114
        %v1116 = vpop.f32.mrb[0].mxu0
        %v1117 = vpop.f32.mrb[0].mxu0
        %v1118 = vadd.f32 %v501, %v1117
        %v1119 = vpop.f32.mrb[0].mxu0
        %1120 = vmatprep.mubr.bf16.mxu0 0
        %1121 = vmatmul.mubr.bf16.gmra.mrb[0].mxu0 %v649
        %v1122 = vpop.f32.mrb[0].mxu0
        %v1123 = vadd.f32 %v501, %v1122
        %v1124 = vpop.f32.mrb[0].mxu0
        %v1125 = vpop.f32.mrb[0].mxu0
        %v1126 = vadd.f32 %v501, %v1125
        %v1127 = vpop.f32.mrb[0].mxu0
        %1128 = vmatprep.mubr.bf16.mxu0 0
        %1129 = vmatmul.mubr.bf16.gmra.mrb[0].mxu0 %v652
        %v1130 = vpop.f32.mrb[0].mxu0
        %v1131 = vadd.f32 %v501, %v1130
        %v1132 = vpop.f32.mrb[0].mxu0
        %v1133 = vpop.f32.mrb[0].mxu0
        %v1134 = vadd.f32 %v501, %v1133
        %v1135 = vpop.f32.mrb[0].mxu0
        %1136 = vmatprep.mubr.bf16.mxu0 0
        %1137 = vmatmul.mubr.bf16.gmra.mrb[0].mxu0 %v655
        %v1138 = vpop.f32.mrb[0].mxu0
        %v1139 = vadd.f32 %v501, %v1138
        %v1140 = vpop.f32.mrb[0].mxu0
        %v1141 = vpop.f32.mrb[0].mxu0
        %v1142 = vadd.f32 %v501, %v1141
        %v1143 = vpop.f32.mrb[0].mxu0
        %1144 = vmatprep.mubr.bf16.mxu0 0
        %1145 = vmatmul.mubr.bf16.gmra.mrb[0].mxu0 %v658
        %v1146 = vpop.f32.mrb[0].mxu0
        %v1147 = vadd.f32 %v501, %v1146
        %v1148 = vpop.f32.mrb[0].mxu0
        %v1149 = vpop.f32.mrb[0].mxu0
        %v1150 = vadd.f32 %v501, %v1149
        %v1151 = vpop.f32.mrb[0].mxu0
        %1152 = vmatprep.mubr.bf16.mxu0 0
        %1153 = vmatmul.mubr.bf16.gmra.mrb[0].mxu0 %v661
        %v1154 = vpop.f32.mrb[0].mxu0
        %v1155 = vadd.f32 %v501, %v1154
        %v1156 = vpop.f32.mrb[0].mxu0
        %v1157 = vpop.f32.mrb[0].mxu0
        %v1158 = vadd.f32 %v501, %v1157
        %v1159 = vpop.f32.mrb[0].mxu0
        %1160 = vmatprep.mubr.bf16.mxu0 0
        %1161 = vmatmul.mubr.bf16.gmra.mrb[0].mxu0 %v664
        %v1162 = vpop.f32.mrb[0].mxu0
        %v1163 = vadd.f32 %v501, %v1162
        %v1164 = vpop.f32.mrb[0].mxu0
        %v1165 = vpop.f32.mrb[0].mxu0
        %v1166 = vadd.f32 %v501, %v1165
        %v1167 = vpop.f32.mrb[0].mxu0
        %1168 = vmatprep.mubr.bf16.mxu0 0
        %1169 = vmatmul.mubr.bf16.gmra.mrb[0].mxu0 %v667
        %v1170 = vpop.f32.mrb[0].mxu0
        %v1171 = vadd.f32 %v501, %v1170
        %v1172 = vpop.f32.mrb[0].mxu0
        %v1173 = vpop.f32.mrb[0].mxu0
        %v1174 = vadd.f32 %v501, %v1173
        %v1175 = vpop.f32.mrb[0].mxu0
        %1176 = vmatprep.mubr.bf16.mxu0 0
        %1177 = vmatmul.mubr.bf16.gmra.mrb[0].mxu0 %v670
        %v1178 = vpop.f32.mrb[0].mxu0
        %v1179 = vadd.f32 %v501, %v1178
        %v1180 = vpop.f32.mrb[0].mxu0
        %v1181 = vpop.f32.mrb[0].mxu0
        %v1182 = vadd.f32 %v501, %v1181
        %v1183 = vpop.f32.mrb[0].mxu0
        %1184 = vmatprep.mubr.bf16.mxu0 0
        %1185 = vmatmul.mubr.bf16.gmra.mrb[0].mxu0 %v673
        %v1186 = vpop.f32.mrb[0].mxu0
        %v1187 = vadd.f32 %v501, %v1186
        %v1188 = vpop.f32.mrb[0].mxu0
        %v1189 = vpop.f32.mrb[0].mxu0
        %v1190 = vadd.f32 %v501, %v1189
        %v1191 = vpop.f32.mrb[0].mxu0
        %1192 = vmatprep.mubr.bf16.mxu0 0
        %1193 = vmatmul.mubr.bf16.gmra.mrb[0].mxu0 %v676
        %v1194 = vpop.f32.mrb[0].mxu0
        %v1195 = vadd.f32 %v501, %v1194
        %v1196 = vpop.f32.mrb[0].mxu0
        %v1197 = vpop.f32.mrb[0].mxu0
        %v1198 = vadd.f32 %v501, %v1197
        %v1199 = vpop.f32.mrb[0].mxu0
        %1200 = vmatprep.mubr.bf16.mxu0 0
        %1201 = vmatmul.mubr.bf16.gmra.mrb[0].mxu0 %v679
        %v1202 = vpop.f32.mrb[0].mxu0
        %v1203 = vadd.f32 %v501, %v1202
        %v1204 = vpop.f32.mrb[0].mxu0
        %v1205 = vpop.f32.mrb[0].mxu0
        %v1206 = vadd.f32 %v501, %v1205
        %v1207 = vpop.f32.mrb[0].mxu0
        %1208 = vmatprep.mubr.bf16.mxu0 0
        %1209 = vmatmul.mubr.bf16.gmra.mrb[0].mxu0 %v682
        %v1210 = vpop.f32.mrb[0].mxu0
        %v1211 = vadd.f32 %v501, %v1210
        %v1212 = vpop.f32.mrb[0].mxu0
        %v1213 = vpop.f32.mrb[0].mxu0
        %v1214 = vadd.f32 %v501, %v1213
        %v1215 = vpop.f32.mrb[0].mxu0
        %1216 = vmatprep.mubr.bf16.mxu0 0
        %1217 = vmatmul.mubr.bf16.gmra.mrb[0].mxu0 %v685
        %v1218 = vpop.f32.mrb[0].mxu0
        %v1219 = vadd.f32 %v501, %v1218
        %v1220 = vpop.f32.mrb[0].mxu0
        %v1221 = vpop.f32.mrb[0].mxu0
        %v1222 = vadd.f32 %v501, %v1221
        %v1223 = vpop.f32.mrb[0].mxu0
        %1224 = vmatprep.mubr.bf16.mxu0 0
        %1225 = vmatmul.mubr.bf16.gmra.mrb[0].mxu0 %v688
        %v1226 = vpop.f32.mrb[0].mxu0
        %v1227 = vadd.f32 %v501, %v1226
        %v1228 = vpop.f32.mrb[0].mxu0
        %v1229 = vpop.f32.mrb[0].mxu0
        %v1230 = vadd.f32 %v501, %v1229
        %v1231 = vpop.f32.mrb[0].mxu0
        %1232 = vmatprep.mubr.bf16.mxu0 0
        %1233 = vmatmul.mubr.bf16.gmra.mrb[0].mxu0 %v691
        %v1234 = vpop.f32.mrb[0].mxu0
        %v1235 = vadd.f32 %v501, %v1234
        %v1236 = vpop.f32.mrb[0].mxu0
        %v1237 = vpop.f32.mrb[0].mxu0
        %v1238 = vadd.f32 %v501, %v1237
        %v1239 = vpop.f32.mrb[0].mxu0
        %1240 = vmatprep.mubr.bf16.mxu0 0
        %1241 = vmatmul.mubr.bf16.gmra.mrb[0].mxu0 %v694
        %v1242 = vpop.f32.mrb[0].mxu0
        %v1243 = vadd.f32 %v501, %v1242
        %v1244 = vpop.f32.mrb[0].mxu0
        %v1245 = vpop.f32.mrb[0].mxu0
        %v1246 = vadd.f32 %v501, %v1245
        %v1247 = vpop.f32.mrb[0].mxu0
        %1248 = vmatprep.mubr.bf16.mxu0 0
        %1249 = vmatmul.mubr.bf16.gmra.mrb[0].mxu0 %v697
        %v1250 = vpop.f32.mrb[0].mxu0
        %v1251 = vadd.f32 %v501, %v1250
        %v1252 = vpop.f32.mrb[0].mxu0
        %v1253 = vpop.f32.mrb[0].mxu0
        %v1254 = vadd.f32 %v501, %v1253
        %v1255 = vpop.f32.mrb[0].mxu0
        %1256 = vmatprep.mubr.bf16.mxu0 0
        %1257 = vmatmul.mubr.bf16.gmra.mrb[0].mxu0 %v700
        %v1258 = vpop.f32.mrb[0].mxu0
        %v1259 = vadd.f32 %v501, %v1258
        %v1260 = vpop.f32.mrb[0].mxu0
        %v1261 = vpop.f32.mrb[0].mxu0
        %v1262 = vadd.f32 %v501, %v1261
        %v1263 = vpop.f32.mrb[0].mxu0
        %1264 = vmatprep.mubr.bf16.mxu0 0
        %1265 = vmatmul.mubr.bf16.gmra.mrb[0].mxu0 %v703
        %v1266 = vpop.f32.mrb[0].mxu0
        %v1267 = vadd.f32 %v501, %v1266
        %v1268 = vpop.f32.mrb[0].mxu0
        %v1269 = vpop.f32.mrb[0].mxu0
        %v1270 = vadd.f32 %v501, %v1269
        %v1271 = vpop.f32.mrb[0].mxu0
        %1272 = vmatprep.mubr.bf16.mxu0 0
        %1273 = vmatmul.mubr.bf16.gmra.mrb[0].mxu0 %v706
        %v1274 = vpop.f32.mrb[0].mxu0
        %v1275 = vadd.f32 %v501, %v1274
        %v1276 = vpop.f32.mrb[0].mxu0
        %v1277 = vpop.f32.mrb[0].mxu0
        %v1278 = vadd.f32 %v501, %v1277
        %v1279 = vpop.f32.mrb[0].mxu0
        %1280 = vmatprep.mubr.bf16.mxu0 0
        %1281 = vmatmul.mubr.bf16.gmra.mrb[0].mxu0 %v709
        %v1282 = vpop.f32.mrb[0].mxu0
        %v1283 = vadd.f32 %v501, %v1282
        %v1284 = vpop.f32.mrb[0].mxu0
        %v1285 = vpop.f32.mrb[0].mxu0
        %v1286 = vadd.f32 %v501, %v1285
        %v1287 = vpop.f32.mrb[0].mxu0
        %1288 = vmatprep.mubr.bf16.mxu0 0
        %1289 = vmatmul.mubr.bf16.gmra.mrb[0].mxu0 %v712
        %v1290 = vpop.f32.mrb[0].mxu0
        %v1291 = vadd.f32 %v501, %v1290
        %v1292 = vpop.f32.mrb[0].mxu0
        %v1293 = vpop.f32.mrb[0].mxu0
        %v1294 = vadd.f32 %v501, %v1293
        %v1295 = vpop.f32.mrb[0].mxu0
        %1296 = vmatprep.mubr.bf16.mxu0 0
        %1297 = vmatmul.mubr.bf16.gmra.mrb[0].mxu0 %v715
        %v1298 = vpop.f32.mrb[0].mxu0
        %v1299 = vadd.f32 %v501, %v1298
        %v1300 = vpop.f32.mrb[0].mxu0
        %v1301 = vpop.f32.mrb[0].mxu0
        %v1302 = vadd.f32 %v501, %v1301
        %v1303 = vpop.f32.mrb[0].mxu0
        %1304 = vmatprep.mubr.bf16.mxu0 0
        %1305 = vmatmul.mubr.bf16.gmra.mrb[0].mxu0 %v718
        %v1306 = vpop.f32.mrb[0].mxu0
        %v1307 = vadd.f32 %v501, %v1306
        %v1308 = vpop.f32.mrb[0].mxu0
        %v1309 = vpop.f32.mrb[0].mxu0
        %v1310 = vadd.f32 %v501, %v1309
        %v1311 = vpop.f32.mrb[0].mxu0
        %1312 = vmatprep.mubr.bf16.mxu0 0
        %1313 = vmatmul.mubr.bf16.gmra.mrb[0].mxu0 %v721
        %v1314 = vpop.f32.mrb[0].mxu0
        %v1315 = vadd.f32 %v501, %v1314
        %v1316 = vpop.f32.mrb[0].mxu0
        %v1317 = vpop.f32.mrb[0].mxu0
        %v1318 = vadd.f32 %v501, %v1317
        %v1319 = vpop.f32.mrb[0].mxu0
        %1320 = vmatprep.mubr.bf16.mxu0 0
        %1321 = vmatmul.mubr.bf16.gmra.mrb[0].mxu0 %v724
        %v1322 = vpop.f32.mrb[0].mxu0
        %v1323 = vadd.f32 %v501, %v1322
        %v1324 = vpop.f32.mrb[0].mxu0
        %v1325 = vpop.f32.mrb[0].mxu0
        %v1326 = vadd.f32 %v501, %v1325
        %v1327 = vpop.f32.mrb[0].mxu0
        %1328 = vmatprep.mubr.bf16.mxu0 0
        %1329 = vmatmul.mubr.bf16.gmra.mrb[0].mxu0 %v727
        %v1330 = vpop.f32.mrb[0].mxu0
        %v1331 = vadd.f32 %v501, %v1330
        %v1332 = vpop.f32.mrb[0].mxu0
        %v1333 = vpop.f32.mrb[0].mxu0
        %v1334 = vadd.f32 %v501, %v1333
        %v1335 = vpop.f32.mrb[0].mxu0
        %1336 = vmatprep.mubr.bf16.mxu0 0
        %1337 = vmatmul.mubr.bf16.gmra.mrb[0].mxu0 %v730
        %v1338 = vpop.f32.mrb[0].mxu0
        %v1339 = vadd.f32 %v501, %v1338
        %v1340 = vpop.f32.mrb[0].mxu0
        %v1341 = vpop.f32.mrb[0].mxu0
        %v1342 = vadd.f32 %v501, %v1341
        %v1343 = vpop.f32.mrb[0].mxu0
        %1344 = vmatprep.mubr.bf16.mxu0 0
        %1345 = vmatmul.mubr.bf16.gmra.mrb[0].mxu0 %v733
        %v1346 = vpop.f32.mrb[0].mxu0
        %v1347 = vadd.f32 %v501, %v1346
        %v1348 = vpop.f32.mrb[0].mxu0
        %v1349 = vpop.f32.mrb[0].mxu0
        %v1350 = vadd.f32 %v501, %v1349
        %v1351 = vpop.f32.mrb[0].mxu0
        %1352 = vmatprep.mubr.bf16.mxu0 0
        %1353 = vmatmul.mubr.bf16.gmra.mrb[0].mxu0 %v736
        %v1354 = vpop.f32.mrb[0].mxu0
        %v1355 = vadd.f32 %v501, %v1354
        %v1356 = vpop.f32.mrb[0].mxu0
        %v1357 = vpop.f32.mrb[0].mxu0
        %v1358 = vadd.f32 %v501, %v1357
        %v1359 = vpop.f32.mrb[0].mxu0
        %1360 = vmatprep.mubr.bf16.mxu0 0
        %1361 = vmatmul.mubr.bf16.gmra.mrb[0].mxu0 %v739
        %v1362 = vpop.f32.mrb[0].mxu0
        %v1363 = vadd.f32 %v501, %v1362
        %v1364 = vpop.f32.mrb[0].mxu0
        %v1365 = vpop.f32.mrb[0].mxu0
        %v1366 = vadd.f32 %v501, %v1365
        %v1367 = vpop.f32.mrb[0].mxu0
        %1368 = vmatprep.mubr.bf16.mxu0 0
        %1369 = vmatmul.mubr.bf16.gmra.mrb[0].mxu0 %v742
        %v1370 = vpop.f32.mrb[0].mxu0
        %v1371 = vadd.f32 %v501, %v1370
        %v1372 = vpop.f32.mrb[0].mxu0
        %v1373 = vpop.f32.mrb[0].mxu0
        %v1374 = vadd.f32 %v501, %v1373
        %v1375 = vpop.f32.mrb[0].mxu0
        %1376 = vmatprep.mubr.bf16.mxu0 0
        %1377 = vmatmul.mubr.bf16.gmra.mrb[0].mxu0 %v745
        %v1378 = vpop.f32.mrb[0].mxu0
        %v1379 = vadd.f32 %v501, %v1378
        %v1380 = vpop.f32.mrb[0].mxu0
        %v1381 = vpop.f32.mrb[0].mxu0
        %v1382 = vadd.f32 %v501, %v1381
        %v1383 = vpop.f32.mrb[0].mxu0
        %1384 = vmatprep.mubr.bf16.mxu0 0
        %1385 = vmatmul.mubr.bf16.gmra.mrb[0].mxu0 %v748
        %v1386 = vpop.f32.mrb[0].mxu0
        %v1387 = vadd.f32 %v501, %v1386
        %v1388 = vpop.f32.mrb[0].mxu0
        %v1389 = vpop.f32.mrb[0].mxu0
        %v1390 = vadd.f32 %v501, %v1389
        %v1391 = vpop.f32.mrb[0].mxu0
        %1392 = vmatprep.mubr.bf16.mxu0 0
        %1393 = vmatmul.mubr.bf16.gmra.mrb[0].mxu0 %v751
        %v1394 = vpop.f32.mrb[0].mxu0
        %v1395 = vadd.f32 %v501, %v1394
        %v1396 = vpop.f32.mrb[0].mxu0
        %v1397 = vpop.f32.mrb[0].mxu0
        %v1398 = vadd.f32 %v501, %v1397
        %v1399 = vpop.f32.mrb[0].mxu0
        %1400 = vmatprep.mubr.bf16.mxu0 0
        %1401 = vmatmul.mubr.bf16.gmra.mrb[0].mxu0 %v754
        %v1402 = vpop.f32.mrb[0].mxu0
        %v1403 = vadd.f32 %v501, %v1402
        %v1404 = vpop.f32.mrb[0].mxu0
        %v1405 = vpop.f32.mrb[0].mxu0
        %v1406 = vadd.f32 %v501, %v1405
        %v1407 = vpop.f32.mrb[0].mxu0
        %1408 = vmatprep.mubr.bf16.mxu0 0
        %1409 = vmatmul.mubr.bf16.gmra.mrb[0].mxu0 %v757
        %v1410 = vpop.f32.mrb[0].mxu0
        %v1411 = vadd.f32 %v501, %v1410
        %v1412 = vpop.f32.mrb[0].mxu0
        %v1413 = vpop.f32.mrb[0].mxu0
        %v1414 = vadd.f32 %v501, %v1413
        %v1415 = vpop.f32.mrb[0].mxu0
        %1416 = vmatprep.mubr.bf16.mxu0 0
        %1417 = vmatmul.mubr.bf16.gmra.mrb[0].mxu0 %v760
        %v1418 = vpop.f32.mrb[0].mxu0
        %v1419 = vadd.f32 %v501, %v1418
        %v1420 = vpop.f32.mrb[0].mxu0
        %v1421 = vpop.f32.mrb[0].mxu0
        %v1422 = vadd.f32 %v501, %v1421
        %v1423 = vpop.f32.mrb[0].mxu0
        %1424 = vmatprep.mubr.bf16.mxu0 0
        %1425 = vmatmul.mubr.bf16.gmra.mrb[0].mxu0 %v763
        %v1426 = vpop.f32.mrb[0].mxu0
        %v1427 = vadd.f32 %v501, %v1426
        %v1428 = vpop.f32.mrb[0].mxu0
        %v1429 = vpop.f32.mrb[0].mxu0
        %v1430 = vadd.f32 %v501, %v1429
        %v1431 = vpop.f32.mrb[0].mxu0
        %1432 = vmatprep.mubr.bf16.mxu0 0
        %1433 = vmatmul.mubr.bf16.gmra.mrb[0].mxu0 %v766
        %v1434 = vpop.f32.mrb[0].mxu0
        %v1435 = vadd.f32 %v501, %v1434
        %v1436 = vpop.f32.mrb[0].mxu0
        %v1437 = vpop.f32.mrb[0].mxu0
        %v1438 = vadd.f32 %v501, %v1437
        %v1439 = vpop.f32.mrb[0].mxu0
        %1440 = vdwg.mxu0
        %v1441 = vmax.f32 %v803, 0.0
        %v1442 = vmax.f32 %v806, 0.0
        %v1443 = vmax.f32 %v811, 0.0
        %v1444 = vmax.f32 %v814, 0.0
        %v1445 = vmax.f32 %v819, 0.0
        %v1446 = vmax.f32 %v822, 0.0
        %v1447 = vmax.f32 %v827, 0.0
        %v1448 = vmax.f32 %v830, 0.0
        %v1449 = vmax.f32 %v835, 0.0
        %v1450 = vmax.f32 %v838, 0.0
        %v1451 = vmax.f32 %v843, 0.0
        %v1452 = vmax.f32 %v846, 0.0
        %v1453 = vmax.f32 %v851, 0.0
        %v1454 = vmax.f32 %v854, 0.0
        %v1455 = vmax.f32 %v859, 0.0
        %v1456 = vmax.f32 %v862, 0.0
        %v1457 = vmax.f32 %v867, 0.0
        %v1458 = vmax.f32 %v870, 0.0
        %v1459 = vmax.f32 %v875, 0.0
        %v1460 = vmax.f32 %v878, 0.0
        %v1461 = vmax.f32 %v883, 0.0
        %v1462 = vmax.f32 %v886, 0.0
        %v1463 = vmax.f32 %v891, 0.0
        %v1464 = vmax.f32 %v894, 0.0
        %v1465 = vmax.f32 %v899, 0.0
        %v1466 = vmax.f32 %v902, 0.0
        %v1467 = vmax.f32 %v907, 0.0
        %v1468 = vmax.f32 %v910, 0.0
        %v1469 = vmax.f32 %v915, 0.0
        %v1470 = vmax.f32 %v918, 0.0
        %v1471 = vmax.f32 %v923, 0.0
        %v1472 = vmax.f32 %v926, 0.0
        %v1473 = vmax.f32 %v931, 0.0
        %v1474 = vmax.f32 %v934, 0.0
        %v1475 = vmax.f32 %v939, 0.0
        %v1476 = vmax.f32 %v942, 0.0
        %v1477 = vmax.f32 %v947, 0.0
        %v1478 = vmax.f32 %v950, 0.0
        %v1479 = vmax.f32 %v955, 0.0
        %v1480 = vmax.f32 %v958, 0.0
        %v1481 = vmax.f32 %v963, 0.0
        %v1482 = vmax.f32 %v966, 0.0
        %v1483 = vmax.f32 %v971, 0.0
        %v1484 = vmax.f32 %v974, 0.0
        %v1485 = vmax.f32 %v979, 0.0
        %v1486 = vmax.f32 %v982, 0.0
        %v1487 = vmax.f32 %v987, 0.0
        %v1488 = vmax.f32 %v990, 0.0
        %v1489 = vmax.f32 %v995, 0.0
        %v1490 = vmax.f32 %v998, 0.0
        %v1491 = vmax.f32 %v1003, 0.0
        %v1492 = vmax.f32 %v1006, 0.0
        %v1493 = vmax.f32 %v1011, 0.0
        %v1494 = vmax.f32 %v1014, 0.0
        %v1495 = vmax.f32 %v1019, 0.0
        %v1496 = vmax.f32 %v1022, 0.0
        %v1497 = vmax.f32 %v1027, 0.0
        %v1498 = vmax.f32 %v1030, 0.0
        %v1499 = vmax.f32 %v1035, 0.0
        %v1500 = vmax.f32 %v1038, 0.0
        %v1501 = vmax.f32 %v1043, 0.0
        %v1502 = vmax.f32 %v1046, 0.0
        %v1503 = vmax.f32 %v1051, 0.0
        %v1504 = vmax.f32 %v1054, 0.0
        %v1505 = vmax.f32 %v1059, 0.0
        %v1506 = vmax.f32 %v1062, 0.0
        %v1507 = vmax.f32 %v1067, 0.0
        %v1508 = vmax.f32 %v1070, 0.0
        %v1509 = vmax.f32 %v1075, 0.0
        %v1510 = vmax.f32 %v1078, 0.0
        %v1511 = vmax.f32 %v1083, 0.0
        %v1512 = vmax.f32 %v1086, 0.0
        %v1513 = vmax.f32 %v1091, 0.0
        %v1514 = vmax.f32 %v1094, 0.0
        %v1515 = vmax.f32 %v1099, 0.0
        %v1516 = vmax.f32 %v1102, 0.0
        %v1517 = vmax.f32 %v1107, 0.0
        %v1518 = vmax.f32 %v1110, 0.0
        %v1519 = vmax.f32 %v1115, 0.0
        %v1520 = vmax.f32 %v1118, 0.0
        %v1521 = vmax.f32 %v1123, 0.0
        %v1522 = vmax.f32 %v1126, 0.0
        %v1523 = vmax.f32 %v1131, 0.0
        %v1524 = vmax.f32 %v1134, 0.0
        %v1525 = vmax.f32 %v1139, 0.0
        %v1526 = vmax.f32 %v1142, 0.0
        %v1527 = vmax.f32 %v1147, 0.0
        %v1528 = vmax.f32 %v1150, 0.0
        %v1529 = vmax.f32 %v1155, 0.0
        %v1530 = vmax.f32 %v1158, 0.0
        %v1531 = vmax.f32 %v1163, 0.0
        %v1532 = vmax.f32 %v1166, 0.0
        %v1533 = vmax.f32 %v1171, 0.0
        %v1534 = vmax.f32 %v1174, 0.0
        %v1535 = vmax.f32 %v1179, 0.0
        %v1536 = vmax.f32 %v1182, 0.0
        %v1537 = vmax.f32 %v1187, 0.0
        %v1538 = vmax.f32 %v1190, 0.0
        %v1539 = vmax.f32 %v1195, 0.0
        %v1540 = vmax.f32 %v1198, 0.0
        %v1541 = vmax.f32 %v1203, 0.0
        %v1542 = vmax.f32 %v1206, 0.0
        %v1543 = vmax.f32 %v1211, 0.0
        %v1544 = vmax.f32 %v1214, 0.0
        %v1545 = vmax.f32 %v1219, 0.0
        %v1546 = vmax.f32 %v1222, 0.0
        %v1547 = vmax.f32 %v1227, 0.0
        %v1548 = vmax.f32 %v1230, 0.0
        %v1549 = vmax.f32 %v1235, 0.0
        %v1550 = vmax.f32 %v1238, 0.0
        %v1551 = vmax.f32 %v1243, 0.0
        %v1552 = vmax.f32 %v1246, 0.0
        %v1553 = vmax.f32 %v1251, 0.0
        %v1554 = vmax.f32 %v1254, 0.0
        %v1555 = vmax.f32 %v1259, 0.0
        %v1556 = vmax.f32 %v1262, 0.0
        %v1557 = vmax.f32 %v1267, 0.0
        %v1558 = vmax.f32 %v1270, 0.0
        %v1559 = vmax.f32 %v1275, 0.0
        %v1560 = vmax.f32 %v1278, 0.0
        %v1561 = vmax.f32 %v1283, 0.0
        %v1562 = vmax.f32 %v1286, 0.0
        %v1563 = vmax.f32 %v1291, 0.0
        %v1564 = vmax.f32 %v1294, 0.0
        %v1565 = vmax.f32 %v1299, 0.0
        %v1566 = vmax.f32 %v1302, 0.0
        %v1567 = vmax.f32 %v1307, 0.0
        %v1568 = vmax.f32 %v1310, 0.0
        %v1569 = vmax.f32 %v1315, 0.0
        %v1570 = vmax.f32 %v1318, 0.0
        %v1571 = vmax.f32 %v1323, 0.0
        %v1572 = vmax.f32 %v1326, 0.0
        %v1573 = vmax.f32 %v1331, 0.0
        %v1574 = vmax.f32 %v1334, 0.0
        %v1575 = vmax.f32 %v1339, 0.0
        %v1576 = vmax.f32 %v1342, 0.0
        %v1577 = vmax.f32 %v1347, 0.0
        %v1578 = vmax.f32 %v1350, 0.0
        %v1579 = vmax.f32 %v1355, 0.0
        %v1580 = vmax.f32 %v1358, 0.0
        %v1581 = vmax.f32 %v1363, 0.0
        %v1582 = vmax.f32 %v1366, 0.0
        %v1583 = vmax.f32 %v1371, 0.0
        %v1584 = vmax.f32 %v1374, 0.0
        %v1585 = vmax.f32 %v1379, 0.0
        %v1586 = vmax.f32 %v1382, 0.0
        %v1587 = vmax.f32 %v1387, 0.0
        %v1588 = vmax.f32 %v1390, 0.0
        %v1589 = vmax.f32 %v1395, 0.0
        %v1590 = vmax.f32 %v1398, 0.0
        %v1591 = vmax.f32 %v1403, 0.0
        %v1592 = vmax.f32 %v1406, 0.0
        %v1593 = vmax.f32 %v1411, 0.0
        %v1594 = vmax.f32 %v1414, 0.0
        %v1595 = vmax.f32 %v1419, 0.0
        %v1596 = vmax.f32 %v1422, 0.0
        %v1597 = vmax.f32 %v1427, 0.0
        %v1598 = vmax.f32 %v1430, 0.0
        %v1599 = vmax.f32 %v1435, 0.0
        %v1600 = vmax.f32 %v1438, 0.0
        %v1601 = vld [vmem:[%s3] sm:$0x1]
        %v1603 = vlaneseq
        %v1604 = vshrl.u32 %v1603, 7
        %v1605 = vsub.s32 0, %v1604
        %v1606 = vrot.slane %v1601, %v1605
        %v1608 = vmul.f32 %v1441, %v1606
        %v1609 = vmul.f32 %v1442, %v1606
        %v1610 = vmul.f32 %v1443, %v1606
        %v1611 = vmul.f32 %v1444, %v1606
        %v1612 = vmul.f32 %v1445, %v1606
        %v1613 = vmul.f32 %v1446, %v1606
        %v1614 = vmul.f32 %v1447, %v1606
        %v1615 = vmul.f32 %v1448, %v1606
        %v1616 = vmul.f32 %v1449, %v1606
        %v1617 = vmul.f32 %v1450, %v1606
        %v1618 = vmul.f32 %v1451, %v1606
        %v1619 = vmul.f32 %v1452, %v1606
        %v1620 = vmul.f32 %v1453, %v1606
        %v1621 = vmul.f32 %v1454, %v1606
        %v1622 = vmul.f32 %v1455, %v1606
        %v1623 = vmul.f32 %v1456, %v1606
        %v1624 = vmul.f32 %v1457, %v1606
        %v1625 = vmul.f32 %v1458, %v1606
        %v1626 = vmul.f32 %v1459, %v1606
        %v1627 = vmul.f32 %v1460, %v1606
        %v1628 = vmul.f32 %v1461, %v1606
        %v1629 = vmul.f32 %v1462, %v1606
        %v1630 = vmul.f32 %v1463, %v1606
        %v1631 = vmul.f32 %v1464, %v1606
        %v1632 = vmul.f32 %v1465, %v1606
        %v1633 = vmul.f32 %v1466, %v1606
        %v1634 = vmul.f32 %v1467, %v1606
        %v1635 = vmul.f32 %v1468, %v1606
        %v1636 = vmul.f32 %v1469, %v1606
        %v1637 = vmul.f32 %v1470, %v1606
        %v1638 = vmul.f32 %v1471, %v1606
        %v1639 = vmul.f32 %v1472, %v1606
        %v1640 = vmul.f32 %v1473, %v1606
        %v1641 = vmul.f32 %v1474, %v1606
        %v1642 = vmul.f32 %v1475, %v1606
        %v1643 = vmul.f32 %v1476, %v1606
        %v1644 = vmul.f32 %v1477, %v1606
        %v1645 = vmul.f32 %v1478, %v1606
        %v1646 = vmul.f32 %v1479, %v1606
        %v1647 = vmul.f32 %v1480, %v1606
        %v1648 = vmul.f32 %v1481, %v1606
        %v1649 = vmul.f32 %v1482, %v1606
        %v1650 = vmul.f32 %v1483, %v1606
        %v1651 = vmul.f32 %v1484, %v1606
        %v1652 = vmul.f32 %v1485, %v1606
        %v1653 = vmul.f32 %v1486, %v1606
        %v1654 = vmul.f32 %v1487, %v1606
        %v1655 = vmul.f32 %v1488, %v1606
        %v1656 = vmul.f32 %v1489, %v1606
        %v1657 = vmul.f32 %v1490, %v1606
        %v1658 = vmul.f32 %v1491, %v1606
        %v1659 = vmul.f32 %v1492, %v1606
        %v1660 = vmul.f32 %v1493, %v1606
        %v1661 = vmul.f32 %v1494, %v1606
        %v1662 = vmul.f32 %v1495, %v1606
        %v1663 = vmul.f32 %v1496, %v1606
        %v1664 = vmul.f32 %v1497, %v1606
        %v1665 = vmul.f32 %v1498, %v1606
        %v1666 = vmul.f32 %v1499, %v1606
        %v1667 = vmul.f32 %v1500, %v1606
        %v1668 = vmul.f32 %v1501, %v1606
        %v1669 = vmul.f32 %v1502, %v1606
        %v1670 = vmul.f32 %v1503, %v1606
        %v1671 = vmul.f32 %v1504, %v1606
        %v1672 = vmul.f32 %v1505, %v1606
        %v1673 = vmul.f32 %v1506, %v1606
        %v1674 = vmul.f32 %v1507, %v1606
        %v1675 = vmul.f32 %v1508, %v1606
        %v1676 = vmul.f32 %v1509, %v1606
        %v1677 = vmul.f32 %v1510, %v1606
        %v1678 = vmul.f32 %v1511, %v1606
        %v1679 = vmul.f32 %v1512, %v1606
        %v1680 = vmul.f32 %v1513, %v1606
        %v1681 = vmul.f32 %v1514, %v1606
        %v1682 = vmul.f32 %v1515, %v1606
        %v1683 = vmul.f32 %v1516, %v1606
        %v1684 = vmul.f32 %v1517, %v1606
        %v1685 = vmul.f32 %v1518, %v1606
        %v1686 = vmul.f32 %v1519, %v1606
        %v1687 = vmul.f32 %v1520, %v1606
        %v1688 = vmul.f32 %v1521, %v1606
        %v1689 = vmul.f32 %v1522, %v1606
        %v1690 = vmul.f32 %v1523, %v1606
        %v1691 = vmul.f32 %v1524, %v1606
        %v1692 = vmul.f32 %v1525, %v1606
        %v1693 = vmul.f32 %v1526, %v1606
        %v1694 = vmul.f32 %v1527, %v1606
        %v1695 = vmul.f32 %v1528, %v1606
        %v1696 = vmul.f32 %v1529, %v1606
        %v1697 = vmul.f32 %v1530, %v1606
        %v1698 = vmul.f32 %v1531, %v1606
        %v1699 = vmul.f32 %v1532, %v1606
        %v1700 = vmul.f32 %v1533, %v1606
        %v1701 = vmul.f32 %v1534, %v1606
        %v1702 = vmul.f32 %v1535, %v1606
        %v1703 = vmul.f32 %v1536, %v1606
        %v1704 = vmul.f32 %v1537, %v1606
        %v1705 = vmul.f32 %v1538, %v1606
        %v1706 = vmul.f32 %v1539, %v1606
        %v1707 = vmul.f32 %v1540, %v1606
        %v1708 = vmul.f32 %v1541, %v1606
        %v1709 = vmul.f32 %v1542, %v1606
        %v1710 = vmul.f32 %v1543, %v1606
        %v1711 = vmul.f32 %v1544, %v1606
        %v1712 = vmul.f32 %v1545, %v1606
        %v1713 = vmul.f32 %v1546, %v1606
        %v1714 = vmul.f32 %v1547, %v1606
        %v1715 = vmul.f32 %v1548, %v1606
        %v1716 = vmul.f32 %v1549, %v1606
        %v1717 = vmul.f32 %v1550, %v1606
        %v1718 = vmul.f32 %v1551, %v1606
        %v1719 = vmul.f32 %v1552, %v1606
        %v1720 = vmul.f32 %v1553, %v1606
        %v1721 = vmul.f32 %v1554, %v1606
        %v1722 = vmul.f32 %v1555, %v1606
        %v1723 = vmul.f32 %v1556, %v1606
        %v1724 = vmul.f32 %v1557, %v1606
        %v1725 = vmul.f32 %v1558, %v1606
        %v1726 = vmul.f32 %v1559, %v1606
        %v1727 = vmul.f32 %v1560, %v1606
        %v1728 = vmul.f32 %v1561, %v1606
        %v1729 = vmul.f32 %v1562, %v1606
        %v1730 = vmul.f32 %v1563, %v1606
        %v1731 = vmul.f32 %v1564, %v1606
        %v1732 = vmul.f32 %v1565, %v1606
        %v1733 = vmul.f32 %v1566, %v1606
        %v1734 = vmul.f32 %v1567, %v1606
        %v1735 = vmul.f32 %v1568, %v1606
        %v1736 = vmul.f32 %v1569, %v1606
        %v1737 = vmul.f32 %v1570, %v1606
        %v1738 = vmul.f32 %v1571, %v1606
        %v1739 = vmul.f32 %v1572, %v1606
        %v1740 = vmul.f32 %v1573, %v1606
        %v1741 = vmul.f32 %v1574, %v1606
        %v1742 = vmul.f32 %v1575, %v1606
        %v1743 = vmul.f32 %v1576, %v1606
        %v1744 = vmul.f32 %v1577, %v1606
        %v1745 = vmul.f32 %v1578, %v1606
        %v1746 = vmul.f32 %v1579, %v1606
        %v1747 = vmul.f32 %v1580, %v1606
        %v1748 = vmul.f32 %v1581, %v1606
        %v1749 = vmul.f32 %v1582, %v1606
        %v1750 = vmul.f32 %v1583, %v1606
        %v1751 = vmul.f32 %v1584, %v1606
        %v1752 = vmul.f32 %v1585, %v1606
        %v1753 = vmul.f32 %v1586, %v1606
        %v1754 = vmul.f32 %v1587, %v1606
        %v1755 = vmul.f32 %v1588, %v1606
        %v1756 = vmul.f32 %v1589, %v1606
        %v1757 = vmul.f32 %v1590, %v1606
        %v1758 = vmul.f32 %v1591, %v1606
        %v1759 = vmul.f32 %v1592, %v1606
        %v1760 = vmul.f32 %v1593, %v1606
        %v1761 = vmul.f32 %v1594, %v1606
        %v1762 = vmul.f32 %v1595, %v1606
        %v1763 = vmul.f32 %v1596, %v1606
        %v1764 = vmul.f32 %v1597, %v1606
        %v1765 = vmul.f32 %v1598, %v1606
        %v1766 = vmul.f32 %v1599, %v1606
        %v1767 = vmul.f32 %v1600, %v1606
        %vm1768 = vcmask 261120
        %v1769 = vsel %vm1768, %v1608, 0.0
        %1770 = vadd.xlane.f32.xlu0 %v1769
        %v1771 = vpop.xlane.xlu0 %1770
        %v1772 = vsel %vm1768, %v1609, 0.0
        %1773 = vadd.xlane.f32.xlu0 %v1772
        %v1774 = vpop.xlane.xlu0 %1773
        %v1775 = vsel %vm1768, %v1610, 0.0
        %1776 = vadd.xlane.f32.xlu0 %v1775
        %v1777 = vpop.xlane.xlu0 %1776
        %v1778 = vsel %vm1768, %v1611, 0.0
        %1779 = vadd.xlane.f32.xlu0 %v1778
        %v1780 = vpop.xlane.xlu0 %1779
        %v1781 = vsel %vm1768, %v1612, 0.0
        %1782 = vadd.xlane.f32.xlu0 %v1781
        %v1783 = vpop.xlane.xlu0 %1782
        %v1784 = vsel %vm1768, %v1613, 0.0
        %1785 = vadd.xlane.f32.xlu0 %v1784
        %v1786 = vpop.xlane.xlu0 %1785
        %v1787 = vsel %vm1768, %v1614, 0.0
        %1788 = vadd.xlane.f32.xlu0 %v1787
        %v1789 = vpop.xlane.xlu0 %1788
        %v1790 = vsel %vm1768, %v1615, 0.0
        %1791 = vadd.xlane.f32.xlu0 %v1790
        %v1792 = vpop.xlane.xlu0 %1791
        %v1793 = vsel %vm1768, %v1616, 0.0
        %1794 = vadd.xlane.f32.xlu0 %v1793
        %v1795 = vpop.xlane.xlu0 %1794
        %v1796 = vsel %vm1768, %v1617, 0.0
        %1797 = vadd.xlane.f32.xlu0 %v1796
        %v1798 = vpop.xlane.xlu0 %1797
        %v1799 = vsel %vm1768, %v1618, 0.0
        %1800 = vadd.xlane.f32.xlu0 %v1799
        %v1801 = vpop.xlane.xlu0 %1800
        %v1802 = vsel %vm1768, %v1619, 0.0
        %1803 = vadd.xlane.f32.xlu0 %v1802
        %v1804 = vpop.xlane.xlu0 %1803
        %v1805 = vsel %vm1768, %v1620, 0.0
        %1806 = vadd.xlane.f32.xlu0 %v1805
        %v1807 = vpop.xlane.xlu0 %1806
        %v1808 = vsel %vm1768, %v1621, 0.0
        %1809 = vadd.xlane.f32.xlu0 %v1808
        %v1810 = vpop.xlane.xlu0 %1809
        %v1811 = vsel %vm1768, %v1622, 0.0
        %1812 = vadd.xlane.f32.xlu0 %v1811
        %v1813 = vpop.xlane.xlu0 %1812
        %v1814 = vsel %vm1768, %v1623, 0.0
        %1815 = vadd.xlane.f32.xlu0 %v1814
        %v1816 = vpop.xlane.xlu0 %1815
        %v1817 = vsel %vm1768, %v1624, 0.0
        %1818 = vadd.xlane.f32.xlu0 %v1817
        %v1819 = vpop.xlane.xlu0 %1818
        %v1820 = vsel %vm1768, %v1625, 0.0
        %1821 = vadd.xlane.f32.xlu0 %v1820
        %v1822 = vpop.xlane.xlu0 %1821
        %v1823 = vsel %vm1768, %v1626, 0.0
        %1824 = vadd.xlane.f32.xlu0 %v1823
        %v1825 = vpop.xlane.xlu0 %1824
        %v1826 = vsel %vm1768, %v1627, 0.0
        %1827 = vadd.xlane.f32.xlu0 %v1826
        %v1828 = vpop.xlane.xlu0 %1827
        %v1829 = vsel %vm1768, %v1628, 0.0
        %1830 = vadd.xlane.f32.xlu0 %v1829
        %v1831 = vpop.xlane.xlu0 %1830
        %v1832 = vsel %vm1768, %v1629, 0.0
        %1833 = vadd.xlane.f32.xlu0 %v1832
        %v1834 = vpop.xlane.xlu0 %1833
        %v1835 = vsel %vm1768, %v1630, 0.0
        %1836 = vadd.xlane.f32.xlu0 %v1835
        %v1837 = vpop.xlane.xlu0 %1836
        %v1838 = vsel %vm1768, %v1631, 0.0
        %1839 = vadd.xlane.f32.xlu0 %v1838
        %v1840 = vpop.xlane.xlu0 %1839
        %v1841 = vsel %vm1768, %v1632, 0.0
        %1842 = vadd.xlane.f32.xlu0 %v1841
        %v1843 = vpop.xlane.xlu0 %1842
        %v1844 = vsel %vm1768, %v1633, 0.0
        %1845 = vadd.xlane.f32.xlu0 %v1844
        %v1846 = vpop.xlane.xlu0 %1845
        %v1847 = vsel %vm1768, %v1634, 0.0
        %1848 = vadd.xlane.f32.xlu0 %v1847
        %v1849 = vpop.xlane.xlu0 %1848
        %v1850 = vsel %vm1768, %v1635, 0.0
        %1851 = vadd.xlane.f32.xlu0 %v1850
        %v1852 = vpop.xlane.xlu0 %1851
        %v1853 = vsel %vm1768, %v1636, 0.0
        %1854 = vadd.xlane.f32.xlu0 %v1853
        %v1855 = vpop.xlane.xlu0 %1854
        %v1856 = vsel %vm1768, %v1637, 0.0
        %1857 = vadd.xlane.f32.xlu0 %v1856
        %v1858 = vpop.xlane.xlu0 %1857
        %v1859 = vsel %vm1768, %v1638, 0.0
        %1860 = vadd.xlane.f32.xlu0 %v1859
        %v1861 = vpop.xlane.xlu0 %1860
        %v1862 = vsel %vm1768, %v1639, 0.0
        %1863 = vadd.xlane.f32.xlu0 %v1862
        %v1864 = vpop.xlane.xlu0 %1863
        %v1865 = vsel %vm1768, %v1640, 0.0
        %1866 = vadd.xlane.f32.xlu0 %v1865
        %v1867 = vpop.xlane.xlu0 %1866
        %v1868 = vsel %vm1768, %v1641, 0.0
        %1869 = vadd.xlane.f32.xlu0 %v1868
        %v1870 = vpop.xlane.xlu0 %1869
        %v1871 = vsel %vm1768, %v1642, 0.0
        %1872 = vadd.xlane.f32.xlu0 %v1871
        %v1873 = vpop.xlane.xlu0 %1872
        %v1874 = vsel %vm1768, %v1643, 0.0
        %1875 = vadd.xlane.f32.xlu0 %v1874
        %v1876 = vpop.xlane.xlu0 %1875
        %v1877 = vsel %vm1768, %v1644, 0.0
        %1878 = vadd.xlane.f32.xlu0 %v1877
        %v1879 = vpop.xlane.xlu0 %1878
        %v1880 = vsel %vm1768, %v1645, 0.0
        %1881 = vadd.xlane.f32.xlu0 %v1880
        %v1882 = vpop.xlane.xlu0 %1881
        %v1883 = vsel %vm1768, %v1646, 0.0
        %1884 = vadd.xlane.f32.xlu0 %v1883
        %v1885 = vpop.xlane.xlu0 %1884
        %v1886 = vsel %vm1768, %v1647, 0.0
        %1887 = vadd.xlane.f32.xlu0 %v1886
        %v1888 = vpop.xlane.xlu0 %1887
        %v1889 = vsel %vm1768, %v1648, 0.0
        %1890 = vadd.xlane.f32.xlu0 %v1889
        %v1891 = vpop.xlane.xlu0 %1890
        %v1892 = vsel %vm1768, %v1649, 0.0
        %1893 = vadd.xlane.f32.xlu0 %v1892
        %v1894 = vpop.xlane.xlu0 %1893
        %v1895 = vsel %vm1768, %v1650, 0.0
        %1896 = vadd.xlane.f32.xlu0 %v1895
        %v1897 = vpop.xlane.xlu0 %1896
        %v1898 = vsel %vm1768, %v1651, 0.0
        %1899 = vadd.xlane.f32.xlu0 %v1898
        %v1900 = vpop.xlane.xlu0 %1899
        %v1901 = vsel %vm1768, %v1652, 0.0
        %1902 = vadd.xlane.f32.xlu0 %v1901
        %v1903 = vpop.xlane.xlu0 %1902
        %v1904 = vsel %vm1768, %v1653, 0.0
        %1905 = vadd.xlane.f32.xlu0 %v1904
        %v1906 = vpop.xlane.xlu0 %1905
        %v1907 = vsel %vm1768, %v1654, 0.0
        %1908 = vadd.xlane.f32.xlu0 %v1907
        %v1909 = vpop.xlane.xlu0 %1908
        %v1910 = vsel %vm1768, %v1655, 0.0
        %1911 = vadd.xlane.f32.xlu0 %v1910
        %v1912 = vpop.xlane.xlu0 %1911
        %v1913 = vsel %vm1768, %v1656, 0.0
        %1914 = vadd.xlane.f32.xlu0 %v1913
        %v1915 = vpop.xlane.xlu0 %1914
        %v1916 = vsel %vm1768, %v1657, 0.0
        %1917 = vadd.xlane.f32.xlu0 %v1916
        %v1918 = vpop.xlane.xlu0 %1917
        %v1919 = vsel %vm1768, %v1658, 0.0
        %1920 = vadd.xlane.f32.xlu0 %v1919
        %v1921 = vpop.xlane.xlu0 %1920
        %v1922 = vsel %vm1768, %v1659, 0.0
        %1923 = vadd.xlane.f32.xlu0 %v1922
        %v1924 = vpop.xlane.xlu0 %1923
        %v1925 = vsel %vm1768, %v1660, 0.0
        %1926 = vadd.xlane.f32.xlu0 %v1925
        %v1927 = vpop.xlane.xlu0 %1926
        %v1928 = vsel %vm1768, %v1661, 0.0
        %1929 = vadd.xlane.f32.xlu0 %v1928
        %v1930 = vpop.xlane.xlu0 %1929
        %v1931 = vsel %vm1768, %v1662, 0.0
        %1932 = vadd.xlane.f32.xlu0 %v1931
        %v1933 = vpop.xlane.xlu0 %1932
        %v1934 = vsel %vm1768, %v1663, 0.0
        %1935 = vadd.xlane.f32.xlu0 %v1934
        %v1936 = vpop.xlane.xlu0 %1935
        %v1937 = vsel %vm1768, %v1664, 0.0
        %1938 = vadd.xlane.f32.xlu0 %v1937
        %v1939 = vpop.xlane.xlu0 %1938
        %v1940 = vsel %vm1768, %v1665, 0.0
        %1941 = vadd.xlane.f32.xlu0 %v1940
        %v1942 = vpop.xlane.xlu0 %1941
        %v1943 = vsel %vm1768, %v1666, 0.0
        %1944 = vadd.xlane.f32.xlu0 %v1943
        %v1945 = vpop.xlane.xlu0 %1944
        %v1946 = vsel %vm1768, %v1667, 0.0
        %1947 = vadd.xlane.f32.xlu0 %v1946
        %v1948 = vpop.xlane.xlu0 %1947
        %v1949 = vsel %vm1768, %v1668, 0.0
        %1950 = vadd.xlane.f32.xlu0 %v1949
        %v1951 = vpop.xlane.xlu0 %1950
        %v1952 = vsel %vm1768, %v1669, 0.0
        %1953 = vadd.xlane.f32.xlu0 %v1952
        %v1954 = vpop.xlane.xlu0 %1953
        %v1955 = vsel %vm1768, %v1670, 0.0
        %1956 = vadd.xlane.f32.xlu0 %v1955
        %v1957 = vpop.xlane.xlu0 %1956
        %v1958 = vsel %vm1768, %v1671, 0.0
        %1959 = vadd.xlane.f32.xlu0 %v1958
        %v1960 = vpop.xlane.xlu0 %1959
        %v1961 = vsel %vm1768, %v1672, 0.0
        %1962 = vadd.xlane.f32.xlu0 %v1961
        %v1963 = vpop.xlane.xlu0 %1962
        %v1964 = vsel %vm1768, %v1673, 0.0
        %1965 = vadd.xlane.f32.xlu0 %v1964
        %v1966 = vpop.xlane.xlu0 %1965
        %v1967 = vsel %vm1768, %v1674, 0.0
        %1968 = vadd.xlane.f32.xlu0 %v1967
        %v1969 = vpop.xlane.xlu0 %1968
        %v1970 = vsel %vm1768, %v1675, 0.0
        %1971 = vadd.xlane.f32.xlu0 %v1970
        %v1972 = vpop.xlane.xlu0 %1971
        %v1973 = vsel %vm1768, %v1676, 0.0
        %1974 = vadd.xlane.f32.xlu0 %v1973
        %v1975 = vpop.xlane.xlu0 %1974
        %v1976 = vsel %vm1768, %v1677, 0.0
        %1977 = vadd.xlane.f32.xlu0 %v1976
        %v1978 = vpop.xlane.xlu0 %1977
        %v1979 = vsel %vm1768, %v1678, 0.0
        %1980 = vadd.xlane.f32.xlu0 %v1979
        %v1981 = vpop.xlane.xlu0 %1980
        %v1982 = vsel %vm1768, %v1679, 0.0
        %1983 = vadd.xlane.f32.xlu0 %v1982
        %v1984 = vpop.xlane.xlu0 %1983
        %v1985 = vsel %vm1768, %v1680, 0.0
        %1986 = vadd.xlane.f32.xlu0 %v1985
        %v1987 = vpop.xlane.xlu0 %1986
        %v1988 = vsel %vm1768, %v1681, 0.0
        %1989 = vadd.xlane.f32.xlu0 %v1988
        %v1990 = vpop.xlane.xlu0 %1989
        %v1991 = vsel %vm1768, %v1682, 0.0
        %1992 = vadd.xlane.f32.xlu0 %v1991
        %v1993 = vpop.xlane.xlu0 %1992
        %v1994 = vsel %vm1768, %v1683, 0.0
        %1995 = vadd.xlane.f32.xlu0 %v1994
        %v1996 = vpop.xlane.xlu0 %1995
        %v1997 = vsel %vm1768, %v1684, 0.0
        %1998 = vadd.xlane.f32.xlu0 %v1997
        %v1999 = vpop.xlane.xlu0 %1998
        %v2000 = vsel %vm1768, %v1685, 0.0
        %2001 = vadd.xlane.f32.xlu0 %v2000
        %v2002 = vpop.xlane.xlu0 %2001
        %v2003 = vsel %vm1768, %v1686, 0.0
        %2004 = vadd.xlane.f32.xlu0 %v2003
        %v2005 = vpop.xlane.xlu0 %2004
        %v2006 = vsel %vm1768, %v1687, 0.0
        %2007 = vadd.xlane.f32.xlu0 %v2006
        %v2008 = vpop.xlane.xlu0 %2007
        %v2009 = vsel %vm1768, %v1688, 0.0
        %2010 = vadd.xlane.f32.xlu0 %v2009
        %v2011 = vpop.xlane.xlu0 %2010
        %v2012 = vsel %vm1768, %v1689, 0.0
        %2013 = vadd.xlane.f32.xlu0 %v2012
        %v2014 = vpop.xlane.xlu0 %2013
        %v2015 = vsel %vm1768, %v1690, 0.0
        %2016 = vadd.xlane.f32.xlu0 %v2015
        %v2017 = vpop.xlane.xlu0 %2016
        %v2018 = vsel %vm1768, %v1691, 0.0
        %2019 = vadd.xlane.f32.xlu0 %v2018
        %v2020 = vpop.xlane.xlu0 %2019
        %v2021 = vsel %vm1768, %v1692, 0.0
        %2022 = vadd.xlane.f32.xlu0 %v2021
        %v2023 = vpop.xlane.xlu0 %2022
        %v2024 = vsel %vm1768, %v1693, 0.0
        %2025 = vadd.xlane.f32.xlu0 %v2024
        %v2026 = vpop.xlane.xlu0 %2025
        %v2027 = vsel %vm1768, %v1694, 0.0
        %2028 = vadd.xlane.f32.xlu0 %v2027
        %v2029 = vpop.xlane.xlu0 %2028
        %v2030 = vsel %vm1768, %v1695, 0.0
        %2031 = vadd.xlane.f32.xlu0 %v2030
        %v2032 = vpop.xlane.xlu0 %2031
        %v2033 = vsel %vm1768, %v1696, 0.0
        %2034 = vadd.xlane.f32.xlu0 %v2033
        %v2035 = vpop.xlane.xlu0 %2034
        %v2036 = vsel %vm1768, %v1697, 0.0
        %2037 = vadd.xlane.f32.xlu0 %v2036
        %v2038 = vpop.xlane.xlu0 %2037
        %v2039 = vsel %vm1768, %v1698, 0.0
        %2040 = vadd.xlane.f32.xlu0 %v2039
        %v2041 = vpop.xlane.xlu0 %2040
        %v2042 = vsel %vm1768, %v1699, 0.0
        %2043 = vadd.xlane.f32.xlu0 %v2042
        %v2044 = vpop.xlane.xlu0 %2043
        %v2045 = vsel %vm1768, %v1700, 0.0
        %2046 = vadd.xlane.f32.xlu0 %v2045
        %v2047 = vpop.xlane.xlu0 %2046
        %v2048 = vsel %vm1768, %v1701, 0.0
        %2049 = vadd.xlane.f32.xlu0 %v2048
        %v2050 = vpop.xlane.xlu0 %2049
        %v2051 = vsel %vm1768, %v1702, 0.0
        %2052 = vadd.xlane.f32.xlu0 %v2051
        %v2053 = vpop.xlane.xlu0 %2052
        %v2054 = vsel %vm1768, %v1703, 0.0
        %2055 = vadd.xlane.f32.xlu0 %v2054
        %v2056 = vpop.xlane.xlu0 %2055
        %v2057 = vsel %vm1768, %v1704, 0.0
        %2058 = vadd.xlane.f32.xlu0 %v2057
        %v2059 = vpop.xlane.xlu0 %2058
        %v2060 = vsel %vm1768, %v1705, 0.0
        %2061 = vadd.xlane.f32.xlu0 %v2060
        %v2062 = vpop.xlane.xlu0 %2061
        %v2063 = vsel %vm1768, %v1706, 0.0
        %2064 = vadd.xlane.f32.xlu0 %v2063
        %v2065 = vpop.xlane.xlu0 %2064
        %v2066 = vsel %vm1768, %v1707, 0.0
        %2067 = vadd.xlane.f32.xlu0 %v2066
        %v2068 = vpop.xlane.xlu0 %2067
        %v2069 = vsel %vm1768, %v1708, 0.0
        %2070 = vadd.xlane.f32.xlu0 %v2069
        %v2071 = vpop.xlane.xlu0 %2070
        %v2072 = vsel %vm1768, %v1709, 0.0
        %2073 = vadd.xlane.f32.xlu0 %v2072
        %v2074 = vpop.xlane.xlu0 %2073
        %v2075 = vsel %vm1768, %v1710, 0.0
        %2076 = vadd.xlane.f32.xlu0 %v2075
        %v2077 = vpop.xlane.xlu0 %2076
        %v2078 = vsel %vm1768, %v1711, 0.0
        %2079 = vadd.xlane.f32.xlu0 %v2078
        %v2080 = vpop.xlane.xlu0 %2079
        %v2081 = vsel %vm1768, %v1712, 0.0
        %2082 = vadd.xlane.f32.xlu0 %v2081
        %v2083 = vpop.xlane.xlu0 %2082
        %v2084 = vsel %vm1768, %v1713, 0.0
        %2085 = vadd.xlane.f32.xlu0 %v2084
        %v2086 = vpop.xlane.xlu0 %2085
        %v2087 = vsel %vm1768, %v1714, 0.0
        %2088 = vadd.xlane.f32.xlu0 %v2087
        %v2089 = vpop.xlane.xlu0 %2088
        %v2090 = vsel %vm1768, %v1715, 0.0
        %2091 = vadd.xlane.f32.xlu0 %v2090
        %v2092 = vpop.xlane.xlu0 %2091
        %v2093 = vsel %vm1768, %v1716, 0.0
        %2094 = vadd.xlane.f32.xlu0 %v2093
        %v2095 = vpop.xlane.xlu0 %2094
        %v2096 = vsel %vm1768, %v1717, 0.0
        %2097 = vadd.xlane.f32.xlu0 %v2096
        %v2098 = vpop.xlane.xlu0 %2097
        %v2099 = vsel %vm1768, %v1718, 0.0
        %2100 = vadd.xlane.f32.xlu0 %v2099
        %v2101 = vpop.xlane.xlu0 %2100
        %v2102 = vsel %vm1768, %v1719, 0.0
        %2103 = vadd.xlane.f32.xlu0 %v2102
        %v2104 = vpop.xlane.xlu0 %2103
        %v2105 = vsel %vm1768, %v1720, 0.0
        %2106 = vadd.xlane.f32.xlu0 %v2105
        %v2107 = vpop.xlane.xlu0 %2106
        %v2108 = vsel %vm1768, %v1721, 0.0
        %2109 = vadd.xlane.f32.xlu0 %v2108
        %v2110 = vpop.xlane.xlu0 %2109
        %v2111 = vsel %vm1768, %v1722, 0.0
        %2112 = vadd.xlane.f32.xlu0 %v2111
        %v2113 = vpop.xlane.xlu0 %2112
        %v2114 = vsel %vm1768, %v1723, 0.0
        %2115 = vadd.xlane.f32.xlu0 %v2114
        %v2116 = vpop.xlane.xlu0 %2115
        %v2117 = vsel %vm1768, %v1724, 0.0
        %2118 = vadd.xlane.f32.xlu0 %v2117
        %v2119 = vpop.xlane.xlu0 %2118
        %v2120 = vsel %vm1768, %v1725, 0.0
        %2121 = vadd.xlane.f32.xlu0 %v2120
        %v2122 = vpop.xlane.xlu0 %2121
        %v2123 = vsel %vm1768, %v1726, 0.0
        %2124 = vadd.xlane.f32.xlu0 %v2123
        %v2125 = vpop.xlane.xlu0 %2124
        %v2126 = vsel %vm1768, %v1727, 0.0
        %2127 = vadd.xlane.f32.xlu0 %v2126
        %v2128 = vpop.xlane.xlu0 %2127
        %v2129 = vsel %vm1768, %v1728, 0.0
        %2130 = vadd.xlane.f32.xlu0 %v2129
        %v2131 = vpop.xlane.xlu0 %2130
        %v2132 = vsel %vm1768, %v1729, 0.0
        %2133 = vadd.xlane.f32.xlu0 %v2132
        %v2134 = vpop.xlane.xlu0 %2133
        %v2135 = vsel %vm1768, %v1730, 0.0
        %2136 = vadd.xlane.f32.xlu0 %v2135
        %v2137 = vpop.xlane.xlu0 %2136
        %v2138 = vsel %vm1768, %v1731, 0.0
        %2139 = vadd.xlane.f32.xlu0 %v2138
        %v2140 = vpop.xlane.xlu0 %2139
        %v2141 = vsel %vm1768, %v1732, 0.0
        %2142 = vadd.xlane.f32.xlu0 %v2141
        %v2143 = vpop.xlane.xlu0 %2142
        %v2144 = vsel %vm1768, %v1733, 0.0
        %2145 = vadd.xlane.f32.xlu0 %v2144
        %v2146 = vpop.xlane.xlu0 %2145
        %v2147 = vsel %vm1768, %v1734, 0.0
        %2148 = vadd.xlane.f32.xlu0 %v2147
        %v2149 = vpop.xlane.xlu0 %2148
        %v2150 = vsel %vm1768, %v1735, 0.0
        %2151 = vadd.xlane.f32.xlu0 %v2150
        %v2152 = vpop.xlane.xlu0 %2151
        %v2153 = vsel %vm1768, %v1736, 0.0
        %2154 = vadd.xlane.f32.xlu0 %v2153
        %v2155 = vpop.xlane.xlu0 %2154
        %v2156 = vsel %vm1768, %v1737, 0.0
        %2157 = vadd.xlane.f32.xlu0 %v2156
        %v2158 = vpop.xlane.xlu0 %2157
        %v2159 = vsel %vm1768, %v1738, 0.0
        %2160 = vadd.xlane.f32.xlu0 %v2159
        %v2161 = vpop.xlane.xlu0 %2160
        %v2162 = vsel %vm1768, %v1739, 0.0
        %2163 = vadd.xlane.f32.xlu0 %v2162
        %v2164 = vpop.xlane.xlu0 %2163
        %v2165 = vsel %vm1768, %v1740, 0.0
        %2166 = vadd.xlane.f32.xlu0 %v2165
        %v2167 = vpop.xlane.xlu0 %2166
        %v2168 = vsel %vm1768, %v1741, 0.0
        %2169 = vadd.xlane.f32.xlu0 %v2168
        %v2170 = vpop.xlane.xlu0 %2169
        %v2171 = vsel %vm1768, %v1742, 0.0
        %2172 = vadd.xlane.f32.xlu0 %v2171
        %v2173 = vpop.xlane.xlu0 %2172
        %v2174 = vsel %vm1768, %v1743, 0.0
        %2175 = vadd.xlane.f32.xlu0 %v2174
        %v2176 = vpop.xlane.xlu0 %2175
        %v2177 = vsel %vm1768, %v1744, 0.0
        %2178 = vadd.xlane.f32.xlu0 %v2177
        %v2179 = vpop.xlane.xlu0 %2178
        %v2180 = vsel %vm1768, %v1745, 0.0
        %2181 = vadd.xlane.f32.xlu0 %v2180
        %v2182 = vpop.xlane.xlu0 %2181
        %v2183 = vsel %vm1768, %v1746, 0.0
        %2184 = vadd.xlane.f32.xlu0 %v2183
        %v2185 = vpop.xlane.xlu0 %2184
        %v2186 = vsel %vm1768, %v1747, 0.0
        %2187 = vadd.xlane.f32.xlu0 %v2186
        %v2188 = vpop.xlane.xlu0 %2187
        %v2189 = vsel %vm1768, %v1748, 0.0
        %2190 = vadd.xlane.f32.xlu0 %v2189
        %v2191 = vpop.xlane.xlu0 %2190
        %v2192 = vsel %vm1768, %v1749, 0.0
        %2193 = vadd.xlane.f32.xlu0 %v2192
        %v2194 = vpop.xlane.xlu0 %2193
        %v2195 = vsel %vm1768, %v1750, 0.0
        %2196 = vadd.xlane.f32.xlu0 %v2195
        %v2197 = vpop.xlane.xlu0 %2196
        %v2198 = vsel %vm1768, %v1751, 0.0
        %2199 = vadd.xlane.f32.xlu0 %v2198
        %v2200 = vpop.xlane.xlu0 %2199
        %v2201 = vsel %vm1768, %v1752, 0.0
        %2202 = vadd.xlane.f32.xlu0 %v2201
        %v2203 = vpop.xlane.xlu0 %2202
        %v2204 = vsel %vm1768, %v1753, 0.0
        %2205 = vadd.xlane.f32.xlu0 %v2204
        %v2206 = vpop.xlane.xlu0 %2205
        %v2207 = vsel %vm1768, %v1754, 0.0
        %2208 = vadd.xlane.f32.xlu0 %v2207
        %v2209 = vpop.xlane.xlu0 %2208
        %v2210 = vsel %vm1768, %v1755, 0.0
        %2211 = vadd.xlane.f32.xlu0 %v2210
        %v2212 = vpop.xlane.xlu0 %2211
        %v2213 = vsel %vm1768, %v1756, 0.0
        %2214 = vadd.xlane.f32.xlu0 %v2213
        %v2215 = vpop.xlane.xlu0 %2214
        %v2216 = vsel %vm1768, %v1757, 0.0
        %2217 = vadd.xlane.f32.xlu0 %v2216
        %v2218 = vpop.xlane.xlu0 %2217
        %v2219 = vsel %vm1768, %v1758, 0.0
        %2220 = vadd.xlane.f32.xlu0 %v2219
        %v2221 = vpop.xlane.xlu0 %2220
        %v2222 = vsel %vm1768, %v1759, 0.0
        %2223 = vadd.xlane.f32.xlu0 %v2222
        %v2224 = vpop.xlane.xlu0 %2223
        %v2225 = vsel %vm1768, %v1760, 0.0
        %2226 = vadd.xlane.f32.xlu0 %v2225
        %v2227 = vpop.xlane.xlu0 %2226
        %v2228 = vsel %vm1768, %v1761, 0.0
        %2229 = vadd.xlane.f32.xlu0 %v2228
        %v2230 = vpop.xlane.xlu0 %2229
        %v2231 = vsel %vm1768, %v1762, 0.0
        %2232 = vadd.xlane.f32.xlu0 %v2231
        %v2233 = vpop.xlane.xlu0 %2232
        %v2234 = vsel %vm1768, %v1763, 0.0
        %2235 = vadd.xlane.f32.xlu0 %v2234
        %v2236 = vpop.xlane.xlu0 %2235
        %v2237 = vsel %vm1768, %v1764, 0.0
        %2238 = vadd.xlane.f32.xlu0 %v2237
        %v2239 = vpop.xlane.xlu0 %2238
        %v2240 = vsel %vm1768, %v1765, 0.0
        %2241 = vadd.xlane.f32.xlu0 %v2240
        %v2242 = vpop.xlane.xlu0 %2241
        %v2243 = vsel %vm1768, %v1766, 0.0
        %2244 = vadd.xlane.f32.xlu0 %v2243
        %v2245 = vpop.xlane.xlu0 %2244
        %v2246 = vsel %vm1768, %v1767, 0.0
        %2247 = vadd.xlane.f32.xlu0 %v2246
        %v2248 = vpop.xlane.xlu0 %2247
        %s2249 = sld [smem:[#allocation2]]
        %v2250 = vstv %s2249
        %v2251 = vadd.f32 %v1771, %v2250
        %v2252 = vadd.f32 %v1774, %v2250
        %v2253 = vadd.f32 %v1777, %v2250
        %v2254 = vadd.f32 %v1780, %v2250
        %v2255 = vadd.f32 %v1783, %v2250
        %v2256 = vadd.f32 %v1786, %v2250
        %v2257 = vadd.f32 %v1789, %v2250
        %v2258 = vadd.f32 %v1792, %v2250
        %v2259 = vadd.f32 %v1795, %v2250
        %v2260 = vadd.f32 %v1798, %v2250
        %v2261 = vadd.f32 %v1801, %v2250
        %v2262 = vadd.f32 %v1804, %v2250
        %v2263 = vadd.f32 %v1807, %v2250
        %v2264 = vadd.f32 %v1810, %v2250
        %v2265 = vadd.f32 %v1813, %v2250
        %v2266 = vadd.f32 %v1816, %v2250
        %v2267 = vadd.f32 %v1819, %v2250
        %v2268 = vadd.f32 %v1822, %v2250
        %v2269 = vadd.f32 %v1825, %v2250
        %v2270 = vadd.f32 %v1828, %v2250
        %v2271 = vadd.f32 %v1831, %v2250
        %v2272 = vadd.f32 %v1834, %v2250
        %v2273 = vadd.f32 %v1837, %v2250
        %v2274 = vadd.f32 %v1840, %v2250
        %v2275 = vadd.f32 %v1843, %v2250
        %v2276 = vadd.f32 %v1846, %v2250
        %v2277 = vadd.f32 %v1849, %v2250
        %v2278 = vadd.f32 %v1852, %v2250
        %v2279 = vadd.f32 %v1855, %v2250
        %v2280 = vadd.f32 %v1858, %v2250
        %v2281 = vadd.f32 %v1861, %v2250
        %v2282 = vadd.f32 %v1864, %v2250
        %v2283 = vadd.f32 %v1867, %v2250
        %v2284 = vadd.f32 %v1870, %v2250
        %v2285 = vadd.f32 %v1873, %v2250
        %v2286 = vadd.f32 %v1876, %v2250
        %v2287 = vadd.f32 %v1879, %v2250
        %v2288 = vadd.f32 %v1882, %v2250
        %v2289 = vadd.f32 %v1885, %v2250
        %v2290 = vadd.f32 %v1888, %v2250
        %v2291 = vadd.f32 %v1891, %v2250
        %v2292 = vadd.f32 %v1894, %v2250
        %v2293 = vadd.f32 %v1897, %v2250
        %v2294 = vadd.f32 %v1900, %v2250
        %v2295 = vadd.f32 %v1903, %v2250
        %v2296 = vadd.f32 %v1906, %v2250
        %v2297 = vadd.f32 %v1909, %v2250
        %v2298 = vadd.f32 %v1912, %v2250
        %v2299 = vadd.f32 %v1915, %v2250
        %v2300 = vadd.f32 %v1918, %v2250
        %v2301 = vadd.f32 %v1921, %v2250
        %v2302 = vadd.f32 %v1924, %v2250
        %v2303 = vadd.f32 %v1927, %v2250
        %v2304 = vadd.f32 %v1930, %v2250
        %v2305 = vadd.f32 %v1933, %v2250
        %v2306 = vadd.f32 %v1936, %v2250
        %v2307 = vadd.f32 %v1939, %v2250
        %v2308 = vadd.f32 %v1942, %v2250
        %v2309 = vadd.f32 %v1945, %v2250
        %v2310 = vadd.f32 %v1948, %v2250
        %v2311 = vadd.f32 %v1951, %v2250
        %v2312 = vadd.f32 %v1954, %v2250
        %v2313 = vadd.f32 %v1957, %v2250
        %v2314 = vadd.f32 %v1960, %v2250
        %v2315 = vadd.f32 %v1963, %v2250
        %v2316 = vadd.f32 %v1966, %v2250
        %v2317 = vadd.f32 %v1969, %v2250
        %v2318 = vadd.f32 %v1972, %v2250
        %v2319 = vadd.f32 %v1975, %v2250
        %v2320 = vadd.f32 %v1978, %v2250
        %v2321 = vadd.f32 %v1981, %v2250
        %v2322 = vadd.f32 %v1984, %v2250
        %v2323 = vadd.f32 %v1987, %v2250
        %v2324 = vadd.f32 %v1990, %v2250
        %v2325 = vadd.f32 %v1993, %v2250
        %v2326 = vadd.f32 %v1996, %v2250
        %v2327 = vadd.f32 %v1999, %v2250
        %v2328 = vadd.f32 %v2002, %v2250
        %v2329 = vadd.f32 %v2005, %v2250
        %v2330 = vadd.f32 %v2008, %v2250
        %v2331 = vadd.f32 %v2011, %v2250
        %v2332 = vadd.f32 %v2014, %v2250
        %v2333 = vadd.f32 %v2017, %v2250
        %v2334 = vadd.f32 %v2020, %v2250
        %v2335 = vadd.f32 %v2023, %v2250
        %v2336 = vadd.f32 %v2026, %v2250
        %v2337 = vadd.f32 %v2029, %v2250
        %v2338 = vadd.f32 %v2032, %v2250
        %v2339 = vadd.f32 %v2035, %v2250
        %v2340 = vadd.f32 %v2038, %v2250
        %v2341 = vadd.f32 %v2041, %v2250
        %v2342 = vadd.f32 %v2044, %v2250
        %v2343 = vadd.f32 %v2047, %v2250
        %v2344 = vadd.f32 %v2050, %v2250
        %v2345 = vadd.f32 %v2053, %v2250
        %v2346 = vadd.f32 %v2056, %v2250
        %v2347 = vadd.f32 %v2059, %v2250
        %v2348 = vadd.f32 %v2062, %v2250
        %v2349 = vadd.f32 %v2065, %v2250
        %v2350 = vadd.f32 %v2068, %v2250
        %v2351 = vadd.f32 %v2071, %v2250
        %v2352 = vadd.f32 %v2074, %v2250
        %v2353 = vadd.f32 %v2077, %v2250
        %v2354 = vadd.f32 %v2080, %v2250
        %v2355 = vadd.f32 %v2083, %v2250
        %v2356 = vadd.f32 %v2086, %v2250
        %v2357 = vadd.f32 %v2089, %v2250
        %v2358 = vadd.f32 %v2092, %v2250
        %v2359 = vadd.f32 %v2095, %v2250
        %v2360 = vadd.f32 %v2098, %v2250
        %v2361 = vadd.f32 %v2101, %v2250
        %v2362 = vadd.f32 %v2104, %v2250
        %v2363 = vadd.f32 %v2107, %v2250
        %v2364 = vadd.f32 %v2110, %v2250
        %v2365 = vadd.f32 %v2113, %v2250
        %v2366 = vadd.f32 %v2116, %v2250
        %v2367 = vadd.f32 %v2119, %v2250
        %v2368 = vadd.f32 %v2122, %v2250
        %v2369 = vadd.f32 %v2125, %v2250
        %v2370 = vadd.f32 %v2128, %v2250
        %v2371 = vadd.f32 %v2131, %v2250
        %v2372 = vadd.f32 %v2134, %v2250
        %v2373 = vadd.f32 %v2137, %v2250
        %v2374 = vadd.f32 %v2140, %v2250
        %v2375 = vadd.f32 %v2143, %v2250
        %v2376 = vadd.f32 %v2146, %v2250
        %v2377 = vadd.f32 %v2149, %v2250
        %v2378 = vadd.f32 %v2152, %v2250
        %v2379 = vadd.f32 %v2155, %v2250
        %v2380 = vadd.f32 %v2158, %v2250
        %v2381 = vadd.f32 %v2161, %v2250
        %v2382 = vadd.f32 %v2164, %v2250
        %v2383 = vadd.f32 %v2167, %v2250
        %v2384 = vadd.f32 %v2170, %v2250
        %v2385 = vadd.f32 %v2173, %v2250
        %v2386 = vadd.f32 %v2176, %v2250
        %v2387 = vadd.f32 %v2179, %v2250
        %v2388 = vadd.f32 %v2182, %v2250
        %v2389 = vadd.f32 %v2185, %v2250
        %v2390 = vadd.f32 %v2188, %v2250
        %v2391 = vadd.f32 %v2191, %v2250
        %v2392 = vadd.f32 %v2194, %v2250
        %v2393 = vadd.f32 %v2197, %v2250
        %v2394 = vadd.f32 %v2200, %v2250
        %v2395 = vadd.f32 %v2203, %v2250
        %v2396 = vadd.f32 %v2206, %v2250
        %v2397 = vadd.f32 %v2209, %v2250
        %v2398 = vadd.f32 %v2212, %v2250
        %v2399 = vadd.f32 %v2215, %v2250
        %v2400 = vadd.f32 %v2218, %v2250
        %v2401 = vadd.f32 %v2221, %v2250
        %v2402 = vadd.f32 %v2224, %v2250
        %v2403 = vadd.f32 %v2227, %v2250
        %v2404 = vadd.f32 %v2230, %v2250
        %v2405 = vadd.f32 %v2233, %v2250
        %v2406 = vadd.f32 %v2236, %v2250
        %v2407 = vadd.f32 %v2239, %v2250
        %v2408 = vadd.f32 %v2242, %v2250
        %v2409 = vadd.f32 %v2245, %v2250
        %v2410 = vadd.f32 %v2248, %v2250
        %v2411 = vsub.f32 0.0, %v2251
        %v2412 = vsub.f32 0.0, %v2252
        %v2413 = vsub.f32 0.0, %v2253
        %v2414 = vsub.f32 0.0, %v2254
        %v2415 = vsub.f32 0.0, %v2255
        %v2416 = vsub.f32 0.0, %v2256
        %v2417 = vsub.f32 0.0, %v2257
        %v2418 = vsub.f32 0.0, %v2258
        %v2419 = vsub.f32 0.0, %v2259
        %v2420 = vsub.f32 0.0, %v2260
        %v2421 = vsub.f32 0.0, %v2261
        %v2422 = vsub.f32 0.0, %v2262
        %v2423 = vsub.f32 0.0, %v2263
        %v2424 = vsub.f32 0.0, %v2264
        %v2425 = vsub.f32 0.0, %v2265
        %v2426 = vsub.f32 0.0, %v2266
        %v2427 = vsub.f32 0.0, %v2267
        %v2428 = vsub.f32 0.0, %v2268
        %v2429 = vsub.f32 0.0, %v2269
        %v2430 = vsub.f32 0.0, %v2270
        %v2431 = vsub.f32 0.0, %v2271
        %v2432 = vsub.f32 0.0, %v2272
        %v2433 = vsub.f32 0.0, %v2273
        %v2434 = vsub.f32 0.0, %v2274
        %v2435 = vsub.f32 0.0, %v2275
        %v2436 = vsub.f32 0.0, %v2276
        %v2437 = vsub.f32 0.0, %v2277
        %v2438 = vsub.f32 0.0, %v2278
        %v2439 = vsub.f32 0.0, %v2279
        %v2440 = vsub.f32 0.0, %v2280
        %v2441 = vsub.f32 0.0, %v2281
        %v2442 = vsub.f32 0.0, %v2282
        %v2443 = vsub.f32 0.0, %v2283
        %v2444 = vsub.f32 0.0, %v2284
        %v2445 = vsub.f32 0.0, %v2285
        %v2446 = vsub.f32 0.0, %v2286
        %v2447 = vsub.f32 0.0, %v2287
        %v2448 = vsub.f32 0.0, %v2288
        %v2449 = vsub.f32 0.0, %v2289
        %v2450 = vsub.f32 0.0, %v2290
        %v2451 = vsub.f32 0.0, %v2291
        %v2452 = vsub.f32 0.0, %v2292
        %v2453 = vsub.f32 0.0, %v2293
        %v2454 = vsub.f32 0.0, %v2294
        %v2455 = vsub.f32 0.0, %v2295
        %v2456 = vsub.f32 0.0, %v2296
        %v2457 = vsub.f32 0.0, %v2297
        %v2458 = vsub.f32 0.0, %v2298
        %v2459 = vsub.f32 0.0, %v2299
        %v2460 = vsub.f32 0.0, %v2300
        %v2461 = vsub.f32 0.0, %v2301
        %v2462 = vsub.f32 0.0, %v2302
        %v2463 = vsub.f32 0.0, %v2303
        %v2464 = vsub.f32 0.0, %v2304
        %v2465 = vsub.f32 0.0, %v2305
        %v2466 = vsub.f32 0.0, %v2306
        %v2467 = vsub.f32 0.0, %v2307
        %v2468 = vsub.f32 0.0, %v2308
        %v2469 = vsub.f32 0.0, %v2309
        %v2470 = vsub.f32 0.0, %v2310
        %v2471 = vsub.f32 0.0, %v2311
        %v2472 = vsub.f32 0.0, %v2312
        %v2473 = vsub.f32 0.0, %v2313
        %v2474 = vsub.f32 0.0, %v2314
        %v2475 = vsub.f32 0.0, %v2315
        %v2476 = vsub.f32 0.0, %v2316
        %v2477 = vsub.f32 0.0, %v2317
        %v2478 = vsub.f32 0.0, %v2318
        %v2479 = vsub.f32 0.0, %v2319
        %v2480 = vsub.f32 0.0, %v2320
        %v2481 = vsub.f32 0.0, %v2321
        %v2482 = vsub.f32 0.0, %v2322
        %v2483 = vsub.f32 0.0, %v2323
        %v2484 = vsub.f32 0.0, %v2324
        %v2485 = vsub.f32 0.0, %v2325
        %v2486 = vsub.f32 0.0, %v2326
        %v2487 = vsub.f32 0.0, %v2327
        %v2488 = vsub.f32 0.0, %v2328
        %v2489 = vsub.f32 0.0, %v2329
        %v2490 = vsub.f32 0.0, %v2330
        %v2491 = vsub.f32 0.0, %v2331
        %v2492 = vsub.f32 0.0, %v2332
        %v2493 = vsub.f32 0.0, %v2333
        %v2494 = vsub.f32 0.0, %v2334
        %v2495 = vsub.f32 0.0, %v2335
        %v2496 = vsub.f32 0.0, %v2336
        %v2497 = vsub.f32 0.0, %v2337
        %v2498 = vsub.f32 0.0, %v2338
        %v2499 = vsub.f32 0.0, %v2339
        %v2500 = vsub.f32 0.0, %v2340
        %v2501 = vsub.f32 0.0, %v2341
        %v2502 = vsub.f32 0.0, %v2342
        %v2503 = vsub.f32 0.0, %v2343
        %v2504 = vsub.f32 0.0, %v2344
        %v2505 = vsub.f32 0.0, %v2345
        %v2506 = vsub.f32 0.0, %v2346
        %v2507 = vsub.f32 0.0, %v2347
        %v2508 = vsub.f32 0.0, %v2348
        %v2509 = vsub.f32 0.0, %v2349
        %v2510 = vsub.f32 0.0, %v2350
        %v2511 = vsub.f32 0.0, %v2351
        %v2512 = vsub.f32 0.0, %v2352
        %v2513 = vsub.f32 0.0, %v2353
        %v2514 = vsub.f32 0.0, %v2354
        %v2515 = vsub.f32 0.0, %v2355
        %v2516 = vsub.f32 0.0, %v2356
        %v2517 = vsub.f32 0.0, %v2357
        %v2518 = vsub.f32 0.0, %v2358
        %v2519 = vsub.f32 0.0, %v2359
        %v2520 = vsub.f32 0.0, %v2360
        %v2521 = vsub.f32 0.0, %v2361
        %v2522 = vsub.f32 0.0, %v2362
        %v2523 = vsub.f32 0.0, %v2363
        %v2524 = vsub.f32 0.0, %v2364
        %v2525 = vsub.f32 0.0, %v2365
        %v2526 = vsub.f32 0.0, %v2366
        %v2527 = vsub.f32 0.0, %v2367
        %v2528 = vsub.f32 0.0, %v2368
        %v2529 = vsub.f32 0.0, %v2369
        %v2530 = vsub.f32 0.0, %v2370
        %v2531 = vsub.f32 0.0, %v2371
        %v2532 = vsub.f32 0.0, %v2372
        %v2533 = vsub.f32 0.0, %v2373
        %v2534 = vsub.f32 0.0, %v2374
        %v2535 = vsub.f32 0.0, %v2375
        %v2536 = vsub.f32 0.0, %v2376
        %v2537 = vsub.f32 0.0, %v2377
        %v2538 = vsub.f32 0.0, %v2378
        %v2539 = vsub.f32 0.0, %v2379
        %v2540 = vsub.f32 0.0, %v2380
        %v2541 = vsub.f32 0.0, %v2381
        %v2542 = vsub.f32 0.0, %v2382
        %v2543 = vsub.f32 0.0, %v2383
        %v2544 = vsub.f32 0.0, %v2384
        %v2545 = vsub.f32 0.0, %v2385
        %v2546 = vsub.f32 0.0, %v2386
        %v2547 = vsub.f32 0.0, %v2387
        %v2548 = vsub.f32 0.0, %v2388
        %v2549 = vsub.f32 0.0, %v2389
        %v2550 = vsub.f32 0.0, %v2390
        %v2551 = vsub.f32 0.0, %v2391
        %v2552 = vsub.f32 0.0, %v2392
        %v2553 = vsub.f32 0.0, %v2393
        %v2554 = vsub.f32 0.0, %v2394
        %v2555 = vsub.f32 0.0, %v2395
        %v2556 = vsub.f32 0.0, %v2396
        %v2557 = vsub.f32 0.0, %v2397
        %v2558 = vsub.f32 0.0, %v2398
        %v2559 = vsub.f32 0.0, %v2399
        %v2560 = vsub.f32 0.0, %v2400
        %v2561 = vsub.f32 0.0, %v2401
        %v2562 = vsub.f32 0.0, %v2402
        %v2563 = vsub.f32 0.0, %v2403
        %v2564 = vsub.f32 0.0, %v2404
        %v2565 = vsub.f32 0.0, %v2405
        %v2566 = vsub.f32 0.0, %v2406
        %v2567 = vsub.f32 0.0, %v2407
        %v2568 = vsub.f32 0.0, %v2408
        %v2569 = vsub.f32 0.0, %v2409
        %v2570 = vsub.f32 0.0, %v2410
        %v2571 = vmul.f32 %v2411, 1.442695
        %v2572 = vpow.pop %v2571
        %v2573 = vmul.f32 %v2412, 1.442695
        %v2574 = vpow.pop %v2573
        %v2575 = vmul.f32 %v2413, 1.442695
        %v2576 = vpow.pop %v2575
        %v2577 = vmul.f32 %v2414, 1.442695
        %v2578 = vpow.pop %v2577
        %v2579 = vmul.f32 %v2415, 1.442695
        %v2580 = vpow.pop %v2579
        %v2581 = vmul.f32 %v2416, 1.442695
        %v2582 = vpow.pop %v2581
        %v2583 = vmul.f32 %v2417, 1.442695
        %v2584 = vpow.pop %v2583
        %v2585 = vmul.f32 %v2418, 1.442695
        %v2586 = vpow.pop %v2585
        %v2587 = vmul.f32 %v2419, 1.442695
        %v2588 = vpow.pop %v2587
        %v2589 = vmul.f32 %v2420, 1.442695
        %v2590 = vpow.pop %v2589
        %v2591 = vmul.f32 %v2421, 1.442695
        %v2592 = vpow.pop %v2591
        %v2593 = vmul.f32 %v2422, 1.442695
        %v2594 = vpow.pop %v2593
        %v2595 = vmul.f32 %v2423, 1.442695
        %v2596 = vpow.pop %v2595
        %v2597 = vmul.f32 %v2424, 1.442695
        %v2598 = vpow.pop %v2597
        %v2599 = vmul.f32 %v2425, 1.442695
        %v2600 = vpow.pop %v2599
        %v2601 = vmul.f32 %v2426, 1.442695
        %v2602 = vpow.pop %v2601
        %v2603 = vmul.f32 %v2427, 1.442695
        %v2604 = vpow.pop %v2603
        %v2605 = vmul.f32 %v2428, 1.442695
        %v2606 = vpow.pop %v2605
        %v2607 = vmul.f32 %v2429, 1.442695
        %v2608 = vpow.pop %v2607
        %v2609 = vmul.f32 %v2430, 1.442695
        %v2610 = vpow.pop %v2609
        %v2611 = vmul.f32 %v2431, 1.442695
        %v2612 = vpow.pop %v2611
        %v2613 = vmul.f32 %v2432, 1.442695
        %v2614 = vpow.pop %v2613
        %v2615 = vmul.f32 %v2433, 1.442695
        %v2616 = vpow.pop %v2615
        %v2617 = vmul.f32 %v2434, 1.442695
        %v2618 = vpow.pop %v2617
        %v2619 = vmul.f32 %v2435, 1.442695
        %v2620 = vpow.pop %v2619
        %v2621 = vmul.f32 %v2436, 1.442695
        %v2622 = vpow.pop %v2621
        %v2623 = vmul.f32 %v2437, 1.442695
        %v2624 = vpow.pop %v2623
        %v2625 = vmul.f32 %v2438, 1.442695
        %v2626 = vpow.pop %v2625
        %v2627 = vmul.f32 %v2439, 1.442695
        %v2628 = vpow.pop %v2627
        %v2629 = vmul.f32 %v2440, 1.442695
        %v2630 = vpow.pop %v2629
        %v2631 = vmul.f32 %v2441, 1.442695
        %v2632 = vpow.pop %v2631
        %v2633 = vmul.f32 %v2442, 1.442695
        %v2634 = vpow.pop %v2633
        %v2635 = vmul.f32 %v2443, 1.442695
        %v2636 = vpow.pop %v2635
        %v2637 = vmul.f32 %v2444, 1.442695
        %v2638 = vpow.pop %v2637
        %v2639 = vmul.f32 %v2445, 1.442695
        %v2640 = vpow.pop %v2639
        %v2641 = vmul.f32 %v2446, 1.442695
        %v2642 = vpow.pop %v2641
        %v2643 = vmul.f32 %v2447, 1.442695
        %v2644 = vpow.pop %v2643
        %v2645 = vmul.f32 %v2448, 1.442695
        %v2646 = vpow.pop %v2645
        %v2647 = vmul.f32 %v2449, 1.442695
        %v2648 = vpow.pop %v2647
        %v2649 = vmul.f32 %v2450, 1.442695
        %v2650 = vpow.pop %v2649
        %v2651 = vmul.f32 %v2451, 1.442695
        %v2652 = vpow.pop %v2651
        %v2653 = vmul.f32 %v2452, 1.442695
        %v2654 = vpow.pop %v2653
        %v2655 = vmul.f32 %v2453, 1.442695
        %v2656 = vpow.pop %v2655
        %v2657 = vmul.f32 %v2454, 1.442695
        %v2658 = vpow.pop %v2657
        %v2659 = vmul.f32 %v2455, 1.442695
        %v2660 = vpow.pop %v2659
        %v2661 = vmul.f32 %v2456, 1.442695
        %v2662 = vpow.pop %v2661
        %v2663 = vmul.f32 %v2457, 1.442695
        %v2664 = vpow.pop %v2663
        %v2665 = vmul.f32 %v2458, 1.442695
        %v2666 = vpow.pop %v2665
        %v2667 = vmul.f32 %v2459, 1.442695
        %v2668 = vpow.pop %v2667
        %v2669 = vmul.f32 %v2460, 1.442695
        %v2670 = vpow.pop %v2669
        %v2671 = vmul.f32 %v2461, 1.442695
        %v2672 = vpow.pop %v2671
        %v2673 = vmul.f32 %v2462, 1.442695
        %v2674 = vpow.pop %v2673
        %v2675 = vmul.f32 %v2463, 1.442695
        %v2676 = vpow.pop %v2675
        %v2677 = vmul.f32 %v2464, 1.442695
        %v2678 = vpow.pop %v2677
        %v2679 = vmul.f32 %v2465, 1.442695
        %v2680 = vpow.pop %v2679
        %v2681 = vmul.f32 %v2466, 1.442695
        %v2682 = vpow.pop %v2681
        %v2683 = vmul.f32 %v2467, 1.442695
        %v2684 = vpow.pop %v2683
        %v2685 = vmul.f32 %v2468, 1.442695
        %v2686 = vpow.pop %v2685
        %v2687 = vmul.f32 %v2469, 1.442695
        %v2688 = vpow.pop %v2687
        %v2689 = vmul.f32 %v2470, 1.442695
        %v2690 = vpow.pop %v2689
        %v2691 = vmul.f32 %v2471, 1.442695
        %v2692 = vpow.pop %v2691
        %v2693 = vmul.f32 %v2472, 1.442695
        %v2694 = vpow.pop %v2693
        %v2695 = vmul.f32 %v2473, 1.442695
        %v2696 = vpow.pop %v2695
        %v2697 = vmul.f32 %v2474, 1.442695
        %v2698 = vpow.pop %v2697
        %v2699 = vmul.f32 %v2475, 1.442695
        %v2700 = vpow.pop %v2699
        %v2701 = vmul.f32 %v2476, 1.442695
        %v2702 = vpow.pop %v2701
        %v2703 = vmul.f32 %v2477, 1.442695
        %v2704 = vpow.pop %v2703
        %v2705 = vmul.f32 %v2478, 1.442695
        %v2706 = vpow.pop %v2705
        %v2707 = vmul.f32 %v2479, 1.442695
        %v2708 = vpow.pop %v2707
        %v2709 = vmul.f32 %v2480, 1.442695
        %v2710 = vpow.pop %v2709
        %v2711 = vmul.f32 %v2481, 1.442695
        %v2712 = vpow.pop %v2711
        %v2713 = vmul.f32 %v2482, 1.442695
        %v2714 = vpow.pop %v2713
        %v2715 = vmul.f32 %v2483, 1.442695
        %v2716 = vpow.pop %v2715
        %v2717 = vmul.f32 %v2484, 1.442695
        %v2718 = vpow.pop %v2717
        %v2719 = vmul.f32 %v2485, 1.442695
        %v2720 = vpow.pop %v2719
        %v2721 = vmul.f32 %v2486, 1.442695
        %v2722 = vpow.pop %v2721
        %v2723 = vmul.f32 %v2487, 1.442695
        %v2724 = vpow.pop %v2723
        %v2725 = vmul.f32 %v2488, 1.442695
        %v2726 = vpow.pop %v2725
        %v2727 = vmul.f32 %v2489, 1.442695
        %v2728 = vpow.pop %v2727
        %v2729 = vmul.f32 %v2490, 1.442695
        %v2730 = vpow.pop %v2729
        %v2731 = vmul.f32 %v2491, 1.442695
        %v2732 = vpow.pop %v2731
        %v2733 = vmul.f32 %v2492, 1.442695
        %v2734 = vpow.pop %v2733
        %v2735 = vmul.f32 %v2493, 1.442695
        %v2736 = vpow.pop %v2735
        %v2737 = vmul.f32 %v2494, 1.442695
        %v2738 = vpow.pop %v2737
        %v2739 = vmul.f32 %v2495, 1.442695
        %v2740 = vpow.pop %v2739
        %v2741 = vmul.f32 %v2496, 1.442695
        %v2742 = vpow.pop %v2741
        %v2743 = vmul.f32 %v2497, 1.442695
        %v2744 = vpow.pop %v2743
        %v2745 = vmul.f32 %v2498, 1.442695
        %v2746 = vpow.pop %v2745
        %v2747 = vmul.f32 %v2499, 1.442695
        %v2748 = vpow.pop %v2747
        %v2749 = vmul.f32 %v2500, 1.442695
        %v2750 = vpow.pop %v2749
        %v2751 = vmul.f32 %v2501, 1.442695
        %v2752 = vpow.pop %v2751
        %v2753 = vmul.f32 %v2502, 1.442695
        %v2754 = vpow.pop %v2753
        %v2755 = vmul.f32 %v2503, 1.442695
        %v2756 = vpow.pop %v2755
        %v2757 = vmul.f32 %v2504, 1.442695
        %v2758 = vpow.pop %v2757
        %v2759 = vmul.f32 %v2505, 1.442695
        %v2760 = vpow.pop %v2759
        %v2761 = vmul.f32 %v2506, 1.442695
        %v2762 = vpow.pop %v2761
        %v2763 = vmul.f32 %v2507, 1.442695
        %v2764 = vpow.pop %v2763
        %v2765 = vmul.f32 %v2508, 1.442695
        %v2766 = vpow.pop %v2765
        %v2767 = vmul.f32 %v2509, 1.442695
        %v2768 = vpow.pop %v2767
        %v2769 = vmul.f32 %v2510, 1.442695
        %v2770 = vpow.pop %v2769
        %v2771 = vmul.f32 %v2511, 1.442695
        %v2772 = vpow.pop %v2771
        %v2773 = vmul.f32 %v2512, 1.442695
        %v2774 = vpow.pop %v2773
        %v2775 = vmul.f32 %v2513, 1.442695
        %v2776 = vpow.pop %v2775
        %v2777 = vmul.f32 %v2514, 1.442695
        %v2778 = vpow.pop %v2777
        %v2779 = vmul.f32 %v2515, 1.442695
        %v2780 = vpow.pop %v2779
        %v2781 = vmul.f32 %v2516, 1.442695
        %v2782 = vpow.pop %v2781
        %v2783 = vmul.f32 %v2517, 1.442695
        %v2784 = vpow.pop %v2783
        %v2785 = vmul.f32 %v2518, 1.442695
        %v2786 = vpow.pop %v2785
        %v2787 = vmul.f32 %v2519, 1.442695
        %v2788 = vpow.pop %v2787
        %v2789 = vmul.f32 %v2520, 1.442695
        %v2790 = vpow.pop %v2789
        %v2791 = vmul.f32 %v2521, 1.442695
        %v2792 = vpow.pop %v2791
        %v2793 = vmul.f32 %v2522, 1.442695
        %v2794 = vpow.pop %v2793
        %v2795 = vmul.f32 %v2523, 1.442695
        %v2796 = vpow.pop %v2795
        %v2797 = vmul.f32 %v2524, 1.442695
        %v2798 = vpow.pop %v2797
        %v2799 = vmul.f32 %v2525, 1.442695
        %v2800 = vpow.pop %v2799
        %v2801 = vmul.f32 %v2526, 1.442695
        %v2802 = vpow.pop %v2801
        %v2803 = vmul.f32 %v2527, 1.442695
        %v2804 = vpow.pop %v2803
        %v2805 = vmul.f32 %v2528, 1.442695
        %v2806 = vpow.pop %v2805
        %v2807 = vmul.f32 %v2529, 1.442695
        %v2808 = vpow.pop %v2807
        %v2809 = vmul.f32 %v2530, 1.442695
        %v2810 = vpow.pop %v2809
        %v2811 = vmul.f32 %v2531, 1.442695
        %v2812 = vpow.pop %v2811
        %v2813 = vmul.f32 %v2532, 1.442695
        %v2814 = vpow.pop %v2813
        %v2815 = vmul.f32 %v2533, 1.442695
        %v2816 = vpow.pop %v2815
        %v2817 = vmul.f32 %v2534, 1.442695
        %v2818 = vpow.pop %v2817
        %v2819 = vmul.f32 %v2535, 1.442695
        %v2820 = vpow.pop %v2819
        %v2821 = vmul.f32 %v2536, 1.442695
        %v2822 = vpow.pop %v2821
        %v2823 = vmul.f32 %v2537, 1.442695
        %v2824 = vpow.pop %v2823
        %v2825 = vmul.f32 %v2538, 1.442695
        %v2826 = vpow.pop %v2825
        %v2827 = vmul.f32 %v2539, 1.442695
        %v2828 = vpow.pop %v2827
        %v2829 = vmul.f32 %v2540, 1.442695
        %v2830 = vpow.pop %v2829
        %v2831 = vmul.f32 %v2541, 1.442695
        %v2832 = vpow.pop %v2831
        %v2833 = vmul.f32 %v2542, 1.442695
        %v2834 = vpow.pop %v2833
        %v2835 = vmul.f32 %v2543, 1.442695
        %v2836 = vpow.pop %v2835
        %v2837 = vmul.f32 %v2544, 1.442695
        %v2838 = vpow.pop %v2837
        %v2839 = vmul.f32 %v2545, 1.442695
        %v2840 = vpow.pop %v2839
        %v2841 = vmul.f32 %v2546, 1.442695
        %v2842 = vpow.pop %v2841
        %v2843 = vmul.f32 %v2547, 1.442695
        %v2844 = vpow.pop %v2843
        %v2845 = vmul.f32 %v2548, 1.442695
        %v2846 = vpow.pop %v2845
        %v2847 = vmul.f32 %v2549, 1.442695
        %v2848 = vpow.pop %v2847
        %v2849 = vmul.f32 %v2550, 1.442695
        %v2850 = vpow.pop %v2849
        %v2851 = vmul.f32 %v2551, 1.442695
        %v2852 = vpow.pop %v2851
        %v2853 = vmul.f32 %v2552, 1.442695
        %v2854 = vpow.pop %v2853
        %v2855 = vmul.f32 %v2553, 1.442695
        %v2856 = vpow.pop %v2855
        %v2857 = vmul.f32 %v2554, 1.442695
        %v2858 = vpow.pop %v2857
        %v2859 = vmul.f32 %v2555, 1.442695
        %v2860 = vpow.pop %v2859
        %v2861 = vmul.f32 %v2556, 1.442695
        %v2862 = vpow.pop %v2861
        %v2863 = vmul.f32 %v2557, 1.442695
        %v2864 = vpow.pop %v2863
        %v2865 = vmul.f32 %v2558, 1.442695
        %v2866 = vpow.pop %v2865
        %v2867 = vmul.f32 %v2559, 1.442695
        %v2868 = vpow.pop %v2867
        %v2869 = vmul.f32 %v2560, 1.442695
        %v2870 = vpow.pop %v2869
        %v2871 = vmul.f32 %v2561, 1.442695
        %v2872 = vpow.pop %v2871
        %v2873 = vmul.f32 %v2562, 1.442695
        %v2874 = vpow.pop %v2873
        %v2875 = vmul.f32 %v2563, 1.442695
        %v2876 = vpow.pop %v2875
        %v2877 = vmul.f32 %v2564, 1.442695
        %v2878 = vpow.pop %v2877
        %v2879 = vmul.f32 %v2565, 1.442695
        %v2880 = vpow.pop %v2879
        %v2881 = vmul.f32 %v2566, 1.442695
        %v2882 = vpow.pop %v2881
        %v2883 = vmul.f32 %v2567, 1.442695
        %v2884 = vpow.pop %v2883
        %v2885 = vmul.f32 %v2568, 1.442695
        %v2886 = vpow.pop %v2885
        %v2887 = vmul.f32 %v2569, 1.442695
        %v2888 = vpow.pop %v2887
        %v2889 = vmul.f32 %v2570, 1.442695
        %v2890 = vpow.pop %v2889
        %v2891 = vadd.f32 %v2572, 1.0
        %v2892 = vadd.f32 %v2574, 1.0
        %v2893 = vadd.f32 %v2576, 1.0
        %v2894 = vadd.f32 %v2578, 1.0
        %v2895 = vadd.f32 %v2580, 1.0
        %v2896 = vadd.f32 %v2582, 1.0
        %v2897 = vadd.f32 %v2584, 1.0
        %v2898 = vadd.f32 %v2586, 1.0
        %v2899 = vadd.f32 %v2588, 1.0
        %v2900 = vadd.f32 %v2590, 1.0
        %v2901 = vadd.f32 %v2592, 1.0
        %v2902 = vadd.f32 %v2594, 1.0
        %v2903 = vadd.f32 %v2596, 1.0
        %v2904 = vadd.f32 %v2598, 1.0
        %v2905 = vadd.f32 %v2600, 1.0
        %v2906 = vadd.f32 %v2602, 1.0
        %v2907 = vadd.f32 %v2604, 1.0
        %v2908 = vadd.f32 %v2606, 1.0
        %v2909 = vadd.f32 %v2608, 1.0
        %v2910 = vadd.f32 %v2610, 1.0
        %v2911 = vadd.f32 %v2612, 1.0
        %v2912 = vadd.f32 %v2614, 1.0
        %v2913 = vadd.f32 %v2616, 1.0
        %v2914 = vadd.f32 %v2618, 1.0
        %v2915 = vadd.f32 %v2620, 1.0
        %v2916 = vadd.f32 %v2622, 1.0
        %v2917 = vadd.f32 %v2624, 1.0
        %v2918 = vadd.f32 %v2626, 1.0
        %v2919 = vadd.f32 %v2628, 1.0
        %v2920 = vadd.f32 %v2630, 1.0
        %v2921 = vadd.f32 %v2632, 1.0
        %v2922 = vadd.f32 %v2634, 1.0
        %v2923 = vadd.f32 %v2636, 1.0
        %v2924 = vadd.f32 %v2638, 1.0
        %v2925 = vadd.f32 %v2640, 1.0
        %v2926 = vadd.f32 %v2642, 1.0
        %v2927 = vadd.f32 %v2644, 1.0
        %v2928 = vadd.f32 %v2646, 1.0
        %v2929 = vadd.f32 %v2648, 1.0
        %v2930 = vadd.f32 %v2650, 1.0
        %v2931 = vadd.f32 %v2652, 1.0
        %v2932 = vadd.f32 %v2654, 1.0
        %v2933 = vadd.f32 %v2656, 1.0
        %v2934 = vadd.f32 %v2658, 1.0
        %v2935 = vadd.f32 %v2660, 1.0
        %v2936 = vadd.f32 %v2662, 1.0
        %v2937 = vadd.f32 %v2664, 1.0
        %v2938 = vadd.f32 %v2666, 1.0
        %v2939 = vadd.f32 %v2668, 1.0
        %v2940 = vadd.f32 %v2670, 1.0
        %v2941 = vadd.f32 %v2672, 1.0
        %v2942 = vadd.f32 %v2674, 1.0
        %v2943 = vadd.f32 %v2676, 1.0
        %v2944 = vadd.f32 %v2678, 1.0
        %v2945 = vadd.f32 %v2680, 1.0
        %v2946 = vadd.f32 %v2682, 1.0
        %v2947 = vadd.f32 %v2684, 1.0
        %v2948 = vadd.f32 %v2686, 1.0
        %v2949 = vadd.f32 %v2688, 1.0
        %v2950 = vadd.f32 %v2690, 1.0
        %v2951 = vadd.f32 %v2692, 1.0
        %v2952 = vadd.f32 %v2694, 1.0
        %v2953 = vadd.f32 %v2696, 1.0
        %v2954 = vadd.f32 %v2698, 1.0
        %v2955 = vadd.f32 %v2700, 1.0
        %v2956 = vadd.f32 %v2702, 1.0
        %v2957 = vadd.f32 %v2704, 1.0
        %v2958 = vadd.f32 %v2706, 1.0
        %v2959 = vadd.f32 %v2708, 1.0
        %v2960 = vadd.f32 %v2710, 1.0
        %v2961 = vadd.f32 %v2712, 1.0
        %v2962 = vadd.f32 %v2714, 1.0
        %v2963 = vadd.f32 %v2716, 1.0
        %v2964 = vadd.f32 %v2718, 1.0
        %v2965 = vadd.f32 %v2720, 1.0
        %v2966 = vadd.f32 %v2722, 1.0
        %v2967 = vadd.f32 %v2724, 1.0
        %v2968 = vadd.f32 %v2726, 1.0
        %v2969 = vadd.f32 %v2728, 1.0
        %v2970 = vadd.f32 %v2730, 1.0
        %v2971 = vadd.f32 %v2732, 1.0
        %v2972 = vadd.f32 %v2734, 1.0
        %v2973 = vadd.f32 %v2736, 1.0
        %v2974 = vadd.f32 %v2738, 1.0
        %v2975 = vadd.f32 %v2740, 1.0
        %v2976 = vadd.f32 %v2742, 1.0
        %v2977 = vadd.f32 %v2744, 1.0
        %v2978 = vadd.f32 %v2746, 1.0
        %v2979 = vadd.f32 %v2748, 1.0
        %v2980 = vadd.f32 %v2750, 1.0
        %v2981 = vadd.f32 %v2752, 1.0
        %v2982 = vadd.f32 %v2754, 1.0
        %v2983 = vadd.f32 %v2756, 1.0
        %v2984 = vadd.f32 %v2758, 1.0
        %v2985 = vadd.f32 %v2760, 1.0
        %v2986 = vadd.f32 %v2762, 1.0
        %v2987 = vadd.f32 %v2764, 1.0
        %v2988 = vadd.f32 %v2766, 1.0
        %v2989 = vadd.f32 %v2768, 1.0
        %v2990 = vadd.f32 %v2770, 1.0
        %v2991 = vadd.f32 %v2772, 1.0
        %v2992 = vadd.f32 %v2774, 1.0
        %v2993 = vadd.f32 %v2776, 1.0
        %v2994 = vadd.f32 %v2778, 1.0
        %v2995 = vadd.f32 %v2780, 1.0
        %v2996 = vadd.f32 %v2782, 1.0
        %v2997 = vadd.f32 %v2784, 1.0
        %v2998 = vadd.f32 %v2786, 1.0
        %v2999 = vadd.f32 %v2788, 1.0
        %v3000 = vadd.f32 %v2790, 1.0
        %v3001 = vadd.f32 %v2792, 1.0
        %v3002 = vadd.f32 %v2794, 1.0
        %v3003 = vadd.f32 %v2796, 1.0
        %v3004 = vadd.f32 %v2798, 1.0
        %v3005 = vadd.f32 %v2800, 1.0
        %v3006 = vadd.f32 %v2802, 1.0
        %v3007 = vadd.f32 %v2804, 1.0
        %v3008 = vadd.f32 %v2806, 1.0
        %v3009 = vadd.f32 %v2808, 1.0
        %v3010 = vadd.f32 %v2810, 1.0
        %v3011 = vadd.f32 %v2812, 1.0
        %v3012 = vadd.f32 %v2814, 1.0
        %v3013 = vadd.f32 %v2816, 1.0
        %v3014 = vadd.f32 %v2818, 1.0
        %v3015 = vadd.f32 %v2820, 1.0
        %v3016 = vadd.f32 %v2822, 1.0
        %v3017 = vadd.f32 %v2824, 1.0
        %v3018 = vadd.f32 %v2826, 1.0
        %v3019 = vadd.f32 %v2828, 1.0
        %v3020 = vadd.f32 %v2830, 1.0
        %v3021 = vadd.f32 %v2832, 1.0
        %v3022 = vadd.f32 %v2834, 1.0
        %v3023 = vadd.f32 %v2836, 1.0
        %v3024 = vadd.f32 %v2838, 1.0
        %v3025 = vadd.f32 %v2840, 1.0
        %v3026 = vadd.f32 %v2842, 1.0
        %v3027 = vadd.f32 %v2844, 1.0
        %v3028 = vadd.f32 %v2846, 1.0
        %v3029 = vadd.f32 %v2848, 1.0
        %v3030 = vadd.f32 %v2850, 1.0
        %v3031 = vadd.f32 %v2852, 1.0
        %v3032 = vadd.f32 %v2854, 1.0
        %v3033 = vadd.f32 %v2856, 1.0
        %v3034 = vadd.f32 %v2858, 1.0
        %v3035 = vadd.f32 %v2860, 1.0
        %v3036 = vadd.f32 %v2862, 1.0
        %v3037 = vadd.f32 %v2864, 1.0
        %v3038 = vadd.f32 %v2866, 1.0
        %v3039 = vadd.f32 %v2868, 1.0
        %v3040 = vadd.f32 %v2870, 1.0
        %v3041 = vadd.f32 %v2872, 1.0
        %v3042 = vadd.f32 %v2874, 1.0
        %v3043 = vadd.f32 %v2876, 1.0
        %v3044 = vadd.f32 %v2878, 1.0
        %v3045 = vadd.f32 %v2880, 1.0
        %v3046 = vadd.f32 %v2882, 1.0
        %v3047 = vadd.f32 %v2884, 1.0
        %v3048 = vadd.f32 %v2886, 1.0
        %v3049 = vadd.f32 %v2888, 1.0
        %v3050 = vadd.f32 %v2890, 1.0
        %v3051 = vrcp.pop %v2891
        %v3052 = vmul.f32 1.0, %v3051
        %v3053 = vrcp.pop %v2892
        %v3054 = vmul.f32 1.0, %v3053
        %v3055 = vrcp.pop %v2893
        %v3056 = vmul.f32 1.0, %v3055
        %v3057 = vrcp.pop %v2894
        %v3058 = vmul.f32 1.0, %v3057
        %v3059 = vrcp.pop %v2895
        %v3060 = vmul.f32 1.0, %v3059
        %v3061 = vrcp.pop %v2896
        %v3062 = vmul.f32 1.0, %v3061
        %v3063 = vrcp.pop %v2897
        %v3064 = vmul.f32 1.0, %v3063
        %v3065 = vrcp.pop %v2898
        %v3066 = vmul.f32 1.0, %v3065
        %v3067 = vrcp.pop %v2899
        %v3068 = vmul.f32 1.0, %v3067
        %v3069 = vrcp.pop %v2900
        %v3070 = vmul.f32 1.0, %v3069
        %v3071 = vrcp.pop %v2901
        %v3072 = vmul.f32 1.0, %v3071
        %v3073 = vrcp.pop %v2902
        %v3074 = vmul.f32 1.0, %v3073
        %v3075 = vrcp.pop %v2903
        %v3076 = vmul.f32 1.0, %v3075
        %v3077 = vrcp.pop %v2904
        %v3078 = vmul.f32 1.0, %v3077
        %v3079 = vrcp.pop %v2905
        %v3080 = vmul.f32 1.0, %v3079
        %v3081 = vrcp.pop %v2906
        %v3082 = vmul.f32 1.0, %v3081
        %v3083 = vrcp.pop %v2907
        %v3084 = vmul.f32 1.0, %v3083
        %v3085 = vrcp.pop %v2908
        %v3086 = vmul.f32 1.0, %v3085
        %v3087 = vrcp.pop %v2909
        %v3088 = vmul.f32 1.0, %v3087
        %v3089 = vrcp.pop %v2910
        %v3090 = vmul.f32 1.0, %v3089
        %v3091 = vrcp.pop %v2911
        %v3092 = vmul.f32 1.0, %v3091
        %v3093 = vrcp.pop %v2912
        %v3094 = vmul.f32 1.0, %v3093
        %v3095 = vrcp.pop %v2913
        %v3096 = vmul.f32 1.0, %v3095
        %v3097 = vrcp.pop %v2914
        %v3098 = vmul.f32 1.0, %v3097
        %v3099 = vrcp.pop %v2915
        %v3100 = vmul.f32 1.0, %v3099
        %v3101 = vrcp.pop %v2916
        %v3102 = vmul.f32 1.0, %v3101
        %v3103 = vrcp.pop %v2917
        %v3104 = vmul.f32 1.0, %v3103
        %v3105 = vrcp.pop %v2918
        %v3106 = vmul.f32 1.0, %v3105
        %v3107 = vrcp.pop %v2919
        %v3108 = vmul.f32 1.0, %v3107
        %v3109 = vrcp.pop %v2920
        %v3110 = vmul.f32 1.0, %v3109
        %v3111 = vrcp.pop %v2921
        %v3112 = vmul.f32 1.0, %v3111
        %v3113 = vrcp.pop %v2922
        %v3114 = vmul.f32 1.0, %v3113
        %v3115 = vrcp.pop %v2923
        %v3116 = vmul.f32 1.0, %v3115
        %v3117 = vrcp.pop %v2924
        %v3118 = vmul.f32 1.0, %v3117
        %v3119 = vrcp.pop %v2925
        %v3120 = vmul.f32 1.0, %v3119
        %v3121 = vrcp.pop %v2926
        %v3122 = vmul.f32 1.0, %v3121
        %v3123 = vrcp.pop %v2927
        %v3124 = vmul.f32 1.0, %v3123
        %v3125 = vrcp.pop %v2928
        %v3126 = vmul.f32 1.0, %v3125
        %v3127 = vrcp.pop %v2929
        %v3128 = vmul.f32 1.0, %v3127
        %v3129 = vrcp.pop %v2930
        %v3130 = vmul.f32 1.0, %v3129
        %v3131 = vrcp.pop %v2931
        %v3132 = vmul.f32 1.0, %v3131
        %v3133 = vrcp.pop %v2932
        %v3134 = vmul.f32 1.0, %v3133
        %v3135 = vrcp.pop %v2933
        %v3136 = vmul.f32 1.0, %v3135
        %v3137 = vrcp.pop %v2934
        %v3138 = vmul.f32 1.0, %v3137
        %v3139 = vrcp.pop %v2935
        %v3140 = vmul.f32 1.0, %v3139
        %v3141 = vrcp.pop %v2936
        %v3142 = vmul.f32 1.0, %v3141
        %v3143 = vrcp.pop %v2937
        %v3144 = vmul.f32 1.0, %v3143
        %v3145 = vrcp.pop %v2938
        %v3146 = vmul.f32 1.0, %v3145
        %v3147 = vrcp.pop %v2939
        %v3148 = vmul.f32 1.0, %v3147
        %v3149 = vrcp.pop %v2940
        %v3150 = vmul.f32 1.0, %v3149
        %v3151 = vrcp.pop %v2941
        %v3152 = vmul.f32 1.0, %v3151
        %v3153 = vrcp.pop %v2942
        %v3154 = vmul.f32 1.0, %v3153
        %v3155 = vrcp.pop %v2943
        %v3156 = vmul.f32 1.0, %v3155
        %v3157 = vrcp.pop %v2944
        %v3158 = vmul.f32 1.0, %v3157
        %v3159 = vrcp.pop %v2945
        %v3160 = vmul.f32 1.0, %v3159
        %v3161 = vrcp.pop %v2946
        %v3162 = vmul.f32 1.0, %v3161
        %v3163 = vrcp.pop %v2947
        %v3164 = vmul.f32 1.0, %v3163
        %v3165 = vrcp.pop %v2948
        %v3166 = vmul.f32 1.0, %v3165
        %v3167 = vrcp.pop %v2949
        %v3168 = vmul.f32 1.0, %v3167
        %v3169 = vrcp.pop %v2950
        %v3170 = vmul.f32 1.0, %v3169
        %v3171 = vrcp.pop %v2951
        %v3172 = vmul.f32 1.0, %v3171
        %v3173 = vrcp.pop %v2952
        %v3174 = vmul.f32 1.0, %v3173
        %v3175 = vrcp.pop %v2953
        %v3176 = vmul.f32 1.0, %v3175
        %v3177 = vrcp.pop %v2954
        %v3178 = vmul.f32 1.0, %v3177
        %v3179 = vrcp.pop %v2955
        %v3180 = vmul.f32 1.0, %v3179
        %v3181 = vrcp.pop %v2956
        %v3182 = vmul.f32 1.0, %v3181
        %v3183 = vrcp.pop %v2957
        %v3184 = vmul.f32 1.0, %v3183
        %v3185 = vrcp.pop %v2958
        %v3186 = vmul.f32 1.0, %v3185
        %v3187 = vrcp.pop %v2959
        %v3188 = vmul.f32 1.0, %v3187
        %v3189 = vrcp.pop %v2960
        %v3190 = vmul.f32 1.0, %v3189
        %v3191 = vrcp.pop %v2961
        %v3192 = vmul.f32 1.0, %v3191
        %v3193 = vrcp.pop %v2962
        %v3194 = vmul.f32 1.0, %v3193
        %v3195 = vrcp.pop %v2963
        %v3196 = vmul.f32 1.0, %v3195
        %v3197 = vrcp.pop %v2964
        %v3198 = vmul.f32 1.0, %v3197
        %v3199 = vrcp.pop %v2965
        %v3200 = vmul.f32 1.0, %v3199
        %v3201 = vrcp.pop %v2966
        %v3202 = vmul.f32 1.0, %v3201
        %v3203 = vrcp.pop %v2967
        %v3204 = vmul.f32 1.0, %v3203
        %v3205 = vrcp.pop %v2968
        %v3206 = vmul.f32 1.0, %v3205
        %v3207 = vrcp.pop %v2969
        %v3208 = vmul.f32 1.0, %v3207
        %v3209 = vrcp.pop %v2970
        %v3210 = vmul.f32 1.0, %v3209
        %v3211 = vrcp.pop %v2971
        %v3212 = vmul.f32 1.0, %v3211
        %v3213 = vrcp.pop %v2972
        %v3214 = vmul.f32 1.0, %v3213
        %v3215 = vrcp.pop %v2973
        %v3216 = vmul.f32 1.0, %v3215
        %v3217 = vrcp.pop %v2974
        %v3218 = vmul.f32 1.0, %v3217
        %v3219 = vrcp.pop %v2975
        %v3220 = vmul.f32 1.0, %v3219
        %v3221 = vrcp.pop %v2976
        %v3222 = vmul.f32 1.0, %v3221
        %v3223 = vrcp.pop %v2977
        %v3224 = vmul.f32 1.0, %v3223
        %v3225 = vrcp.pop %v2978
        %v3226 = vmul.f32 1.0, %v3225
        %v3227 = vrcp.pop %v2979
        %v3228 = vmul.f32 1.0, %v3227
        %v3229 = vrcp.pop %v2980
        %v3230 = vmul.f32 1.0, %v3229
        %v3231 = vrcp.pop %v2981
        %v3232 = vmul.f32 1.0, %v3231
        %v3233 = vrcp.pop %v2982
        %v3234 = vmul.f32 1.0, %v3233
        %v3235 = vrcp.pop %v2983
        %v3236 = vmul.f32 1.0, %v3235
        %v3237 = vrcp.pop %v2984
        %v3238 = vmul.f32 1.0, %v3237
        %v3239 = vrcp.pop %v2985
        %v3240 = vmul.f32 1.0, %v3239
        %v3241 = vrcp.pop %v2986
        %v3242 = vmul.f32 1.0, %v3241
        %v3243 = vrcp.pop %v2987
        %v3244 = vmul.f32 1.0, %v3243
        %v3245 = vrcp.pop %v2988
        %v3246 = vmul.f32 1.0, %v3245
        %v3247 = vrcp.pop %v2989
        %v3248 = vmul.f32 1.0, %v3247
        %v3249 = vrcp.pop %v2990
        %v3250 = vmul.f32 1.0, %v3249
        %v3251 = vrcp.pop %v2991
        %v3252 = vmul.f32 1.0, %v3251
        %v3253 = vrcp.pop %v2992
        %v3254 = vmul.f32 1.0, %v3253
        %v3255 = vrcp.pop %v2993
        %v3256 = vmul.f32 1.0, %v3255
        %v3257 = vrcp.pop %v2994
        %v3258 = vmul.f32 1.0, %v3257
        %v3259 = vrcp.pop %v2995
        %v3260 = vmul.f32 1.0, %v3259
        %v3261 = vrcp.pop %v2996
        %v3262 = vmul.f32 1.0, %v3261
        %v3263 = vrcp.pop %v2997
        %v3264 = vmul.f32 1.0, %v3263
        %v3265 = vrcp.pop %v2998
        %v3266 = vmul.f32 1.0, %v3265
        %v3267 = vrcp.pop %v2999
        %v3268 = vmul.f32 1.0, %v3267
        %v3269 = vrcp.pop %v3000
        %v3270 = vmul.f32 1.0, %v3269
        %v3271 = vrcp.pop %v3001
        %v3272 = vmul.f32 1.0, %v3271
        %v3273 = vrcp.pop %v3002
        %v3274 = vmul.f32 1.0, %v3273
        %v3275 = vrcp.pop %v3003
        %v3276 = vmul.f32 1.0, %v3275
        %v3277 = vrcp.pop %v3004
        %v3278 = vmul.f32 1.0, %v3277
        %v3279 = vrcp.pop %v3005
        %v3280 = vmul.f32 1.0, %v3279
        %v3281 = vrcp.pop %v3006
        %v3282 = vmul.f32 1.0, %v3281
        %v3283 = vrcp.pop %v3007
        %v3284 = vmul.f32 1.0, %v3283
        %v3285 = vrcp.pop %v3008
        %v3286 = vmul.f32 1.0, %v3285
        %v3287 = vrcp.pop %v3009
        %v3288 = vmul.f32 1.0, %v3287
        %v3289 = vrcp.pop %v3010
        %v3290 = vmul.f32 1.0, %v3289
        %v3291 = vrcp.pop %v3011
        %v3292 = vmul.f32 1.0, %v3291
        %v3293 = vrcp.pop %v3012
        %v3294 = vmul.f32 1.0, %v3293
        %v3295 = vrcp.pop %v3013
        %v3296 = vmul.f32 1.0, %v3295
        %v3297 = vrcp.pop %v3014
        %v3298 = vmul.f32 1.0, %v3297
        %v3299 = vrcp.pop %v3015
        %v3300 = vmul.f32 1.0, %v3299
        %v3301 = vrcp.pop %v3016
        %v3302 = vmul.f32 1.0, %v3301
        %v3303 = vrcp.pop %v3017
        %v3304 = vmul.f32 1.0, %v3303
        %v3305 = vrcp.pop %v3018
        %v3306 = vmul.f32 1.0, %v3305
        %v3307 = vrcp.pop %v3019
        %v3308 = vmul.f32 1.0, %v3307
        %v3309 = vrcp.pop %v3020
        %v3310 = vmul.f32 1.0, %v3309
        %v3311 = vrcp.pop %v3021
        %v3312 = vmul.f32 1.0, %v3311
        %v3313 = vrcp.pop %v3022
        %v3314 = vmul.f32 1.0, %v3313
        %v3315 = vrcp.pop %v3023
        %v3316 = vmul.f32 1.0, %v3315
        %v3317 = vrcp.pop %v3024
        %v3318 = vmul.f32 1.0, %v3317
        %v3319 = vrcp.pop %v3025
        %v3320 = vmul.f32 1.0, %v3319
        %v3321 = vrcp.pop %v3026
        %v3322 = vmul.f32 1.0, %v3321
        %v3323 = vrcp.pop %v3027
        %v3324 = vmul.f32 1.0, %v3323
        %v3325 = vrcp.pop %v3028
        %v3326 = vmul.f32 1.0, %v3325
        %v3327 = vrcp.pop %v3029
        %v3328 = vmul.f32 1.0, %v3327
        %v3329 = vrcp.pop %v3030
        %v3330 = vmul.f32 1.0, %v3329
        %v3331 = vrcp.pop %v3031
        %v3332 = vmul.f32 1.0, %v3331
        %v3333 = vrcp.pop %v3032
        %v3334 = vmul.f32 1.0, %v3333
        %v3335 = vrcp.pop %v3033
        %v3336 = vmul.f32 1.0, %v3335
        %v3337 = vrcp.pop %v3034
        %v3338 = vmul.f32 1.0, %v3337
        %v3339 = vrcp.pop %v3035
        %v3340 = vmul.f32 1.0, %v3339
        %v3341 = vrcp.pop %v3036
        %v3342 = vmul.f32 1.0, %v3341
        %v3343 = vrcp.pop %v3037
        %v3344 = vmul.f32 1.0, %v3343
        %v3345 = vrcp.pop %v3038
        %v3346 = vmul.f32 1.0, %v3345
        %v3347 = vrcp.pop %v3039
        %v3348 = vmul.f32 1.0, %v3347
        %v3349 = vrcp.pop %v3040
        %v3350 = vmul.f32 1.0, %v3349
        %v3351 = vrcp.pop %v3041
        %v3352 = vmul.f32 1.0, %v3351
        %v3353 = vrcp.pop %v3042
        %v3354 = vmul.f32 1.0, %v3353
        %v3355 = vrcp.pop %v3043
        %v3356 = vmul.f32 1.0, %v3355
        %v3357 = vrcp.pop %v3044
        %v3358 = vmul.f32 1.0, %v3357
        %v3359 = vrcp.pop %v3045
        %v3360 = vmul.f32 1.0, %v3359
        %v3361 = vrcp.pop %v3046
        %v3362 = vmul.f32 1.0, %v3361
        %v3363 = vrcp.pop %v3047
        %v3364 = vmul.f32 1.0, %v3363
        %v3365 = vrcp.pop %v3048
        %v3366 = vmul.f32 1.0, %v3365
        %v3367 = vrcp.pop %v3049
        %v3368 = vmul.f32 1.0, %v3367
        %v3369 = vrcp.pop %v3050
        %v3370 = vmul.f32 1.0, %v3369
        %vm3371 = vcmask 7168
        %3372 = vst.msk [vmem:[%s227] sm:$0xff] %vm3371, %v3052
        %3373 = vst.msk [vmem:[%s227 + $0x8] sm:$0xff] %vm3371, %v3054
        %3374 = vst.msk [vmem:[%s227 + $0x10] sm:$0xff] %vm3371, %v3056
        %3375 = vst.msk [vmem:[%s227 + $0x18] sm:$0xff] %vm3371, %v3058
        %3376 = vst.msk [vmem:[%s227 + $0x20] sm:$0xff] %vm3371, %v3060
        %3377 = vst.msk [vmem:[%s227 + $0x28] sm:$0xff] %vm3371, %v3062
        %3378 = vst.msk [vmem:[%s227 + $0x30] sm:$0xff] %vm3371, %v3064
        %3379 = vst.msk [vmem:[%s227 + $0x38] sm:$0xff] %vm3371, %v3066
        %3380 = vst.msk [vmem:[%s227 + $0x40] sm:$0xff] %vm3371, %v3068
        %3381 = vst.msk [vmem:[%s227 + $0x48] sm:$0xff] %vm3371, %v3070
        %3382 = vst.msk [vmem:[%s227 + $0x50] sm:$0xff] %vm3371, %v3072
        %3383 = vst.msk [vmem:[%s227 + $0x58] sm:$0xff] %vm3371, %v3074
        %3384 = vst.msk [vmem:[%s227 + $0x60] sm:$0xff] %vm3371, %v3076
        %3385 = vst.msk [vmem:[%s227 + $0x68] sm:$0xff] %vm3371, %v3078
        %3386 = vst.msk [vmem:[%s227 + $0x70] sm:$0xff] %vm3371, %v3080
        %3387 = vst.msk [vmem:[%s227 + $0x78] sm:$0xff] %vm3371, %v3082
        %3388 = vst.msk [vmem:[%s227 + $0x80] sm:$0xff] %vm3371, %v3084
        %3389 = vst.msk [vmem:[%s227 + $0x88] sm:$0xff] %vm3371, %v3086
        %3390 = vst.msk [vmem:[%s227 + $0x90] sm:$0xff] %vm3371, %v3088
        %3391 = vst.msk [vmem:[%s227 + $0x98] sm:$0xff] %vm3371, %v3090
        %3392 = vst.msk [vmem:[%s227 + $0xa0] sm:$0xff] %vm3371, %v3092
        %3393 = vst.msk [vmem:[%s227 + $0xa8] sm:$0xff] %vm3371, %v3094
        %3394 = vst.msk [vmem:[%s227 + $0xb0] sm:$0xff] %vm3371, %v3096
        %3395 = vst.msk [vmem:[%s227 + $0xb8] sm:$0xff] %vm3371, %v3098
        %3396 = vst.msk [vmem:[%s227 + $0xc0] sm:$0xff] %vm3371, %v3100
        %3397 = vst.msk [vmem:[%s227 + $0xc8] sm:$0xff] %vm3371, %v3102
        %3398 = vst.msk [vmem:[%s227 + $0xd0] sm:$0xff] %vm3371, %v3104
        %3399 = vst.msk [vmem:[%s227 + $0xd8] sm:$0xff] %vm3371, %v3106
        %3400 = vst.msk [vmem:[%s227 + $0xe0] sm:$0xff] %vm3371, %v3108
        %3401 = vst.msk [vmem:[%s227 + $0xe8] sm:$0xff] %vm3371, %v3110
        %3402 = vst.msk [vmem:[%s227 + $0xf0] sm:$0xff] %vm3371, %v3112
        %3403 = vst.msk [vmem:[%s227 + $0xf8] sm:$0xff] %vm3371, %v3114
        %3404 = vst.msk [vmem:[%s227 + $0x100] sm:$0xff] %vm3371, %v3116
        %3405 = vst.msk [vmem:[%s227 + $0x108] sm:$0xff] %vm3371, %v3118
        %3406 = vst.msk [vmem:[%s227 + $0x110] sm:$0xff] %vm3371, %v3120
        %3407 = vst.msk [vmem:[%s227 + $0x118] sm:$0xff] %vm3371, %v3122
        %3408 = vst.msk [vmem:[%s227 + $0x120] sm:$0xff] %vm3371, %v3124
        %3409 = vst.msk [vmem:[%s227 + $0x128] sm:$0xff] %vm3371, %v3126
        %3410 = vst.msk [vmem:[%s227 + $0x130] sm:$0xff] %vm3371, %v3128
        %3411 = vst.msk [vmem:[%s227 + $0x138] sm:$0xff] %vm3371, %v3130
        %3412 = vst.msk [vmem:[%s227 + $0x140] sm:$0xff] %vm3371, %v3132
        %3413 = vst.msk [vmem:[%s227 + $0x148] sm:$0xff] %vm3371, %v3134
        %3414 = vst.msk [vmem:[%s227 + $0x150] sm:$0xff] %vm3371, %v3136
        %3415 = vst.msk [vmem:[%s227 + $0x158] sm:$0xff] %vm3371, %v3138
        %3416 = vst.msk [vmem:[%s227 + $0x160] sm:$0xff] %vm3371, %v3140
        %3417 = vst.msk [vmem:[%s227 + $0x168] sm:$0xff] %vm3371, %v3142
        %3418 = vst.msk [vmem:[%s227 + $0x170] sm:$0xff] %vm3371, %v3144
        %3419 = vst.msk [vmem:[%s227 + $0x178] sm:$0xff] %vm3371, %v3146
        %3420 = vst.msk [vmem:[%s227 + $0x180] sm:$0xff] %vm3371, %v3148
        %3421 = vst.msk [vmem:[%s227 + $0x188] sm:$0xff] %vm3371, %v3150
        %3422 = vst.msk [vmem:[%s227 + $0x190] sm:$0xff] %vm3371, %v3152
        %3423 = vst.msk [vmem:[%s227 + $0x198] sm:$0xff] %vm3371, %v3154
        %3424 = vst.msk [vmem:[%s227 + $0x1a0] sm:$0xff] %vm3371, %v3156
        %3425 = vst.msk [vmem:[%s227 + $0x1a8] sm:$0xff] %vm3371, %v3158
        %3426 = vst.msk [vmem:[%s227 + $0x1b0] sm:$0xff] %vm3371, %v3160
        %3427 = vst.msk [vmem:[%s227 + $0x1b8] sm:$0xff] %vm3371, %v3162
        %3428 = vst.msk [vmem:[%s227 + $0x1c0] sm:$0xff] %vm3371, %v3164
        %3429 = vst.msk [vmem:[%s227 + $0x1c8] sm:$0xff] %vm3371, %v3166
        %3430 = vst.msk [vmem:[%s227 + $0x1d0] sm:$0xff] %vm3371, %v3168
        %3431 = vst.msk [vmem:[%s227 + $0x1d8] sm:$0xff] %vm3371, %v3170
        %3432 = vst.msk [vmem:[%s227 + $0x1e0] sm:$0xff] %vm3371, %v3172
        %3433 = vst.msk [vmem:[%s227 + $0x1e8] sm:$0xff] %vm3371, %v3174
        %3434 = vst.msk [vmem:[%s227 + $0x1f0] sm:$0xff] %vm3371, %v3176
        %3435 = vst.msk [vmem:[%s227 + $0x1f8] sm:$0xff] %vm3371, %v3178
        %3436 = vst.msk [vmem:[%s227 + $0x200] sm:$0xff] %vm3371, %v3180
        %3437 = vst.msk [vmem:[%s227 + $0x208] sm:$0xff] %vm3371, %v3182
        %3438 = vst.msk [vmem:[%s227 + $0x210] sm:$0xff] %vm3371, %v3184
        %3439 = vst.msk [vmem:[%s227 + $0x218] sm:$0xff] %vm3371, %v3186
        %3440 = vst.msk [vmem:[%s227 + $0x220] sm:$0xff] %vm3371, %v3188
        %3441 = vst.msk [vmem:[%s227 + $0x228] sm:$0xff] %vm3371, %v3190
        %3442 = vst.msk [vmem:[%s227 + $0x230] sm:$0xff] %vm3371, %v3192
        %3443 = vst.msk [vmem:[%s227 + $0x238] sm:$0xff] %vm3371, %v3194
        %3444 = vst.msk [vmem:[%s227 + $0x240] sm:$0xff] %vm3371, %v3196
        %3445 = vst.msk [vmem:[%s227 + $0x248] sm:$0xff] %vm3371, %v3198
        %3446 = vst.msk [vmem:[%s227 + $0x250] sm:$0xff] %vm3371, %v3200
        %3447 = vst.msk [vmem:[%s227 + $0x258] sm:$0xff] %vm3371, %v3202
        %3448 = vst.msk [vmem:[%s227 + $0x260] sm:$0xff] %vm3371, %v3204
        %3449 = vst.msk [vmem:[%s227 + $0x268] sm:$0xff] %vm3371, %v3206
        %3450 = vst.msk [vmem:[%s227 + $0x270] sm:$0xff] %vm3371, %v3208
        %3451 = vst.msk [vmem:[%s227 + $0x278] sm:$0xff] %vm3371, %v3210
        %3452 = vst.msk [vmem:[%s227 + $0x280] sm:$0xff] %vm3371, %v3212
        %3453 = vst.msk [vmem:[%s227 + $0x288] sm:$0xff] %vm3371, %v3214
        %3454 = vst.msk [vmem:[%s227 + $0x290] sm:$0xff] %vm3371, %v3216
        %3455 = vst.msk [vmem:[%s227 + $0x298] sm:$0xff] %vm3371, %v3218
        %3456 = vst.msk [vmem:[%s227 + $0x2a0] sm:$0xff] %vm3371, %v3220
        %3457 = vst.msk [vmem:[%s227 + $0x2a8] sm:$0xff] %vm3371, %v3222
        %3458 = vst.msk [vmem:[%s227 + $0x2b0] sm:$0xff] %vm3371, %v3224
        %3459 = vst.msk [vmem:[%s227 + $0x2b8] sm:$0xff] %vm3371, %v3226
        %3460 = vst.msk [vmem:[%s227 + $0x2c0] sm:$0xff] %vm3371, %v3228
        %3461 = vst.msk [vmem:[%s227 + $0x2c8] sm:$0xff] %vm3371, %v3230
        %3462 = vst.msk [vmem:[%s227 + $0x2d0] sm:$0xff] %vm3371, %v3232
        %3463 = vst.msk [vmem:[%s227 + $0x2d8] sm:$0xff] %vm3371, %v3234
        %3464 = vst.msk [vmem:[%s227 + $0x2e0] sm:$0xff] %vm3371, %v3236
        %3465 = vst.msk [vmem:[%s227 + $0x2e8] sm:$0xff] %vm3371, %v3238
        %3466 = vst.msk [vmem:[%s227 + $0x2f0] sm:$0xff] %vm3371, %v3240
        %3467 = vst.msk [vmem:[%s227 + $0x2f8] sm:$0xff] %vm3371, %v3242
        %3468 = vst.msk [vmem:[%s227 + $0x300] sm:$0xff] %vm3371, %v3244
        %3469 = vst.msk [vmem:[%s227 + $0x308] sm:$0xff] %vm3371, %v3246
        %3470 = vst.msk [vmem:[%s227 + $0x310] sm:$0xff] %vm3371, %v3248
        %3471 = vst.msk [vmem:[%s227 + $0x318] sm:$0xff] %vm3371, %v3250
        %3472 = vst.msk [vmem:[%s227 + $0x320] sm:$0xff] %vm3371, %v3252
        %3473 = vst.msk [vmem:[%s227 + $0x328] sm:$0xff] %vm3371, %v3254
        %3474 = vst.msk [vmem:[%s227 + $0x330] sm:$0xff] %vm3371, %v3256
        %3475 = vst.msk [vmem:[%s227 + $0x338] sm:$0xff] %vm3371, %v3258
        %3476 = vst.msk [vmem:[%s227 + $0x340] sm:$0xff] %vm3371, %v3260
        %3477 = vst.msk [vmem:[%s227 + $0x348] sm:$0xff] %vm3371, %v3262
        %3478 = vst.msk [vmem:[%s227 + $0x350] sm:$0xff] %vm3371, %v3264
        %3479 = vst.msk [vmem:[%s227 + $0x358] sm:$0xff] %vm3371, %v3266
        %3480 = vst.msk [vmem:[%s227 + $0x360] sm:$0xff] %vm3371, %v3268
        %3481 = vst.msk [vmem:[%s227 + $0x368] sm:$0xff] %vm3371, %v3270
        %3482 = vst.msk [vmem:[%s227 + $0x370] sm:$0xff] %vm3371, %v3272
        %3483 = vst.msk [vmem:[%s227 + $0x378] sm:$0xff] %vm3371, %v3274
        %3484 = vst.msk [vmem:[%s227 + $0x380] sm:$0xff] %vm3371, %v3276
        %3485 = vst.msk [vmem:[%s227 + $0x388] sm:$0xff] %vm3371, %v3278
        %3486 = vst.msk [vmem:[%s227 + $0x390] sm:$0xff] %vm3371, %v3280
        %3487 = vst.msk [vmem:[%s227 + $0x398] sm:$0xff] %vm3371, %v3282
        %3488 = vst.msk [vmem:[%s227 + $0x3a0] sm:$0xff] %vm3371, %v3284
        %3489 = vst.msk [vmem:[%s227 + $0x3a8] sm:$0xff] %vm3371, %v3286
        %3490 = vst.msk [vmem:[%s227 + $0x3b0] sm:$0xff] %vm3371, %v3288
        %3491 = vst.msk [vmem:[%s227 + $0x3b8] sm:$0xff] %vm3371, %v3290
        %3492 = vst.msk [vmem:[%s227 + $0x3c0] sm:$0xff] %vm3371, %v3292
        %3493 = vst.msk [vmem:[%s227 + $0x3c8] sm:$0xff] %vm3371, %v3294
        %3494 = vst.msk [vmem:[%s227 + $0x3d0] sm:$0xff] %vm3371, %v3296
        %3495 = vst.msk [vmem:[%s227 + $0x3d8] sm:$0xff] %vm3371, %v3298
        %3496 = vst.msk [vmem:[%s227 + $0x3e0] sm:$0xff] %vm3371, %v3300
        %3497 = vst.msk [vmem:[%s227 + $0x3e8] sm:$0xff] %vm3371, %v3302
        %3498 = vst.msk [vmem:[%s227 + $0x3f0] sm:$0xff] %vm3371, %v3304
        %3499 = vst.msk [vmem:[%s227 + $0x3f8] sm:$0xff] %vm3371, %v3306
        %3500 = vst.msk [vmem:[%s227 + $0x400] sm:$0xff] %vm3371, %v3308
        %3501 = vst.msk [vmem:[%s227 + $0x408] sm:$0xff] %vm3371, %v3310
        %3502 = vst.msk [vmem:[%s227 + $0x410] sm:$0xff] %vm3371, %v3312
        %3503 = vst.msk [vmem:[%s227 + $0x418] sm:$0xff] %vm3371, %v3314
        %3504 = vst.msk [vmem:[%s227 + $0x420] sm:$0xff] %vm3371, %v3316
        %3505 = vst.msk [vmem:[%s227 + $0x428] sm:$0xff] %vm3371, %v3318
        %3506 = vst.msk [vmem:[%s227 + $0x430] sm:$0xff] %vm3371, %v3320
        %3507 = vst.msk [vmem:[%s227 + $0x438] sm:$0xff] %vm3371, %v3322
        %3508 = vst.msk [vmem:[%s227 + $0x440] sm:$0xff] %vm3371, %v3324
        %3509 = vst.msk [vmem:[%s227 + $0x448] sm:$0xff] %vm3371, %v3326
        %3510 = vst.msk [vmem:[%s227 + $0x450] sm:$0xff] %vm3371, %v3328
        %3511 = vst.msk [vmem:[%s227 + $0x458] sm:$0xff] %vm3371, %v3330
        %3512 = vst.msk [vmem:[%s227 + $0x460] sm:$0xff] %vm3371, %v3332
        %3513 = vst.msk [vmem:[%s227 + $0x468] sm:$0xff] %vm3371, %v3334
        %3514 = vst.msk [vmem:[%s227 + $0x470] sm:$0xff] %vm3371, %v3336
        %3515 = vst.msk [vmem:[%s227 + $0x478] sm:$0xff] %vm3371, %v3338
        %3516 = vst.msk [vmem:[%s227 + $0x480] sm:$0xff] %vm3371, %v3340
        %3517 = vst.msk [vmem:[%s227 + $0x488] sm:$0xff] %vm3371, %v3342
        %3518 = vst.msk [vmem:[%s227 + $0x490] sm:$0xff] %vm3371, %v3344
        %3519 = vst.msk [vmem:[%s227 + $0x498] sm:$0xff] %vm3371, %v3346
        %3520 = vst.msk [vmem:[%s227 + $0x4a0] sm:$0xff] %vm3371, %v3348
        %3521 = vst.msk [vmem:[%s227 + $0x4a8] sm:$0xff] %vm3371, %v3350
        %3522 = vst.msk [vmem:[%s227 + $0x4b0] sm:$0xff] %vm3371, %v3352
        %3523 = vst.msk [vmem:[%s227 + $0x4b8] sm:$0xff] %vm3371, %v3354
        %3524 = vst.msk [vmem:[%s227 + $0x4c0] sm:$0xff] %vm3371, %v3356
        %3525 = vst.msk [vmem:[%s227 + $0x4c8] sm:$0xff] %vm3371, %v3358
        %3526 = vst.msk [vmem:[%s227 + $0x4d0] sm:$0xff] %vm3371, %v3360
        %3527 = vst.msk [vmem:[%s227 + $0x4d8] sm:$0xff] %vm3371, %v3362
        %3528 = vst.msk [vmem:[%s227 + $0x4e0] sm:$0xff] %vm3371, %v3364
        %3529 = vst.msk [vmem:[%s227 + $0x4e8] sm:$0xff] %vm3371, %v3366
        %3530 = vst.msk [vmem:[%s227 + $0x4f0] sm:$0xff] %vm3371, %v3368
        %3531 = vst.msk [vmem:[%s227 + $0x4f8] sm:$0xff] %vm3371, %v3370
        %s3532 = sand.u32 %s135, 1
        %s3533 = sand.u32 %s135, 1
        %s3534 = smul.addr %s3533, 1280
        %s3535 = scalar_lea.vmem [#allocation3], %s3534
        // Predicated region
        $region41: #{tpu_custom_call.1} parent=39 // pred_check
          %p3536 = pneg %p145
        $region42: #{tpu_custom_call.1} parent=39 // pred_check_branch
          %3538 = sbr.rel (%p3536) target = $region44
        $region43: #{tpu_custom_call.1} parent=39 // pred_region
          %s3539 = smul.u32 160, %s17
          %s3540 = ssub.s32 313, %s3539
          %p3541 = scmp.lt.s32.totalorder %s3540, 160
          %s3542 = scalar_select %p3541, %s3540, 160
          %s3543 = smul.u32 128, %s3542
          %p3544 = scmp.ne.s32.totalorder 0, %s3543
          %s3545 = smul.addr %s3539, 8
          %s3546 = scalar_lea.vmem %s5, %s3545
          // Predicated region
          $region45: #{tpu_custom_call.1} parent=43 // pred_check
            %p3547 = pneg %p3544
          $region46: #{tpu_custom_call.1} parent=43 // pred_check_branch
            %3549 = sbr.rel (%p3547) target = $region48
          $region47: #{tpu_custom_call.1} parent=43 // pred_region
            // Predicated region
            $region49: #{tpu_custom_call.1} parent=47 // pred_check
              _
            $region50: #{tpu_custom_call.1} parent=47 // pred_check_branch
              %3551 = sbr.rel (0) target = $region52
            $region51: #{tpu_custom_call.1} parent=47 // pred_region
              // Predicated region
              $region71: #{tpu_custom_call.1} parent=51 // pred_check
                _
              $region72: #{tpu_custom_call.1} parent=51 // pred_check_branch
                %3726 = sbr.rel (0) target = $region74
              $region73: #{tpu_custom_call.1} parent=51 // pred_region
                %s3727 = sshrl.u32 %s3542, 6
                // While loop
                $region75: #{tpu_custom_call.1} parent=73 // loop_pre_header
                  _
                $region76: #{tpu_custom_call.1} parent=73 // loop_header
                  %s3729 = sphi 0, %s3731
                  %p3730 = scmp.ge.s32.totalorder %s3729, %s3727
                  %s3734 = sphi 0, %s3867
                  %s3735 = sphi %s3535, %s3870
                  %s3736 = sphi %s3546, %s3871
                $region77: #{tpu_custom_call.1} parent=73 // loop_header_branch
                  %3733 = sbr.rel (%p3730) target = $region81
                $region78: #{tpu_custom_call.1} parent=73 // loop_body
                  %v3737 = vld [vmem:[%s3735] sm:$0xff]
                  %3738 = vst [vmem:[%s3736] sm:$0xff] %v3737
                  %v3739 = vld [vmem:[%s3735 + $0x8] sm:$0xff]
                  %3740 = vst [vmem:[%s3736 + $0x8] sm:$0xff] %v3739
                  %v3741 = vld [vmem:[%s3735 + $0x10] sm:$0xff]
                  %3742 = vst [vmem:[%s3736 + $0x10] sm:$0xff] %v3741
                  %v3743 = vld [vmem:[%s3735 + $0x18] sm:$0xff]
                  %3744 = vst [vmem:[%s3736 + $0x18] sm:$0xff] %v3743
                  %v3745 = vld [vmem:[%s3735 + $0x20] sm:$0xff]
                  %3746 = vst [vmem:[%s3736 + $0x20] sm:$0xff] %v3745
                  %v3747 = vld [vmem:[%s3735 + $0x28] sm:$0xff]
                  %3748 = vst [vmem:[%s3736 + $0x28] sm:$0xff] %v3747
                  %v3749 = vld [vmem:[%s3735 + $0x30] sm:$0xff]
                  %3750 = vst [vmem:[%s3736 + $0x30] sm:$0xff] %v3749
                  %v3751 = vld [vmem:[%s3735 + $0x38] sm:$0xff]
                  %3752 = vst [vmem:[%s3736 + $0x38] sm:$0xff] %v3751
                  %v3753 = vld [vmem:[%s3735 + $0x40] sm:$0xff]
                  %3754 = vst [vmem:[%s3736 + $0x40] sm:$0xff] %v3753
                  %v3755 = vld [vmem:[%s3735 + $0x48] sm:$0xff]
                  %3756 = vst [vmem:[%s3736 + $0x48] sm:$0xff] %v3755
                  %v3757 = vld [vmem:[%s3735 + $0x50] sm:$0xff]
                  %3758 = vst [vmem:[%s3736 + $0x50] sm:$0xff] %v3757
                  %v3759 = vld [vmem:[%s3735 + $0x58] sm:$0xff]
                  %3760 = vst [vmem:[%s3736 + $0x58] sm:$0xff] %v3759
                  %v3761 = vld [vmem:[%s3735 + $0x60] sm:$0xff]
                  %3762 = vst [vmem:[%s3736 + $0x60] sm:$0xff] %v3761
                  %v3763 = vld [vmem:[%s3735 + $0x68] sm:$0xff]
                  %3764 = vst [vmem:[%s3736 + $0x68] sm:$0xff] %v3763
                  %v3765 = vld [vmem:[%s3735 + $0x70] sm:$0xff]
                  %3766 = vst [vmem:[%s3736 + $0x70] sm:$0xff] %v3765
                  %v3767 = vld [vmem:[%s3735 + $0x78] sm:$0xff]
                  %3768 = vst [vmem:[%s3736 + $0x78] sm:$0xff] %v3767
                  %v3769 = vld [vmem:[%s3735 + $0x80] sm:$0xff]
                  %3770 = vst [vmem:[%s3736 + $0x80] sm:$0xff] %v3769
                  %v3771 = vld [vmem:[%s3735 + $0x88] sm:$0xff]
                  %3772 = vst [vmem:[%s3736 + $0x88] sm:$0xff] %v3771
                  %v3773 = vld [vmem:[%s3735 + $0x90] sm:$0xff]
                  %3774 = vst [vmem:[%s3736 + $0x90] sm:$0xff] %v3773
                  %v3775 = vld [vmem:[%s3735 + $0x98] sm:$0xff]
                  %3776 = vst [vmem:[%s3736 + $0x98] sm:$0xff] %v3775
                  %v3777 = vld [vmem:[%s3735 + $0xa0] sm:$0xff]
                  %3778 = vst [vmem:[%s3736 + $0xa0] sm:$0xff] %v3777
                  %v3779 = vld [vmem:[%s3735 + $0xa8] sm:$0xff]
                  %3780 = vst [vmem:[%s3736 + $0xa8] sm:$0xff] %v3779
                  %v3781 = vld [vmem:[%s3735 + $0xb0] sm:$0xff]
                  %3782 = vst [vmem:[%s3736 + $0xb0] sm:$0xff] %v3781
                  %v3783 = vld [vmem:[%s3735 + $0xb8] sm:$0xff]
                  %3784 = vst [vmem:[%s3736 + $0xb8] sm:$0xff] %v3783
                  %v3785 = vld [vmem:[%s3735 + $0xc0] sm:$0xff]
                  %3786 = vst [vmem:[%s3736 + $0xc0] sm:$0xff] %v3785
                  %v3787 = vld [vmem:[%s3735 + $0xc8] sm:$0xff]
                  %3788 = vst [vmem:[%s3736 + $0xc8] sm:$0xff] %v3787
                  %v3789 = vld [vmem:[%s3735 + $0xd0] sm:$0xff]
                  %3790 = vst [vmem:[%s3736 + $0xd0] sm:$0xff] %v3789
                  %v3791 = vld [vmem:[%s3735 + $0xd8] sm:$0xff]
                  %3792 = vst [vmem:[%s3736 + $0xd8] sm:$0xff] %v3791
                  %v3793 = vld [vmem:[%s3735 + $0xe0] sm:$0xff]
                  %3794 = vst [vmem:[%s3736 + $0xe0] sm:$0xff] %v3793
                  %v3795 = vld [vmem:[%s3735 + $0xe8] sm:$0xff]
                  %3796 = vst [vmem:[%s3736 + $0xe8] sm:$0xff] %v3795
                  %v3797 = vld [vmem:[%s3735 + $0xf0] sm:$0xff]
                  %3798 = vst [vmem:[%s3736 + $0xf0] sm:$0xff] %v3797
                  %v3799 = vld [vmem:[%s3735 + $0xf8] sm:$0xff]
                  %3800 = vst [vmem:[%s3736 + $0xf8] sm:$0xff] %v3799
                  %v3801 = vld [vmem:[%s3735 + $0x100] sm:$0xff]
                  %3802 = vst [vmem:[%s3736 + $0x100] sm:$0xff] %v3801
                  %v3803 = vld [vmem:[%s3735 + $0x108] sm:$0xff]
                  %3804 = vst [vmem:[%s3736 + $0x108] sm:$0xff] %v3803
                  %v3805 = vld [vmem:[%s3735 + $0x110] sm:$0xff]
                  %3806 = vst [vmem:[%s3736 + $0x110] sm:$0xff] %v3805
                  %v3807 = vld [vmem:[%s3735 + $0x118] sm:$0xff]
                  %3808 = vst [vmem:[%s3736 + $0x118] sm:$0xff] %v3807
                  %v3809 = vld [vmem:[%s3735 + $0x120] sm:$0xff]
                  %3810 = vst [vmem:[%s3736 + $0x120] sm:$0xff] %v3809
                  %v3811 = vld [vmem:[%s3735 + $0x128] sm:$0xff]
                  %3812 = vst [vmem:[%s3736 + $0x128] sm:$0xff] %v3811
                  %v3813 = vld [vmem:[%s3735 + $0x130] sm:$0xff]
                  %3814 = vst [vmem:[%s3736 + $0x130] sm:$0xff] %v3813
                  %v3815 = vld [vmem:[%s3735 + $0x138] sm:$0xff]
                  %3816 = vst [vmem:[%s3736 + $0x138] sm:$0xff] %v3815
                  %v3817 = vld [vmem:[%s3735 + $0x140] sm:$0xff]
                  %3818 = vst [vmem:[%s3736 + $0x140] sm:$0xff] %v3817
                  %v3819 = vld [vmem:[%s3735 + $0x148] sm:$0xff]
                  %3820 = vst [vmem:[%s3736 + $0x148] sm:$0xff] %v3819
                  %v3821 = vld [vmem:[%s3735 + $0x150] sm:$0xff]
                  %3822 = vst [vmem:[%s3736 + $0x150] sm:$0xff] %v3821
                  %v3823 = vld [vmem:[%s3735 + $0x158] sm:$0xff]
                  %3824 = vst [vmem:[%s3736 + $0x158] sm:$0xff] %v3823
                  %v3825 = vld [vmem:[%s3735 + $0x160] sm:$0xff]
                  %3826 = vst [vmem:[%s3736 + $0x160] sm:$0xff] %v3825
                  %v3827 = vld [vmem:[%s3735 + $0x168] sm:$0xff]
                  %3828 = vst [vmem:[%s3736 + $0x168] sm:$0xff] %v3827
                  %v3829 = vld [vmem:[%s3735 + $0x170] sm:$0xff]
                  %3830 = vst [vmem:[%s3736 + $0x170] sm:$0xff] %v3829
                  %v3831 = vld [vmem:[%s3735 + $0x178] sm:$0xff]
                  %3832 = vst [vmem:[%s3736 + $0x178] sm:$0xff] %v3831
                  %v3833 = vld [vmem:[%s3735 + $0x180] sm:$0xff]
                  %3834 = vst [vmem:[%s3736 + $0x180] sm:$0xff] %v3833
                  %v3835 = vld [vmem:[%s3735 + $0x188] sm:$0xff]
                  %3836 = vst [vmem:[%s3736 + $0x188] sm:$0xff] %v3835
                  %v3837 = vld [vmem:[%s3735 + $0x190] sm:$0xff]
                  %3838 = vst [vmem:[%s3736 + $0x190] sm:$0xff] %v3837
                  %v3839 = vld [vmem:[%s3735 + $0x198] sm:$0xff]
                  %3840 = vst [vmem:[%s3736 + $0x198] sm:$0xff] %v3839
                  %v3841 = vld [vmem:[%s3735 + $0x1a0] sm:$0xff]
                  %3842 = vst [vmem:[%s3736 + $0x1a0] sm:$0xff] %v3841
                  %v3843 = vld [vmem:[%s3735 + $0x1a8] sm:$0xff]
                  %3844 = vst [vmem:[%s3736 + $0x1a8] sm:$0xff] %v3843
                  %v3845 = vld [vmem:[%s3735 + $0x1b0] sm:$0xff]
                  %3846 = vst [vmem:[%s3736 + $0x1b0] sm:$0xff] %v3845
                  %v3847 = vld [vmem:[%s3735 + $0x1b8] sm:$0xff]
                  %3848 = vst [vmem:[%s3736 + $0x1b8] sm:$0xff] %v3847
                  %v3849 = vld [vmem:[%s3735 + $0x1c0] sm:$0xff]
                  %3850 = vst [vmem:[%s3736 + $0x1c0] sm:$0xff] %v3849
                  %v3851 = vld [vmem:[%s3735 + $0x1c8] sm:$0xff]
                  %3852 = vst [vmem:[%s3736 + $0x1c8] sm:$0xff] %v3851
                  %v3853 = vld [vmem:[%s3735 + $0x1d0] sm:$0xff]
                  %3854 = vst [vmem:[%s3736 + $0x1d0] sm:$0xff] %v3853
                  %v3855 = vld [vmem:[%s3735 + $0x1d8] sm:$0xff]
                  %3856 = vst [vmem:[%s3736 + $0x1d8] sm:$0xff] %v3855
                  %v3857 = vld [vmem:[%s3735 + $0x1e0] sm:$0xff]
                  %3858 = vst [vmem:[%s3736 + $0x1e0] sm:$0xff] %v3857
                  %v3859 = vld [vmem:[%s3735 + $0x1e8] sm:$0xff]
                  %3860 = vst [vmem:[%s3736 + $0x1e8] sm:$0xff] %v3859
                  %v3861 = vld [vmem:[%s3735 + $0x1f0] sm:$0xff]
                  %3862 = vst [vmem:[%s3736 + $0x1f0] sm:$0xff] %v3861
                  %v3863 = vld [vmem:[%s3735 + $0x1f8] sm:$0xff]
                  %3864 = vst [vmem:[%s3736 + $0x1f8] sm:$0xff] %v3863
                  %s3865 = sadd.s32 1, %s3734
                  %p3866 = scmp.ge.s32.totalorder %s3865, %s3727
                  %s3867 = scalar_select %p3866, 0, %s3865
                  %s3868 = smul.u32 %s3867, 512
                  %s3869 = smul.u32 %s3867, 512
                  %s3870 = scalar_lea.vmem %s3535, %s3868 [#allocation3]
                  %s3871 = scalar_lea.vmem %s3546, %s3869
                $region79: #{tpu_custom_call.1} parent=73 // loop_footer
                  %s3731 = sadd.s32 %s3729, 1
                $region80: #{tpu_custom_call.1} parent=73 // loop_footer_branch
                  %3728 = sbr.rel target = $region76
                $region81: #{tpu_custom_call.1} parent=73 // loop_exit
                  _
                %s3872 = sshrl.u32 %s3542, 6
                %s3873 = sand.u32 %s3542, 63
                %s3874 = smul.u32 %s3872, 64
                %s3875 = smul.u32 8, %s3874
                %s3876 = scalar_lea.vmem %s3535, %s3875 [#allocation3]
                %s3877 = smul.u32 8, %s3874
                %s3878 = scalar_lea.vmem %s3546, %s3877
                // While loop
                $region82: #{tpu_custom_call.1} parent=73 // loop_pre_header
                  _
                $region83: #{tpu_custom_call.1} parent=73 // loop_header
                  %s3880 = sphi 0, %s3882
                  %p3881 = scmp.ge.s32.totalorder %s3880, %s3873
                  %s3885 = sphi 0, %s3892
                  %s3886 = sphi %s3876, %s3895
                  %s3887 = sphi %s3878, %s3896
                $region84: #{tpu_custom_call.1} parent=73 // loop_header_branch
                  %3884 = sbr.rel (%p3881) target = $region88
                $region85: #{tpu_custom_call.1} parent=73 // loop_body
                  %v3888 = vld [vmem:[%s3886] sm:$0xff]
                  %3889 = vst [vmem:[%s3887] sm:$0xff] %v3888
                  %s3890 = sadd.s32 1, %s3885
                  %p3891 = scmp.ge.s32.totalorder %s3890, %s3873
                  %s3892 = scalar_select %p3891, 0, %s3890
                  %s3893 = smul.u32 %s3892, 8
                  %s3894 = smul.u32 %s3892, 8
                  %s3895 = scalar_lea.vmem %s3876, %s3893 [#allocation3]
                  %s3896 = scalar_lea.vmem %s3878, %s3894
                $region86: #{tpu_custom_call.1} parent=73 // loop_footer
                  %s3882 = sadd.s32 %s3880, 1
                $region87: #{tpu_custom_call.1} parent=73 // loop_footer_branch
                  %3879 = sbr.rel target = $region83
                $region88: #{tpu_custom_call.1} parent=73 // loop_exit
                  _
              $region74: #{tpu_custom_call.1} parent=51 // pred_fallthru
                _
              // Predicated region
              $region89: #{tpu_custom_call.1} parent=51 // pred_check
                _
              $region90: #{tpu_custom_call.1} parent=51 // pred_check_branch
                %3898 = sbr.rel target = $region92
              $region91: #{tpu_custom_call.1} parent=51 // pred_region
                _
              $region92: #{tpu_custom_call.1} parent=51 // pred_fallthru
                _
            $region52: #{tpu_custom_call.1} parent=47 // pred_fallthru
              _
            // Predicated region
            $region53: #{tpu_custom_call.1} parent=47 // pred_check
              _
            $region54: #{tpu_custom_call.1} parent=47 // pred_check_branch
              %3553 = sbr.rel target = $region56
            $region55: #{tpu_custom_call.1} parent=47 // pred_region
              %s3555 = sshrl.u32 %s3542, 6
              // While loop
              $region57: #{tpu_custom_call.1} parent=55 // loop_pre_header
                _
              $region58: #{tpu_custom_call.1} parent=55 // loop_header
                %s3557 = sphi 0, %s3559
                %p3558 = scmp.ge.s32.totalorder %s3557, %s3555
                %s3562 = sphi 0, %s3695
                %s3563 = sphi %s3535, %s3698
                %s3564 = sphi %s3546, %s3699
              $region59: #{tpu_custom_call.1} parent=55 // loop_header_branch
                %3561 = sbr.rel (%p3558) target = $region63
              $region60: #{tpu_custom_call.1} parent=55 // loop_body
                %v3565 = vld [vmem:[%s3563] sm:$0xff]
                %3566 = vst [vmem:[%s3564] sm:$0xff] %v3565
                %v3567 = vld [vmem:[%s3563 + $0x8] sm:$0xff]
                %3568 = vst [vmem:[%s3564 + $0x8] sm:$0xff] %v3567
                %v3569 = vld [vmem:[%s3563 + $0x10] sm:$0xff]
                %3570 = vst [vmem:[%s3564 + $0x10] sm:$0xff] %v3569
                %v3571 = vld [vmem:[%s3563 + $0x18] sm:$0xff]
                %3572 = vst [vmem:[%s3564 + $0x18] sm:$0xff] %v3571
                %v3573 = vld [vmem:[%s3563 + $0x20] sm:$0xff]
                %3574 = vst [vmem:[%s3564 + $0x20] sm:$0xff] %v3573
                %v3575 = vld [vmem:[%s3563 + $0x28] sm:$0xff]
                %3576 = vst [vmem:[%s3564 + $0x28] sm:$0xff] %v3575
                %v3577 = vld [vmem:[%s3563 + $0x30] sm:$0xff]
                %3578 = vst [vmem:[%s3564 + $0x30] sm:$0xff] %v3577
                %v3579 = vld [vmem:[%s3563 + $0x38] sm:$0xff]
                %3580 = vst [vmem:[%s3564 + $0x38] sm:$0xff] %v3579
                %v3581 = vld [vmem:[%s3563 + $0x40] sm:$0xff]
                %3582 = vst [vmem:[%s3564 + $0x40] sm:$0xff] %v3581
                %v3583 = vld [vmem:[%s3563 + $0x48] sm:$0xff]
                %3584 = vst [vmem:[%s3564 + $0x48] sm:$0xff] %v3583
                %v3585 = vld [vmem:[%s3563 + $0x50] sm:$0xff]
                %3586 = vst [vmem:[%s3564 + $0x50] sm:$0xff] %v3585
                %v3587 = vld [vmem:[%s3563 + $0x58] sm:$0xff]
                %3588 = vst [vmem:[%s3564 + $0x58] sm:$0xff] %v3587
                %v3589 = vld [vmem:[%s3563 + $0x60] sm:$0xff]
                %3590 = vst [vmem:[%s3564 + $0x60] sm:$0xff] %v3589
                %v3591 = vld [vmem:[%s3563 + $0x68] sm:$0xff]
                %3592 = vst [vmem:[%s3564 + $0x68] sm:$0xff] %v3591
                %v3593 = vld [vmem:[%s3563 + $0x70] sm:$0xff]
                %3594 = vst [vmem:[%s3564 + $0x70] sm:$0xff] %v3593
                %v3595 = vld [vmem:[%s3563 + $0x78] sm:$0xff]
                %3596 = vst [vmem:[%s3564 + $0x78] sm:$0xff] %v3595
                %v3597 = vld [vmem:[%s3563 + $0x80] sm:$0xff]
                %3598 = vst [vmem:[%s3564 + $0x80] sm:$0xff] %v3597
                %v3599 = vld [vmem:[%s3563 + $0x88] sm:$0xff]
                %3600 = vst [vmem:[%s3564 + $0x88] sm:$0xff] %v3599
                %v3601 = vld [vmem:[%s3563 + $0x90] sm:$0xff]
                %3602 = vst [vmem:[%s3564 + $0x90] sm:$0xff] %v3601
                %v3603 = vld [vmem:[%s3563 + $0x98] sm:$0xff]
                %3604 = vst [vmem:[%s3564 + $0x98] sm:$0xff] %v3603
                %v3605 = vld [vmem:[%s3563 + $0xa0] sm:$0xff]
                %3606 = vst [vmem:[%s3564 + $0xa0] sm:$0xff] %v3605
                %v3607 = vld [vmem:[%s3563 + $0xa8] sm:$0xff]
                %3608 = vst [vmem:[%s3564 + $0xa8] sm:$0xff] %v3607
                %v3609 = vld [vmem:[%s3563 + $0xb0] sm:$0xff]
                %3610 = vst [vmem:[%s3564 + $0xb0] sm:$0xff] %v3609
                %v3611 = vld [vmem:[%s3563 + $0xb8] sm:$0xff]
                %3612 = vst [vmem:[%s3564 + $0xb8] sm:$0xff] %v3611
                %v3613 = vld [vmem:[%s3563 + $0xc0] sm:$0xff]
                %3614 = vst [vmem:[%s3564 + $0xc0] sm:$0xff] %v3613
                %v3615 = vld [vmem:[%s3563 + $0xc8] sm:$0xff]
                %3616 = vst [vmem:[%s3564 + $0xc8] sm:$0xff] %v3615
                %v3617 = vld [vmem:[%s3563 + $0xd0] sm:$0xff]
                %3618 = vst [vmem:[%s3564 + $0xd0] sm:$0xff] %v3617
                %v3619 = vld [vmem:[%s3563 + $0xd8] sm:$0xff]
                %3620 = vst [vmem:[%s3564 + $0xd8] sm:$0xff] %v3619
                %v3621 = vld [vmem:[%s3563 + $0xe0] sm:$0xff]
                %3622 = vst [vmem:[%s3564 + $0xe0] sm:$0xff] %v3621
                %v3623 = vld [vmem:[%s3563 + $0xe8] sm:$0xff]
                %3624 = vst [vmem:[%s3564 + $0xe8] sm:$0xff] %v3623
                %v3625 = vld [vmem:[%s3563 + $0xf0] sm:$0xff]
                %3626 = vst [vmem:[%s3564 + $0xf0] sm:$0xff] %v3625
                %v3627 = vld [vmem:[%s3563 + $0xf8] sm:$0xff]
                %3628 = vst [vmem:[%s3564 + $0xf8] sm:$0xff] %v3627
                %v3629 = vld [vmem:[%s3563 + $0x100] sm:$0xff]
                %3630 = vst [vmem:[%s3564 + $0x100] sm:$0xff] %v3629
                %v3631 = vld [vmem:[%s3563 + $0x108] sm:$0xff]
                %3632 = vst [vmem:[%s3564 + $0x108] sm:$0xff] %v3631
                %v3633 = vld [vmem:[%s3563 + $0x110] sm:$0xff]
                %3634 = vst [vmem:[%s3564 + $0x110] sm:$0xff] %v3633
                %v3635 = vld [vmem:[%s3563 + $0x118] sm:$0xff]
                %3636 = vst [vmem:[%s3564 + $0x118] sm:$0xff] %v3635
                %v3637 = vld [vmem:[%s3563 + $0x120] sm:$0xff]
                %3638 = vst [vmem:[%s3564 + $0x120] sm:$0xff] %v3637
                %v3639 = vld [vmem:[%s3563 + $0x128] sm:$0xff]
                %3640 = vst [vmem:[%s3564 + $0x128] sm:$0xff] %v3639
                %v3641 = vld [vmem:[%s3563 + $0x130] sm:$0xff]
                %3642 = vst [vmem:[%s3564 + $0x130] sm:$0xff] %v3641
                %v3643 = vld [vmem:[%s3563 + $0x138] sm:$0xff]
                %3644 = vst [vmem:[%s3564 + $0x138] sm:$0xff] %v3643
                %v3645 = vld [vmem:[%s3563 + $0x140] sm:$0xff]
                %3646 = vst [vmem:[%s3564 + $0x140] sm:$0xff] %v3645
                %v3647 = vld [vmem:[%s3563 + $0x148] sm:$0xff]
                %3648 = vst [vmem:[%s3564 + $0x148] sm:$0xff] %v3647
                %v3649 = vld [vmem:[%s3563 + $0x150] sm:$0xff]
                %3650 = vst [vmem:[%s3564 + $0x150] sm:$0xff] %v3649
                %v3651 = vld [vmem:[%s3563 + $0x158] sm:$0xff]
                %3652 = vst [vmem:[%s3564 + $0x158] sm:$0xff] %v3651
                %v3653 = vld [vmem:[%s3563 + $0x160] sm:$0xff]
                %3654 = vst [vmem:[%s3564 + $0x160] sm:$0xff] %v3653
                %v3655 = vld [vmem:[%s3563 + $0x168] sm:$0xff]
                %3656 = vst [vmem:[%s3564 + $0x168] sm:$0xff] %v3655
                %v3657 = vld [vmem:[%s3563 + $0x170] sm:$0xff]
                %3658 = vst [vmem:[%s3564 + $0x170] sm:$0xff] %v3657
                %v3659 = vld [vmem:[%s3563 + $0x178] sm:$0xff]
                %3660 = vst [vmem:[%s3564 + $0x178] sm:$0xff] %v3659
                %v3661 = vld [vmem:[%s3563 + $0x180] sm:$0xff]
                %3662 = vst [vmem:[%s3564 + $0x180] sm:$0xff] %v3661
                %v3663 = vld [vmem:[%s3563 + $0x188] sm:$0xff]
                %3664 = vst [vmem:[%s3564 + $0x188] sm:$0xff] %v3663
                %v3665 = vld [vmem:[%s3563 + $0x190] sm:$0xff]
                %3666 = vst [vmem:[%s3564 + $0x190] sm:$0xff] %v3665
                %v3667 = vld [vmem:[%s3563 + $0x198] sm:$0xff]
                %3668 = vst [vmem:[%s3564 + $0x198] sm:$0xff] %v3667
                %v3669 = vld [vmem:[%s3563 + $0x1a0] sm:$0xff]
                %3670 = vst [vmem:[%s3564 + $0x1a0] sm:$0xff] %v3669
                %v3671 = vld [vmem:[%s3563 + $0x1a8] sm:$0xff]
                %3672 = vst [vmem:[%s3564 + $0x1a8] sm:$0xff] %v3671
                %v3673 = vld [vmem:[%s3563 + $0x1b0] sm:$0xff]
                %3674 = vst [vmem:[%s3564 + $0x1b0] sm:$0xff] %v3673
                %v3675 = vld [vmem:[%s3563 + $0x1b8] sm:$0xff]
                %3676 = vst [vmem:[%s3564 + $0x1b8] sm:$0xff] %v3675
                %v3677 = vld [vmem:[%s3563 + $0x1c0] sm:$0xff]
                %3678 = vst [vmem:[%s3564 + $0x1c0] sm:$0xff] %v3677
                %v3679 = vld [vmem:[%s3563 + $0x1c8] sm:$0xff]
                %3680 = vst [vmem:[%s3564 + $0x1c8] sm:$0xff] %v3679
                %v3681 = vld [vmem:[%s3563 + $0x1d0] sm:$0xff]
                %3682 = vst [vmem:[%s3564 + $0x1d0] sm:$0xff] %v3681
                %v3683 = vld [vmem:[%s3563 + $0x1d8] sm:$0xff]
                %3684 = vst [vmem:[%s3564 + $0x1d8] sm:$0xff] %v3683
                %v3685 = vld [vmem:[%s3563 + $0x1e0] sm:$0xff]
                %3686 = vst [vmem:[%s3564 + $0x1e0] sm:$0xff] %v3685
                %v3687 = vld [vmem:[%s3563 + $0x1e8] sm:$0xff]
                %3688 = vst [vmem:[%s3564 + $0x1e8] sm:$0xff] %v3687
                %v3689 = vld [vmem:[%s3563 + $0x1f0] sm:$0xff]
                %3690 = vst [vmem:[%s3564 + $0x1f0] sm:$0xff] %v3689
                %v3691 = vld [vmem:[%s3563 + $0x1f8] sm:$0xff]
                %3692 = vst [vmem:[%s3564 + $0x1f8] sm:$0xff] %v3691
                %s3693 = sadd.s32 1, %s3562
                %p3694 = scmp.ge.s32.totalorder %s3693, %s3555
                %s3695 = scalar_select %p3694, 0, %s3693
                %s3696 = smul.u32 %s3695, 512
                %s3697 = smul.u32 %s3695, 512
                %s3698 = scalar_lea.vmem %s3535, %s3696 [#allocation3]
                %s3699 = scalar_lea.vmem %s3546, %s3697
              $region61: #{tpu_custom_call.1} parent=55 // loop_footer
                %s3559 = sadd.s32 %s3557, 1
              $region62: #{tpu_custom_call.1} parent=55 // loop_footer_branch
                %3556 = sbr.rel target = $region58
              $region63: #{tpu_custom_call.1} parent=55 // loop_exit
                _
              %s3700 = sshrl.u32 %s3542, 6
              %s3701 = sand.u32 %s3542, 63
              %s3702 = smul.u32 %s3700, 64
              %s3703 = smul.u32 8, %s3702
              %s3704 = scalar_lea.vmem %s3535, %s3703 [#allocation3]
              %s3705 = smul.u32 8, %s3702
              %s3706 = scalar_lea.vmem %s3546, %s3705
              // While loop
              $region64: #{tpu_custom_call.1} parent=55 // loop_pre_header
                _
              $region65: #{tpu_custom_call.1} parent=55 // loop_header
                %s3708 = sphi 0, %s3710
                %p3709 = scmp.ge.s32.totalorder %s3708, %s3701
                %s3713 = sphi 0, %s3720
                %s3714 = sphi %s3704, %s3723
                %s3715 = sphi %s3706, %s3724
              $region66: #{tpu_custom_call.1} parent=55 // loop_header_branch
                %3712 = sbr.rel (%p3709) target = $region70
              $region67: #{tpu_custom_call.1} parent=55 // loop_body
                %v3716 = vld [vmem:[%s3714] sm:$0xff]
                %3717 = vst [vmem:[%s3715] sm:$0xff] %v3716
                %s3718 = sadd.s32 1, %s3713
                %p3719 = scmp.ge.s32.totalorder %s3718, %s3701
                %s3720 = scalar_select %p3719, 0, %s3718
                %s3721 = smul.u32 %s3720, 8
                %s3722 = smul.u32 %s3720, 8
                %s3723 = scalar_lea.vmem %s3704, %s3721 [#allocation3]
                %s3724 = scalar_lea.vmem %s3706, %s3722
              $region68: #{tpu_custom_call.1} parent=55 // loop_footer
                %s3710 = sadd.s32 %s3708, 1
              $region69: #{tpu_custom_call.1} parent=55 // loop_footer_branch
                %3707 = sbr.rel target = $region65
              $region70: #{tpu_custom_call.1} parent=55 // loop_exit
                _
            $region56: #{tpu_custom_call.1} parent=47 // pred_fallthru
              _
          $region48: #{tpu_custom_call.1} parent=43 // pred_fallthru
            _
          %3899 = vnop
        $region44: #{tpu_custom_call.1} parent=39 // pred_fallthru
          _
      $region40: #{tpu_custom_call.1} parent=5 // pred_fallthru
        _
      %p3900 = scmp.le.s32.totalorder 2, %s12
      // Predicated region
      $region93: #{tpu_custom_call.1} parent=5 // pred_check
        %p3901 = pneg %p3900
      $region94: #{tpu_custom_call.1} parent=5 // pred_check_branch
        %3903 = sbr.rel (%p3901) target = $region96
      $region95: #{tpu_custom_call.1} parent=5 // pred_region
        %s3904 = ssub.s32 %s12, 2
        // Predicated region
        $region97: #{tpu_custom_call.1} parent=95 // pred_check
          %p3905 = pneg %p151
        $region98: #{tpu_custom_call.1} parent=95 // pred_check_branch
          %3907 = sbr.rel (%p3905) target = $region100
        $region99: #{tpu_custom_call.1} parent=95 // pred_region
          %s3908 = sand.u32 %s136, 1
          %s3909 = sand.u32 %s136, 1
          %s3910 = smul.addr %s3909, 1280
          %s3911 = scalar_lea.vmem [#allocation3], %s3910
        $region100: #{tpu_custom_call.1} parent=95 // pred_fallthru
          _
      $region96: #{tpu_custom_call.1} parent=5 // pred_fallthru
        _
    $region6: #{tpu_custom_call.1} parent=1 // loop_footer
      %s16 = sadd.s32 1, %s12
    $region7: #{tpu_custom_call.1} parent=1 // loop_footer_branch
      %11 = sbr.rel target = $region3
    $region8: #{tpu_custom_call.1} parent=1 // loop_exit
      _

</llo_original>
